<compile_context>
chip_gen: v6e
topology: v6e:2x2x1
jax: 0.10.0
libtpu: 0.0.40
codegen_flags: <defaults>
</compile_context>

<pallas_src>
import jax
import jax.numpy as jnp
from jax import lax
from jax.experimental import pallas as pl
from jax.experimental.pallas import tpu as pltpu


def _round_up(x, m):
    return ((x + m - 1) // m) * m


def _pick_batch_tile(B, Q_pad, target_rows=128):
    """Largest divisor of B whose folded (Bt*Q_pad) row count stays small,
    then backed off so the grid keeps >=2 'parallel' steps when B allows
    (v7x has two TensorCores that only get work via parallel grid steps)."""
    bt = 1
    for cand in range(1, B + 1):
        if B % cand == 0 and cand * Q_pad <= target_rows:
            bt = cand
    if B > 1 and B // bt < 2:
        for cand in range(bt, 0, -1):
            if B % cand == 0 and B // cand >= 2:
                bt = cand
                break
    return bt


def additive_attention(queries, keys, values, valid_lens, W_q, W_k, w_v, *,
                       return_weights=True, feat_dtype=jnp.float32,
                       k_chunk=128):
    """queries:(B,Q,Dq) keys:(B,K,Dk) values:(B,K,Dv) valid_lens:(B,) int32
       W_q:(Dq,H) W_k:(Dk,H) w_v:(1,H)  (weights pre-transposed vs. torch)
       Returns (out, attention_weights) — weights is None if return_weights=False.
    """
    # TODO(synk): only 1-D valid_lens (B,) supported; d2l's masked_softmax also
    # accepts 2-D (B, Q) per-query lengths.
    B, Q, Dq = queries.shape
    _, K, Dk = keys.shape
    _, _, Dv = values.shape
    H = W_q.shape[1]

    # Lane/sublane friendly padding (padded keys are masked out by the softmax
    # mask, padded query rows / value columns are sliced off below).
    Q_pad = _round_up(Q, 8)
    K_pad = _round_up(K, 128)
    Dv_pad = _round_up(Dv, 128)

    q_p = jnp.pad(queries, ((0, 0), (0, Q_pad - Q), (0, 0)))
    k_p = jnp.pad(keys, ((0, 0), (0, K_pad - K), (0, 0)))
    v_p = jnp.pad(values, ((0, 0), (0, K_pad - K), (0, Dv_pad - Dv)))
    vl = valid_lens.astype(jnp.int32)

    Bt = _pick_batch_tile(B, Q_pad)
    Kc = min(k_chunk, K_pad)
    while K_pad % Kc != 0:          # keep the chunk a divisor of padded K
        Kc //= 2
    n_chunks = K_pad // Kc

    def kernel(vl_ref, q_ref, k_ref, v_ref, wq_ref, wk_ref, wv_ref,
               o_ref, *rest):
        scores_sc = rest[-1]                          # (Bt, Q_pad, K_pad) f32
        w_ref = rest[0] if len(rest) == 2 else None
        b0 = pl.program_id(0)

        wq = wq_ref[...]                              # (Dq, H)
        wk = wk_ref[...]                              # (Dk, H)
        wv = wv_ref[0]                                # (H,)

        # Folded query projection: one (Bt*Q_pad, Dq) @ (Dq, H) MXU matmul.
        qh = jnp.dot(q_ref[...].reshape(Bt * Q_pad, Dq), wq,
                     preferred_element_type=jnp.float32)
        qh = qh.reshape(Bt, Q_pad, H).astype(feat_dtype)

        # K-chunk loop: never materialize the full (Q, K, H) tanh tensor; each
        # chunk's key projection is also a folded (Bt*Kc, Dk) MXU matmul.
        def chunk_body(c, carry):
            start = pl.multiple_of(c * Kc, Kc)
            k_c = k_ref[:, pl.ds(start, Kc), :]       # (Bt, Kc, Dk)
            kh_c = jnp.dot(k_c.reshape(Bt * Kc, Dk), wk,
                           preferred_element_type=jnp.float32)
            kh_c = kh_c.reshape(Bt, Kc, H).astype(feat_dtype)
            # (Bt, Q_pad, Kc, H) — bounded working set per chunk.
            feat = jnp.tanh(qh[:, :, None, :] + kh_c[:, None, :, :])
            scores_c = jnp.sum(feat.astype(jnp.float32) * wv, axis=-1)
            scores_sc[:, :, pl.ds(start, Kc)] = scores_c
            return carry

        lax.fori_loop(0, n_chunks, chunk_body, 0, unroll=n_chunks <= 8)

        # Masked softmax + values matmul, per batch element of the tile.
        kidx = lax.broadcasted_iota(jnp.int32, (1, K_pad), 1)   # (1, K_pad)
        for i in range(Bt):                            # static, small
            vlen = vl_ref[b0 * Bt + i]                 # SMEM scalar
            s_i = scores_sc[i]                         # (Q_pad, K_pad)
            masked = jnp.where(kidx < vlen, s_i, jnp.float32(-1000000.0))
            m = jnp.max(masked, axis=-1, keepdims=True)
            e = jnp.exp(masked - m)
            attn = e * pl.reciprocal(jnp.sum(e, axis=-1, keepdims=True),
                                     approx=True)
            # Dropout is identity in eval mode.
            o_ref[i] = jnp.dot(attn.astype(v_ref.dtype), v_ref[i],
                               preferred_element_type=jnp.float32
                               ).astype(o_ref.dtype)
            if w_ref is not None:
                w_ref[i] = attn.astype(w_ref.dtype)

    out_shapes = [jax.ShapeDtypeStruct((B, Q_pad, Dv_pad), jnp.float32)]
    out_specs = [pl.BlockSpec((Bt, Q_pad, Dv_pad), lambda b, vl_: (b, 0, 0))]
    if return_weights:
        out_shapes.append(jax.ShapeDtypeStruct((B, Q_pad, K_pad), jnp.float32))
        out_specs.append(pl.BlockSpec((Bt, Q_pad, K_pad),
                                      lambda b, vl_: (b, 0, 0)))

    grid_spec = pltpu.PrefetchScalarGridSpec(
        num_scalar_prefetch=1,
        grid=(B // Bt,),
        in_specs=[
            pl.BlockSpec((Bt, Q_pad, Dq), lambda b, vl_: (b, 0, 0)),
            pl.BlockSpec((Bt, K_pad, Dk), lambda b, vl_: (b, 0, 0)),
            pl.BlockSpec((Bt, K_pad, Dv_pad), lambda b, vl_: (b, 0, 0)),
            pl.BlockSpec((Dq, H), lambda b, vl_: (0, 0)),
            pl.BlockSpec((Dk, H), lambda b, vl_: (0, 0)),
            pl.BlockSpec((1, H), lambda b, vl_: (0, 0)),
        ],
        out_specs=out_specs,
        scratch_shapes=[pltpu.VMEM((Bt, Q_pad, K_pad), jnp.float32)],
    )

    results = pl.pallas_call(
        kernel,
        out_shape=tuple(out_shapes),
        grid_spec=grid_spec,
        compiler_params=pltpu.CompilerParams(
            dimension_semantics=("parallel",),
            vmem_limit_bytes=32 * 1024 * 1024),
    )(vl, q_p, k_p, v_p, W_q, W_k, w_v)

    out = results[0][:, :Q, :Dv]
    attn_w = results[1][:, :Q, :K] if return_weights else None
    return out, attn_w


def _reference(queries, keys, values, valid_lens, W_q, W_k, w_v):
    q = queries @ W_q                                  # (B,Q,H)
    k = keys @ W_k                                     # (B,K,H)
    feat = jnp.tanh(q[:, :, None, :] + k[:, None, :, :])
    scores = jnp.einsum("bqkh,h->bqk", feat, w_v[0])
    kidx = jnp.arange(scores.shape[-1])[None, None, :]
    masked = jnp.where(kidx < valid_lens[:, None, None], scores, -1000000.0)
    attn = jax.nn.softmax(masked, axis=-1)
    return jnp.einsum("bqk,bkd->bqd", attn, values), attn


if __name__ == "__main__":
    # Small shapes consistent with the module's forward.  B=4 so the wrapper
    # both folds batch (Bt=2) and keeps 2 parallel grid steps.
    B, Q, K = 4, 4, 8
    query_size, key_size, num_hiddens, value_dim = 32, 16, 32, 16

    key = jax.random.PRNGKey(0)
    k1, k2, k3, k4, k5, k6 = jax.random.split(key, 6)

    queries = jax.random.normal(k1, (B, Q, query_size), dtype=jnp.float32)
    keys = jax.random.normal(k2, (B, K, key_size), dtype=jnp.float32)
    values = jax.random.normal(k3, (B, K, value_dim), dtype=jnp.float32)
    valid_lens = jnp.array([3, 6, 1, 8], dtype=jnp.int32)

    # Deterministic parameters (nn.Linear shapes, stored transposed).
    W_q = jax.random.normal(k4, (query_size, num_hiddens), dtype=jnp.float32) * 0.1
    W_k = jax.random.normal(k5, (key_size, num_hiddens), dtype=jnp.float32) * 0.1
    w_v = jax.random.normal(k6, (1, num_hiddens), dtype=jnp.float32) * 0.1

    # feat_dtype=jnp.bfloat16 is the v6e/v7x fast path (bf16 EUP tanh); keep the
    # test in f32 so the tolerance stays tight on every generation.
    out, attn_w = additive_attention(queries, keys, values, valid_lens,
                                     W_q, W_k, w_v, return_weights=True,
                                     feat_dtype=jnp.float32)
    out = jax.block_until_ready(out)
    attn_w = jax.block_until_ready(attn_w)

    ref_out, ref_w = _reference(queries, keys, values, valid_lens, W_q, W_k, w_v)
    # approx reciprocal in the softmax -> slightly looser tolerance than 1e-5.
    assert jnp.allclose(out, ref_out, atol=5e-3, rtol=5e-3)
    assert jnp.allclose(attn_w, ref_w, atol=5e-3, rtol=5e-3)

    # Also exercise the cheaper variant that skips the (B, Q, K) weights writeback.
    out2, no_w = additive_attention(queries, keys, values, valid_lens,
                                    W_q, W_k, w_v, return_weights=False)
    out2 = jax.block_until_ready(out2)
    assert no_w is None
    assert jnp.allclose(out2, ref_out, atol=5e-3, rtol=5e-3)

    print("KERNEL_OK")
</pallas_src>

<mosaic_0001>
module attributes {stable_mosaic.version = 11 : i64} {
  func.func @kernel(%arg0: i32, %arg1: memref<4xi32, #tpu.memory_space<smem>>, %arg2: memref<2x8x32xf32, #tpu.memory_space<vmem>>, %arg3: memref<2x128x16xf32, #tpu.memory_space<vmem>>, %arg4: memref<2x128x128xf32, #tpu.memory_space<vmem>>, %arg5: memref<32x32xf32, #tpu.memory_space<vmem>>, %arg6: memref<16x32xf32, #tpu.memory_space<vmem>>, %arg7: memref<1x32xf32, #tpu.memory_space<vmem>>, %arg8: memref<2x8x128xf32, #tpu.memory_space<vmem>>, %arg9: memref<2x8x128xf32, #tpu.memory_space<vmem>>, %arg10: memref<2x8x128xf32, #tpu.memory_space<vmem>>) attributes {dimension_semantics = [#tpu.dimension_semantics<parallel>], iteration_bounds = array<i64: 2>, scalar_prefetch = 1 : i64, scratch_operands = 1 : i64, tpu.core_type = #tpu.core_type<tc>, window_params = [{transform_indices = @transform_0, window_bounds = array<i64: 2, 8, 32>}, {transform_indices = @transform_1, window_bounds = array<i64: 2, 128, 16>}, {transform_indices = @transform_2, window_bounds = array<i64: 2, 128, 128>}, {pipeline_mode = #tpu.pipeline_mode<synchronous>, transform_indices = @transform_3, window_bounds = array<i64: 32, 32>}, {pipeline_mode = #tpu.pipeline_mode<synchronous>, transform_indices = @transform_4, window_bounds = array<i64: 16, 32>}, {pipeline_mode = #tpu.pipeline_mode<synchronous>, transform_indices = @transform_5, window_bounds = array<i64: 1, 32>}, {transform_indices = @transform_6, window_bounds = array<i64: 2, 8, 128>}, {transform_indices = @transform_7, window_bounds = array<i64: 2, 8, 128>}]} {
    %c0 = arith.constant 0 : index
    %c0_0 = arith.constant 0 : index
    %0 = vector.load %arg5[%c0, %c0_0] : memref<32x32xf32, #tpu.memory_space<vmem>>, vector<32x32xf32>
    %c0_1 = arith.constant 0 : index
    %c0_2 = arith.constant 0 : index
    %1 = vector.load %arg6[%c0_1, %c0_2] : memref<16x32xf32, #tpu.memory_space<vmem>>, vector<16x32xf32>
    %c0_3 = arith.constant 0 : index
    %c0_4 = arith.constant 0 : index
    %2 = vector.load %arg7[%c0_3, %c0_4] : memref<1x32xf32, #tpu.memory_space<vmem>>, vector<1x32xf32>
    %3 = vector.shape_cast %2 : vector<1x32xf32> to vector<32xf32>
    %c0_5 = arith.constant 0 : index
    %c0_6 = arith.constant 0 : index
    %c0_7 = arith.constant 0 : index
    %4 = vector.load %arg2[%c0_5, %c0_6, %c0_7] : memref<2x8x32xf32, #tpu.memory_space<vmem>>, vector<2x8x32xf32>
    %5 = vector.shape_cast %4 : vector<2x8x32xf32> to vector<16x32xf32>
    %cst = arith.constant dense<0.000000e+00> : vector<16x32xf32>
    %6 = tpu.matmul %5, %0, %cst {dimension_numbers = #tpu.dot_dimension_numbers<[1], [0], [0], [1], [0, 0, 1, 1], [], []>} : vector<16x32xf32>, vector<32x32xf32>, vector<16x32xf32> -> vector<16x32xf32>
    %7 = vector.shape_cast %6 : vector<16x32xf32> to vector<2x8x32xf32>
    %c0_i32 = arith.constant 0 : i32
    %c128_i32 = arith.constant 128 : i32
    %8 = arith.muli %c0_i32, %c128_i32 : i32
    %9 = tpu.assume_multiple %8, 128 : i32
    %c0_8 = arith.constant 0 : index
    %10 = arith.index_cast %9 : i32 to index
    %c0_9 = arith.constant 0 : index
    %11 = vector.load %arg3[%c0_8, %10, %c0_9] : memref<2x128x16xf32, #tpu.memory_space<vmem>>, vector<2x128x16xf32>
    %12 = vector.shape_cast %11 : vector<2x128x16xf32> to vector<256x16xf32>
    %cst_10 = arith.constant dense<0.000000e+00> : vector<256x32xf32>
    %13 = tpu.matmul %12, %1, %cst_10 {dimension_numbers = #tpu.dot_dimension_numbers<[1], [0], [0], [1], [0, 0, 1, 1], [], []>} : vector<256x16xf32>, vector<16x32xf32>, vector<256x32xf32> -> vector<256x32xf32>
    %14 = vector.shape_cast %13 : vector<256x32xf32> to vector<2x128x32xf32>
    %15 = vector.shape_cast %7 : vector<2x8x32xf32> to vector<2x8x1x32xf32>
    %16 = vector.shape_cast %14 : vector<2x128x32xf32> to vector<2x1x128x32xf32>
    %17 = vector.broadcast %15 : vector<2x8x1x32xf32> to vector<2x8x128x32xf32>
    %18 = vector.broadcast %16 : vector<2x1x128x32xf32> to vector<2x8x128x32xf32>
    %19 = arith.addf %17, %18 : vector<2x8x128x32xf32>
    %20 = math.tanh %19 : vector<2x8x128x32xf32>
    %21 = vector.shape_cast %3 : vector<32xf32> to vector<1x1x1x32xf32>
    %22 = vector.broadcast %21 : vector<1x1x1x32xf32> to vector<2x8x128x32xf32>
    %23 = arith.mulf %20, %22 : vector<2x8x128x32xf32>
    %cst_11 = arith.constant dense<0.000000e+00> : vector<2x8x128xf32>
    %24 = vector.multi_reduction <add>, %23, %cst_11 [3] : vector<2x8x128x32xf32> to vector<2x8x128xf32>
    %c0_12 = arith.constant 0 : index
    %c0_13 = arith.constant 0 : index
    %25 = arith.index_cast %9 : i32 to index
    %26 = vector.load %arg10[%c0_12, %c0_13, %25] : memref<2x8x128xf32, #tpu.memory_space<vmem>>, vector<2x8x128xf32>
    tpu.vector_store %arg10[%c0_12, %c0_13, %25], %24 {strides = array<i32>} : memref<2x8x128xf32, #tpu.memory_space<vmem>>, vector<2x8x128xf32>,
    %c1_i32 = arith.constant 1 : i32
    %27 = tpu.iota {dimensions = array<i32: 1>} : vector<1x128xi32>
    %c2_i32 = arith.constant 2 : i32
    %28 = arith.muli %arg0, %c2_i32 : i32
    %c0_i32_14 = arith.constant 0 : i32
    %29 = arith.addi %28, %c0_i32_14 : i32
    %30 = arith.index_cast %29 : i32 to index
    %31 = memref.load %arg1[%30] : memref<4xi32, #tpu.memory_space<smem>>
    %c0_15 = arith.constant 0 : index
    %c0_16 = arith.constant 0 : index
    %c0_17 = arith.constant 0 : index
    %32 = vector.load %arg10[%c0_15, %c0_16, %c0_17] : memref<2x8x128xf32, #tpu.memory_space<vmem>>, vector<1x8x128xf32>
    %33 = vector.shape_cast %32 : vector<1x8x128xf32> to vector<8x128xf32>
    %34 = vector.broadcast %31 : i32 to vector<1x128xi32>
    %35 = arith.cmpi slt, %27, %34 : vector<1x128xi32>
    %cst_18 = arith.constant -1.000000e+06 : f32
    %36 = vector.shape_cast %35 : vector<1x128xi1> to vector<1x128xi1>
    %37 = vector.broadcast %36 : vector<1x128xi1> to vector<8x128xi1>
    %38 = vector.broadcast %cst_18 : f32 to vector<8x128xf32>
    %39 = arith.select %37, %33, %38 : vector<8x128xi1>, vector<8x128xf32>
    %cst_19 = arith.constant dense<0xFF800000> : vector<8xf32>
    %40 = vector.multi_reduction <maximumf>, %39, %cst_19 [1] : vector<8x128xf32> to vector<8xf32>
    %41 = vector.shape_cast %40 : vector<8xf32> to vector<8x1xf32>
    %42 = vector.broadcast %41 : vector<8x1xf32> to vector<8x128xf32>
    %43 = arith.subf %39, %42 : vector<8x128xf32>
    %44 = math.exp %43 : vector<8x128xf32>
    %cst_20 = arith.constant dense<0.000000e+00> : vector<8xf32>
    %45 = vector.multi_reduction <add>, %44, %cst_20 [1] : vector<8x128xf32> to vector<8xf32>
    %46 = vector.shape_cast %45 : vector<8xf32> to vector<8x1xf32>
    %47 = tpu.reciprocal %46 {approx = true} : vector<8x1xf32> -> vector<8x1xf32>
    %48 = vector.broadcast %47 : vector<8x1xf32> to vector<8x128xf32>
    %49 = arith.mulf %44, %48 : vector<8x128xf32>
    %c0_21 = arith.constant 0 : index
    %c0_22 = arith.constant 0 : index
    %c0_23 = arith.constant 0 : index
    %50 = vector.load %arg4[%c0_21, %c0_22, %c0_23] : memref<2x128x128xf32, #tpu.memory_space<vmem>>, vector<1x128x128xf32>
    %51 = vector.shape_cast %50 : vector<1x128x128xf32> to vector<128x128xf32>
    %cst_24 = arith.constant dense<0.000000e+00> : vector<8x128xf32>
    %52 = tpu.matmul %49, %51, %cst_24 {dimension_numbers = #tpu.dot_dimension_numbers<[1], [0], [0], [1], [0, 0, 1, 1], [], []>} : vector<8x128xf32>, vector<128x128xf32>, vector<8x128xf32> -> vector<8x128xf32>
    %c0_25 = arith.constant 0 : index
    %c0_26 = arith.constant 0 : index
    %c0_27 = arith.constant 0 : index
    %53 = vector.load %arg8[%c0_25, %c0_26, %c0_27] : memref<2x8x128xf32, #tpu.memory_space<vmem>>, vector<1x8x128xf32>
    %54 = vector.shape_cast %53 : vector<1x8x128xf32> to vector<8x128xf32>
    %55 = vector.shape_cast %52 : vector<8x128xf32> to vector<1x8x128xf32>
    tpu.vector_store %arg8[%c0_25, %c0_26, %c0_27], %55 {strides = array<i32>} : memref<2x8x128xf32, #tpu.memory_space<vmem>>, vector<1x8x128xf32>,
    %c0_28 = arith.constant 0 : index
    %c0_29 = arith.constant 0 : index
    %c0_30 = arith.constant 0 : index
    %56 = vector.load %arg9[%c0_28, %c0_29, %c0_30] : memref<2x8x128xf32, #tpu.memory_space<vmem>>, vector<1x8x128xf32>
    %57 = vector.shape_cast %56 : vector<1x8x128xf32> to vector<8x128xf32>
    %58 = vector.shape_cast %49 : vector<8x128xf32> to vector<1x8x128xf32>
    tpu.vector_store %arg9[%c0_28, %c0_29, %c0_30], %58 {strides = array<i32>} : memref<2x8x128xf32, #tpu.memory_space<vmem>>, vector<1x8x128xf32>,
    %c2_i32_31 = arith.constant 2 : i32
    %59 = arith.muli %arg0, %c2_i32_31 : i32
    %c1_i32_32 = arith.constant 1 : i32
    %60 = arith.addi %59, %c1_i32_32 : i32
    %61 = arith.index_cast %60 : i32 to index
    %62 = memref.load %arg1[%61] : memref<4xi32, #tpu.memory_space<smem>>
    %c1 = arith.constant 1 : index
    %c0_33 = arith.constant 0 : index
    %c0_34 = arith.constant 0 : index
    %63 = vector.load %arg10[%c1, %c0_33, %c0_34] : memref<2x8x128xf32, #tpu.memory_space<vmem>>, vector<1x8x128xf32>
    %64 = vector.shape_cast %63 : vector<1x8x128xf32> to vector<8x128xf32>
    %65 = vector.broadcast %62 : i32 to vector<1x128xi32>
    %66 = arith.cmpi slt, %27, %65 : vector<1x128xi32>
    %cst_35 = arith.constant -1.000000e+06 : f32
    %67 = vector.shape_cast %66 : vector<1x128xi1> to vector<1x128xi1>
    %68 = vector.broadcast %67 : vector<1x128xi1> to vector<8x128xi1>
    %69 = vector.broadcast %cst_35 : f32 to vector<8x128xf32>
    %70 = arith.select %68, %64, %69 : vector<8x128xi1>, vector<8x128xf32>
    %cst_36 = arith.constant dense<0xFF800000> : vector<8xf32>
    %71 = vector.multi_reduction <maximumf>, %70, %cst_36 [1] : vector<8x128xf32> to vector<8xf32>
    %72 = vector.shape_cast %71 : vector<8xf32> to vector<8x1xf32>
    %73 = vector.broadcast %72 : vector<8x1xf32> to vector<8x128xf32>
    %74 = arith.subf %70, %73 : vector<8x128xf32>
    %75 = math.exp %74 : vector<8x128xf32>
    %cst_37 = arith.constant dense<0.000000e+00> : vector<8xf32>
    %76 = vector.multi_reduction <add>, %75, %cst_37 [1] : vector<8x128xf32> to vector<8xf32>
    %77 = vector.shape_cast %76 : vector<8xf32> to vector<8x1xf32>
    %78 = tpu.reciprocal %77 {approx = true} : vector<8x1xf32> -> vector<8x1xf32>
    %79 = vector.broadcast %78 : vector<8x1xf32> to vector<8x128xf32>
    %80 = arith.mulf %75, %79 : vector<8x128xf32>
    %c1_38 = arith.constant 1 : index
    %c0_39 = arith.constant 0 : index
    %c0_40 = arith.constant 0 : index
    %81 = vector.load %arg4[%c1_38, %c0_39, %c0_40] : memref<2x128x128xf32, #tpu.memory_space<vmem>>, vector<1x128x128xf32>
    %82 = vector.shape_cast %81 : vector<1x128x128xf32> to vector<128x128xf32>
    %cst_41 = arith.constant dense<0.000000e+00> : vector<8x128xf32>
    %83 = tpu.matmul %80, %82, %cst_41 {dimension_numbers = #tpu.dot_dimension_numbers<[1], [0], [0], [1], [0, 0, 1, 1], [], []>} : vector<8x128xf32>, vector<128x128xf32>, vector<8x128xf32> -> vector<8x128xf32>
    %c1_42 = arith.constant 1 : index
    %c0_43 = arith.constant 0 : index
    %c0_44 = arith.constant 0 : index
    %84 = vector.load %arg8[%c1_42, %c0_43, %c0_44] : memref<2x8x128xf32, #tpu.memory_space<vmem>>, vector<1x8x128xf32>
    %85 = vector.shape_cast %84 : vector<1x8x128xf32> to vector<8x128xf32>
    %86 = vector.shape_cast %83 : vector<8x128xf32> to vector<1x8x128xf32>
    tpu.vector_store %arg8[%c1_42, %c0_43, %c0_44], %86 {strides = array<i32>} : memref<2x8x128xf32, #tpu.memory_space<vmem>>, vector<1x8x128xf32>,
    %c1_45 = arith.constant 1 : index
    %c0_46 = arith.constant 0 : index
    %c0_47 = arith.constant 0 : index
    %87 = vector.load %arg9[%c1_45, %c0_46, %c0_47] : memref<2x8x128xf32, #tpu.memory_space<vmem>>, vector<1x8x128xf32>
    %88 = vector.shape_cast %87 : vector<1x8x128xf32> to vector<8x128xf32>
    %89 = vector.shape_cast %80 : vector<8x128xf32> to vector<1x8x128xf32>
    tpu.vector_store %arg9[%c1_45, %c0_46, %c0_47], %89 {strides = array<i32>} : memref<2x8x128xf32, #tpu.memory_space<vmem>>, vector<1x8x128xf32>,
    return
  }
  func.func @transform_0(%arg0: i32, %arg1: memref<4xi32, #tpu.memory_space<smem>>) -> (i32, i32, i32) {
    %c0_i32 = arith.constant 0 : i32
    %c0_i32_0 = arith.constant 0 : i32
    %c0_i32_1 = arith.constant 0 : i32
    return %arg0, %c0_i32, %c0_i32_0 : i32, i32, i32
  }
  func.func @transform_1(%arg0: i32, %arg1: memref<4xi32, #tpu.memory_space<smem>>) -> (i32, i32, i32) {
    %c0_i32 = arith.constant 0 : i32
    %c0_i32_0 = arith.constant 0 : i32
    %c0_i32_1 = arith.constant 0 : i32
    return %arg0, %c0_i32, %c0_i32_0 : i32, i32, i32
  }
  func.func @transform_2(%arg0: i32, %arg1: memref<4xi32, #tpu.memory_space<smem>>) -> (i32, i32, i32) {
    %c0_i32 = arith.constant 0 : i32
    %c0_i32_0 = arith.constant 0 : i32
    %c0_i32_1 = arith.constant 0 : i32
    return %arg0, %c0_i32, %c0_i32_0 : i32, i32, i32
  }
  func.func @transform_3(%arg0: i32, %arg1: memref<4xi32, #tpu.memory_space<smem>>) -> (i32, i32) {
    %c0_i32 = arith.constant 0 : i32
    %c0_i32_0 = arith.constant 0 : i32
    %c0_i32_1 = arith.constant 0 : i32
    return %c0_i32, %c0_i32_0 : i32, i32
  }
  func.func @transform_4(%arg0: i32, %arg1: memref<4xi32, #tpu.memory_space<smem>>) -> (i32, i32) {
    %c0_i32 = arith.constant 0 : i32
    %c0_i32_0 = arith.constant 0 : i32
    %c0_i32_1 = arith.constant 0 : i32
    return %c0_i32, %c0_i32_0 : i32, i32
  }
  func.func @transform_5(%arg0: i32, %arg1: memref<4xi32, #tpu.memory_space<smem>>) -> (i32, i32) {
    %c0_i32 = arith.constant 0 : i32
    %c0_i32_0 = arith.constant 0 : i32
    %c0_i32_1 = arith.constant 0 : i32
    return %c0_i32, %c0_i32_0 : i32, i32
  }
  func.func @transform_6(%arg0: i32, %arg1: memref<4xi32, #tpu.memory_space<smem>>) -> (i32, i32, i32) {
    %c0_i32 = arith.constant 0 : i32
    %c0_i32_0 = arith.constant 0 : i32
    %c0_i32_1 = arith.constant 0 : i32
    return %arg0, %c0_i32, %c0_i32_0 : i32, i32, i32
  }
  func.func @transform_7(%arg0: i32, %arg1: memref<4xi32, #tpu.memory_space<smem>>) -> (i32, i32, i32) {
    %c0_i32 = arith.constant 0 : i32
    %c0_i32_0 = arith.constant 0 : i32
    %c0_i32_1 = arith.constant 0 : i32
    return %arg0, %c0_i32, %c0_i32_0 : i32, i32, i32
  }
}

</mosaic_0001>

<llo_original>
// kernel: tpu_custom_call.1
$region0: #{tpu_custom_call.1}
  #allocation0 [shape = 'u32[]', space=smem, size = 0x4, offset = 0x4, fixed_abs, tag = 'smem constant byte address 0x4 - core index']
  #allocation1 [shape = 'u32[144,128]{1,0:T(1,128)}', space=vmem, size = 0x12000, scoped, tag = 'internal scratch']
  #allocation2 [shape = 'f32[2,8,128]{2,1,0:T(8,128)}', space=vmem, size = 0x2000, scoped, tag = 'scratch operand']
  #allocation3 [shape = 's32[1]{0}', space=sflag, size = 0x4, scoped, tag = 'scoped memory for tpu_custom_call.1']
  #allocation4 [shape = 'u8[512]{0}', space=smem, size = 0x200, scoped, tag = 'prefetched SMEM operand 0']
  %s0 = inlined_call_operand.vmem [shape: s32[4], index: 0, kind: input, shape index: {}]
  %s1 = inlined_call_operand.vmem [shape: f32[4,8,32], index: 1, kind: input, shape index: {}]
  %s2 = inlined_call_operand.vmem [shape: f32[4,128,16], index: 2, kind: input, shape index: {}]
  %s3 = inlined_call_operand.vmem [shape: f32[4,128,128], index: 3, kind: input, shape index: {}]
  %s4 = inlined_call_operand.vmem [shape: f32[32,32], index: 4, kind: input, shape index: {}]
  %s5 = inlined_call_operand.hbm [shape: f32[16,32], index: 5, kind: input, shape index: {}]
  %s6 = inlined_call_operand.vmem [shape: f32[1,32], index: 6, kind: input, shape index: {}]
  %s7 = inlined_call_operand.hbm [shape: f32[4,8,128], index: 7, kind: output, shape index: {0}]
  %s8 = inlined_call_operand.hbm [shape: f32[4,8,128], index: 8, kind: output, shape index: {1}]
  %9 = xla_tuple %s7, %s8
  %s10 = sld [smem:[#allocation0]]
  $region69: #{tpu_custom_call.1} parent=0
    _
  %s12 = ssub.s32 1, %s10
  %s13 = scalar_select 0, %s12, %s10
  %s14 = sshll.u32 %s0, 4
  %s15 = int_to_ptr.vmem [resolvable:$true] %s14
  %17 = dma.vmem_to_smem %s15, 16, [#allocation4], [#allocation3]
  %18 = dma.done [#allocation3], 16
  %19 = sfence
  $region1: #{tpu_custom_call.1} parent=0
    #allocation5 [shape = 'u8[8192]{0}', space=vmem, size = 0x2000, scoped, tag = 'input window, operand 5, single buffered']
    #allocation6 [shape = 's32[2]{0}', space=sflag, size = 0x8, scoped, tag = 'scoped memory for tpu_custom_call.1']
    #allocation7 [shape = 's32[2]{0}', space=sflag, size = 0x8, scoped, tag = 'scoped memory for tpu_custom_call.1']
    #allocation8 [shape = 'u8[16384]{0}', space=vmem, size = 0x4000, scoped, tag = 'output window, operand 0']
    #allocation9 [shape = 'u8[16384]{0}', space=vmem, size = 0x4000, scoped, tag = 'output window, operand 1']
    #allocation10 [shape = 's32[2]{0}', space=sflag, size = 0x8, scoped, tag = 'scoped memory for tpu_custom_call.1']
    %20 = vsyncpa [#allocation6], 0
    %21 = vsyncpa [#allocation7], 0
    %s22 = scalar_lea.sflag [#allocation7], 1
    %23 = vsyncpa %s22, 0
    %24 = vsyncpa [#allocation10], 0
    %s25 = scalar_lea.sflag [#allocation10], 1
    %26 = vsyncpa %s25, 0
    loop: start=0, step=1, limit=4
    $region2: #{tpu_custom_call.1} parent=1 // loop_pre_header
      _
    $region3: #{tpu_custom_call.1} parent=1 // loop_header
      %s28 = sphi 0, %s32
      %p29 = scmp.ge.s32.totalorder %s28, 4
      %s38 = sphi 0, %s40
      %s41 = sphi 0, %s38
      %s42 = sphi 0, %s41
      %s58 = sphi 0, %s42
      %s64 = sphi 0, %s66
      %s67 = sphi 0, %s64
      %s68 = sphi 0, %s67
      %s84 = sphi 0, %s68
      %s90 = sphi 0, %s92
      %s93 = sphi 0, %s90
      %s94 = sphi 0, %s93
      %s110 = sphi 0, %s94
      %s114 = sphi 0, %s114
      %s116 = sphi 0, %s114
      %s117 = sphi 0, %s116
      %s131 = sphi 0, %s117
      %s135 = sphi 0, %s135
      %s137 = sphi 0, %s135
      %s138 = sphi 0, %s137
      %s152 = sphi 0, %s138
      %s156 = sphi 0, %s156
      %s158 = sphi 0, %s156
      %s159 = sphi 0, %s158
      %s173 = sphi 0, %s159
      %s179 = sphi 0, %s181
      %s182 = sphi 0, %s179
      %s183 = sphi 0, %s182
      %s199 = sphi 0, %s183
      %s205 = sphi 0, %s207
      %s208 = sphi 0, %s205
      %s209 = sphi 0, %s208
      %s225 = sphi 0, %s209
    $region4: #{tpu_custom_call.1} parent=1 // loop_header_branch
      %31 = sbr.rel (%p29) target = $region8
    $region5: #{tpu_custom_call.1} parent=1 // loop_body
      %s33 = ssub.s32 %s28, 1
      %s34 = ssub.s32 %s28, 2
      %s35 = sadd.s32 %s28, 1
      %s36 = ssub.s32 %s28, %s35
      %p37 = scmp.eq.s32.totalorder %s36, 0
      %s39 = sadd.s32 %s38, 1
      %s40 = scalar_select %p37, %s38, %s39
      %p43 = pneg %p37
      %p44 = scmp.eq.s32.totalorder %s28, 1
      %p45 = por %p43, %p44
      %p46 = scmp.ne.s32.totalorder %s38, %s41
      %p47 = scmp.eq.s32.totalorder %s28, 0
      %p48 = por %p46, %p47
      %p49 = scmp.ne.s32.totalorder %s38, %s41
      %p50 = scmp.eq.s32.totalorder %s33, 1
      %p51 = por %p49, %p50
      %p52 = scmp.ne.s32.totalorder %s41, %s42
      %p53 = scmp.eq.s32.totalorder %s33, 0
      %p54 = por %p52, %p53
      %p55 = scmp.ne.s32.totalorder %s41, %s42
      %p56 = scmp.eq.s32.totalorder %s34, 1
      %p57 = por %p55, %p56
      %p59 = scmp.ne.s32.totalorder %s42, %s58
      %p60 = scmp.eq.s32.totalorder %s34, 0
      %p61 = por %p59, %p60
      %s62 = ssub.s32 %s28, %s35
      %p63 = scmp.eq.s32.totalorder %s62, 0
      %s65 = sadd.s32 %s64, 1
      %s66 = scalar_select %p63, %s64, %s65
      %p69 = pneg %p63
      %p70 = scmp.eq.s32.totalorder %s28, 1
      %p71 = por %p69, %p70
      %p72 = scmp.ne.s32.totalorder %s64, %s67
      %p73 = scmp.eq.s32.totalorder %s28, 0
      %p74 = por %p72, %p73
      %p75 = scmp.ne.s32.totalorder %s64, %s67
      %p76 = scmp.eq.s32.totalorder %s33, 1
      %p77 = por %p75, %p76
      %p78 = scmp.ne.s32.totalorder %s67, %s68
      %p79 = scmp.eq.s32.totalorder %s33, 0
      %p80 = por %p78, %p79
      %p81 = scmp.ne.s32.totalorder %s67, %s68
      %p82 = scmp.eq.s32.totalorder %s34, 1
      %p83 = por %p81, %p82
      %p85 = scmp.ne.s32.totalorder %s68, %s84
      %p86 = scmp.eq.s32.totalorder %s34, 0
      %p87 = por %p85, %p86
      %s88 = ssub.s32 %s28, %s35
      %p89 = scmp.eq.s32.totalorder %s88, 0
      %s91 = sadd.s32 %s90, 1
      %s92 = scalar_select %p89, %s90, %s91
      %p95 = pneg %p89
      %p96 = scmp.eq.s32.totalorder %s28, 1
      %p97 = por %p95, %p96
      %p98 = scmp.ne.s32.totalorder %s90, %s93
      %p99 = scmp.eq.s32.totalorder %s28, 0
      %p100 = por %p98, %p99
      %p101 = scmp.ne.s32.totalorder %s90, %s93
      %p102 = scmp.eq.s32.totalorder %s33, 1
      %p103 = por %p101, %p102
      %p104 = scmp.ne.s32.totalorder %s93, %s94
      %p105 = scmp.eq.s32.totalorder %s33, 0
      %p106 = por %p104, %p105
      %p107 = scmp.ne.s32.totalorder %s93, %s94
      %p108 = scmp.eq.s32.totalorder %s34, 1
      %p109 = por %p107, %p108
      %p111 = scmp.ne.s32.totalorder %s94, %s110
      %p112 = scmp.eq.s32.totalorder %s34, 0
      %p113 = por %p111, %p112
      %s115 = sadd.s32 %s114, 1
      %p118 = scmp.eq.s32.totalorder %s28, 1
      %p119 = scmp.ne.s32.totalorder %s114, %s116
      %p120 = scmp.eq.s32.totalorder %s28, 0
      %p121 = por %p119, %p120
      %p122 = scmp.ne.s32.totalorder %s114, %s116
      %p123 = scmp.eq.s32.totalorder %s33, 1
      %p124 = por %p122, %p123
      %p125 = scmp.ne.s32.totalorder %s116, %s117
      %p126 = scmp.eq.s32.totalorder %s33, 0
      %p127 = por %p125, %p126
      %p128 = scmp.ne.s32.totalorder %s116, %s117
      %p129 = scmp.eq.s32.totalorder %s34, 1
      %p130 = por %p128, %p129
      %p132 = scmp.ne.s32.totalorder %s117, %s131
      %p133 = scmp.eq.s32.totalorder %s34, 0
      %p134 = por %p132, %p133
      %s136 = sadd.s32 %s135, 1
      %p139 = scmp.eq.s32.totalorder %s28, 1
      %p140 = scmp.ne.s32.totalorder %s135, %s137
      %p141 = scmp.eq.s32.totalorder %s28, 0
      %p142 = por %p140, %p141
      %p143 = scmp.ne.s32.totalorder %s135, %s137
      %p144 = scmp.eq.s32.totalorder %s33, 1
      %p145 = por %p143, %p144
      %p146 = scmp.ne.s32.totalorder %s137, %s138
      %p147 = scmp.eq.s32.totalorder %s33, 0
      %p148 = por %p146, %p147
      %p149 = scmp.ne.s32.totalorder %s137, %s138
      %p150 = scmp.eq.s32.totalorder %s34, 1
      %p151 = por %p149, %p150
      %p153 = scmp.ne.s32.totalorder %s138, %s152
      %p154 = scmp.eq.s32.totalorder %s34, 0
      %p155 = por %p153, %p154
      %s157 = sadd.s32 %s156, 1
      %p160 = scmp.eq.s32.totalorder %s28, 1
      %p161 = scmp.ne.s32.totalorder %s156, %s158
      %p162 = scmp.eq.s32.totalorder %s28, 0
      %p163 = por %p161, %p162
      %p164 = scmp.ne.s32.totalorder %s156, %s158
      %p165 = scmp.eq.s32.totalorder %s33, 1
      %p166 = por %p164, %p165
      %p167 = scmp.ne.s32.totalorder %s158, %s159
      %p168 = scmp.eq.s32.totalorder %s33, 0
      %p169 = por %p167, %p168
      %p170 = scmp.ne.s32.totalorder %s158, %s159
      %p171 = scmp.eq.s32.totalorder %s34, 1
      %p172 = por %p170, %p171
      %p174 = scmp.ne.s32.totalorder %s159, %s173
      %p175 = scmp.eq.s32.totalorder %s34, 0
      %p176 = por %p174, %p175
      %s177 = ssub.s32 %s28, %s35
      %p178 = scmp.eq.s32.totalorder %s177, 0
      %s180 = sadd.s32 %s179, 1
      %s181 = scalar_select %p178, %s179, %s180
      %p184 = pneg %p178
      %p185 = scmp.eq.s32.totalorder %s28, 1
      %p186 = por %p184, %p185
      %p187 = scmp.ne.s32.totalorder %s179, %s182
      %p188 = scmp.eq.s32.totalorder %s28, 0
      %p189 = por %p187, %p188
      %p190 = scmp.ne.s32.totalorder %s179, %s182
      %p191 = scmp.eq.s32.totalorder %s33, 1
      %p192 = por %p190, %p191
      %p193 = scmp.ne.s32.totalorder %s182, %s183
      %p194 = scmp.eq.s32.totalorder %s33, 0
      %p195 = por %p193, %p194
      %p196 = scmp.ne.s32.totalorder %s182, %s183
      %p197 = scmp.eq.s32.totalorder %s34, 1
      %p198 = por %p196, %p197
      %p200 = scmp.ne.s32.totalorder %s183, %s199
      %p201 = scmp.eq.s32.totalorder %s34, 0
      %p202 = por %p200, %p201
      %s203 = ssub.s32 %s28, %s35
      %p204 = scmp.eq.s32.totalorder %s203, 0
      %s206 = sadd.s32 %s205, 1
      %s207 = scalar_select %p204, %s205, %s206
      %p210 = pneg %p204
      %p211 = scmp.eq.s32.totalorder %s28, 1
      %p212 = por %p210, %p211
      %p213 = scmp.ne.s32.totalorder %s205, %s208
      %p214 = scmp.eq.s32.totalorder %s28, 0
      %p215 = por %p213, %p214
      %p216 = scmp.ne.s32.totalorder %s205, %s208
      %p217 = scmp.eq.s32.totalorder %s33, 1
      %p218 = por %p216, %p217
      %p219 = scmp.ne.s32.totalorder %s208, %s209
      %p220 = scmp.eq.s32.totalorder %s33, 0
      %p221 = por %p219, %p220
      %p222 = scmp.ne.s32.totalorder %s208, %s209
      %p223 = scmp.eq.s32.totalorder %s34, 1
      %p224 = por %p222, %p223
      %p226 = scmp.ne.s32.totalorder %s209, %s225
      %p227 = scmp.eq.s32.totalorder %s34, 0
      %p228 = por %p226, %p227
      %p229 = scmp.le.s32.totalorder 1, %s28
      %p230 = scmp.lt.s32.totalorder %s28, 3
      %p231 = pnand %p229, %p230
      %p232 = pneg %p231
      // Predicated region
      $region9: #{tpu_custom_call.1} parent=5 // pred_check
        _
      $region10: #{tpu_custom_call.1} parent=5 // pred_check_branch
        %234 = sbr.rel (%p231) target = $region12
      $region11: #{tpu_custom_call.1} parent=5 // pred_region
        %s235 = ssub.s32 %s28, 1
        // Predicated region
        $region13: #{tpu_custom_call.1} parent=11 // pred_check
          %p236 = pneg %p127
        $region14: #{tpu_custom_call.1} parent=11 // pred_check_branch
          %238 = sbr.rel (%p236) target = $region16
        $region15: #{tpu_custom_call.1} parent=11 // pred_region
          _
        $region16: #{tpu_custom_call.1} parent=11 // pred_fallthru
          _
        // Predicated region
        $region17: #{tpu_custom_call.1} parent=11 // pred_check
          %p239 = pneg %p148
        $region18: #{tpu_custom_call.1} parent=11 // pred_check_branch
          %241 = sbr.rel (%p239) target = $region20
        $region19: #{tpu_custom_call.1} parent=11 // pred_region
          %s243 = ssub.s32 256, 256
          %244 = vsyncadd [#allocation6], %s243
          %s245 = sshll.u32 [#allocation5], 4
          %s246 = int_to_ptr.vmem [resolvable:$true] %s245
          %251 = dma.hbm_to_vmem [thread:$0]  %s5, 256, %s246, [#allocation6], 128, 128, 8
        $region20: #{tpu_custom_call.1} parent=11 // pred_fallthru
          _
        // Predicated region
        $region21: #{tpu_custom_call.1} parent=11 // pred_check
          %p252 = pneg %p169
        $region22: #{tpu_custom_call.1} parent=11 // pred_check_branch
          %254 = sbr.rel (%p252) target = $region24
        $region23: #{tpu_custom_call.1} parent=11 // pred_region
          _
        $region24: #{tpu_custom_call.1} parent=11 // pred_fallthru
          _
      $region12: #{tpu_custom_call.1} parent=5 // pred_fallthru
        _
      %p255 = scmp.lt.s32.totalorder %s28, 2
      // Predicated region
      $region25: #{tpu_custom_call.1} parent=5 // pred_check
        %p256 = pneg %p255
      $region26: #{tpu_custom_call.1} parent=5 // pred_check_branch
        %258 = sbr.rel (%p256) target = $region28
      $region27: #{tpu_custom_call.1} parent=5 // pred_region
        // Predicated region
        $region29: #{tpu_custom_call.1} parent=27 // pred_check
          %p259 = pneg %p48
        $region30: #{tpu_custom_call.1} parent=27 // pred_check_branch
          %261 = sbr.rel (%p259) target = $region32
        $region31: #{tpu_custom_call.1} parent=27 // pred_region
          %s262 = smul.u32 2, %s28
          %p263 = scmp.lt.s32.totalorder %s262, 3
          %s264 = scalar_select %p263, %s262, 3
          %s265 = smul.addr %s264, 8
          %s266 = scalar_lea.vmem %s1, %s265
          %s267 = smul.u32 2, %s28
        $region32: #{tpu_custom_call.1} parent=27 // pred_fallthru
          _
        // Predicated region
        $region33: #{tpu_custom_call.1} parent=27 // pred_check
          %p268 = pneg %p74
        $region34: #{tpu_custom_call.1} parent=27 // pred_check_branch
          %270 = sbr.rel (%p268) target = $region36
        $region35: #{tpu_custom_call.1} parent=27 // pred_region
          %s271 = smul.u32 2, %s28
          %p272 = scmp.lt.s32.totalorder %s271, 3
          %s273 = scalar_select %p272, %s271, 3
          %s274 = smul.addr %s273, 16
          %s275 = smul.addr %s274, 8
          %s276 = scalar_lea.vmem %s2, %s275
          %s277 = smul.u32 2, %s28
        $region36: #{tpu_custom_call.1} parent=27 // pred_fallthru
          _
        // Predicated region
        $region37: #{tpu_custom_call.1} parent=27 // pred_check
          %p278 = pneg %p100
        $region38: #{tpu_custom_call.1} parent=27 // pred_check_branch
          %280 = sbr.rel (%p278) target = $region40
        $region39: #{tpu_custom_call.1} parent=27 // pred_region
          %s281 = smul.u32 2, %s28
          %p282 = scmp.lt.s32.totalorder %s281, 3
          %s283 = scalar_select %p282, %s281, 3
          %s284 = smul.addr %s283, 16
          %s285 = smul.addr %s284, 8
          %s286 = scalar_lea.vmem %s3, %s285
          %s287 = smul.u32 2, %s28
        $region40: #{tpu_custom_call.1} parent=27 // pred_fallthru
          _
      $region28: #{tpu_custom_call.1} parent=5 // pred_fallthru
        _
      %p288 = scmp.le.s32.totalorder 1, %s28
      %p289 = scmp.lt.s32.totalorder %s28, 3
      %p290 = pnand %p288, %p289
      %p291 = pneg %p290
      // Predicated region
      $region41: #{tpu_custom_call.1} parent=5 // pred_check
        _
      $region42: #{tpu_custom_call.1} parent=5 // pred_check_branch
        %293 = sbr.rel (%p290) target = $region44
      $region43: #{tpu_custom_call.1} parent=5 // pred_region
        %s294 = ssub.s32 %s28, 1
        // Predicated region
        $region45: #{tpu_custom_call.1} parent=43 // pred_check
          %p295 = pneg %p148
        $region46: #{tpu_custom_call.1} parent=43 // pred_check_branch
          %297 = sbr.rel (%p295) target = $region48
        $region47: #{tpu_custom_call.1} parent=43 // pred_region
          %298 = dma.done [#allocation6], 256
        $region48: #{tpu_custom_call.1} parent=43 // pred_fallthru
          _
        %s299 = smul.u32 2, %s33
        %p300 = scmp.lt.s32.totalorder %s299, 3
        %s301 = scalar_select %p300, %s299, 3
        %s302 = smul.addr %s301, 8
        %s303 = scalar_lea.vmem %s1, %s302
        %p304 = pneg %p54
        %p305 = pneg %p51
        %s306 = smul.u32 2, %s33
        %p307 = scmp.lt.s32.totalorder %s306, 3
        %s308 = scalar_select %p307, %s306, 3
        %s309 = smul.addr %s308, 16
        %s310 = smul.addr %s309, 8
        %s311 = scalar_lea.vmem %s2, %s310
        %p312 = pneg %p80
        %p313 = pneg %p77
        %s314 = smul.u32 2, %s33
        %p315 = scmp.lt.s32.totalorder %s314, 3
        %s316 = scalar_select %p315, %s314, 3
        %s317 = smul.addr %s316, 16
        %s318 = smul.addr %s317, 8
        %s319 = scalar_lea.vmem %s3, %s318
        %p320 = pneg %p106
        %p321 = pneg %p103
        %p322 = pneg %p127
        %p323 = pneg %p124
        %p324 = pneg %p148
        %p325 = pneg %p145
        %p326 = pneg %p169
        %p327 = pneg %p166
        %p328 = pneg %p195
        %p329 = pneg %p192
        %s330 = sand.u32 %s182, 1
        %s331 = scalar_lea.sflag [#allocation7], %s330
        %s332 = sand.u32 %s182, 1
        %s333 = smul.addr %s332, 16
        %s334 = scalar_lea.vmem [#allocation8], %s333
        %p335 = pneg %p221
        %p336 = pneg %p218
        %s337 = sand.u32 %s208, 1
        %s338 = scalar_lea.sflag [#allocation10], %s337
        %s339 = sand.u32 %s208, 1
        %s340 = smul.addr %s339, 16
        %s341 = scalar_lea.vmem [#allocation9], %s340
        %s342 = smul.u32 2, %s33
        %p343 = scmp.lt.s32.totalorder %s342, 3
        %s344 = scalar_select %p343, %s342, 3
        %s345 = smul.addr %s344, 8
        %s346 = scalar_lea.vmem %s1, %s345
        %s347 = smul.u32 2, %s33
        %s348 = smul.u32 2, %s33
        %p349 = scmp.lt.s32.totalorder %s348, 3
        %s350 = scalar_select %p349, %s348, 3
        %s351 = smul.addr %s350, 16
        %s352 = smul.addr %s351, 8
        %s353 = scalar_lea.vmem %s2, %s352
        %s354 = smul.u32 2, %s33
        %s355 = smul.u32 2, %s33
        %p356 = scmp.lt.s32.totalorder %s355, 3
        %s357 = scalar_select %p356, %s355, 3
        %s358 = smul.addr %s357, 16
        %s359 = smul.addr %s358, 8
        %s360 = scalar_lea.vmem %s3, %s359
        %s361 = smul.u32 2, %s33
        %s362 = smul.u32 2, %s33
        %s363 = smul.u32 2, %s33
        %v364 = vld [vmem:[%s4] sm:$0xff]
        %v365 = vld [vmem:[%s4 + $0x8] sm:$0xff]
        %v366 = vld [vmem:[%s4 + $0x10] sm:$0xff]
        %v367 = vld [vmem:[%s4 + $0x18] sm:$0xff]
        %v368 = vld [vmem:[#allocation5] sm:$0xff]
        %v369 = vld [vmem:[#allocation5 + $0x8] sm:$0xff]
        %v370 = vld [vmem:[%s6] sm:$0x1]
        %v371 = vld [vmem:[%s346] sm:$0xff]
        %v372 = vld [vmem:[%s346 + $0x8] sm:$0xff]
        %vm373 = vcmask 261120
        %v375 = vsel %vm373, %v371, 0
        %v378 = vsel %vm373, %v372, 0
        %380 = vmatprep.subr.mxu0 0.0
        %381 = vmatpush1.msra.mxu0 0.0
        %382 = vmatprep.subr.mxu0 0.0
        %383 = vmatpush1.msra.mxu0 0.0
        %384 = vmatprep.subr.mxu0 0.0
        %385 = vmatpush1.msra.mxu0 0.0
        %386 = vmatprep.subr.mxu0 0.0
        %387 = vmatpush1.msra.mxu0 0.0
        %388 = vmatprep.subr.mxu0 0.0
        %389 = vmatpush1.msra.mxu0 0.0
        %390 = vmatprep.subr.mxu0 0.0
        %391 = vmatpush1.msra.mxu0 0.0
        %392 = vmatprep.subr.mxu0 0.0
        %393 = vmatpush1.msra.mxu0 0.0
        %394 = vmatprep.subr.mxu0 0.0
        %395 = vmatpush1.msra.mxu0 0.0
        %396 = vmatprep.subr.mxu0 0.0
        %397 = vmatpush1.msra.mxu0 0.0
        %398 = vmatprep.subr.mxu0 0.0
        %399 = vmatpush1.msra.mxu0 0.0
        %400 = vmatprep.subr.mxu0 0.0
        %401 = vmatpush1.msra.mxu0 0.0
        %402 = vmatprep.subr.mxu0 0.0
        %403 = vmatpush1.msra.mxu0 0.0
        %404 = vmatprep.subr.mxu0 0.0
        %405 = vmatpush1.msra.mxu0 %v367
        %406 = vmatprep.subr.mxu0 0.0
        %407 = vmatpush1.msra.mxu0 %v366
        %408 = vmatprep.subr.mxu0 0.0
        %409 = vmatpush1.msra.mxu0 %v365
        %410 = vmatprep.subr.mxu0 0.0
        %411 = vmatpush1.msra.mxu0 %v364
        %412 = vmatprep.subr.mxu0 0.0
        %413 = vmatpush2.msra.mxu0 0.0
        %414 = vmatprep.subr.mxu0 0.0
        %415 = vmatpush2.msra.mxu0 0.0
        %416 = vmatprep.subr.mxu0 0.0
        %417 = vmatpush2.msra.mxu0 0.0
        %418 = vmatprep.subr.mxu0 0.0
        %419 = vmatpush2.msra.mxu0 0.0
        %420 = vmatprep.subr.mxu0 0.0
        %421 = vmatpush2.msra.mxu0 0.0
        %422 = vmatprep.subr.mxu0 0.0
        %423 = vmatpush2.msra.mxu0 0.0
        %424 = vmatprep.subr.mxu0 0.0
        %425 = vmatpush2.msra.mxu0 0.0
        %426 = vmatprep.subr.mxu0 0.0
        %427 = vmatpush2.msra.mxu0 0.0
        %428 = vmatprep.subr.mxu0 0.0
        %429 = vmatpush2.msra.mxu0 0.0
        %430 = vmatprep.subr.mxu0 0.0
        %431 = vmatpush2.msra.mxu0 0.0
        %432 = vmatprep.subr.mxu0 0.0
        %433 = vmatpush2.msra.mxu0 0.0
        %434 = vmatprep.subr.mxu0 0.0
        %435 = vmatpush2.msra.mxu0 0.0
        %436 = vmatprep.subr.mxu0 0.0
        %437 = vmatpush2.msra.mxu0 0.0
        %438 = vmatprep.subr.mxu0 0.0
        %439 = vmatpush2.msra.mxu0 0.0
        %440 = vmatprep.subr.mxu0 0.0
        %441 = vmatpush2.msra.mxu0 0.0
        %442 = vmatprep.subr.mxu0 0.0
        %443 = vmatpush2.msra.mxu0 0.0
        %444 = vmatprep.mubr.f32.mxu0 0.0
        %445 = vmatmul.mubr.f32.gmra.mxu0 %v375
        %v446 = vpop.f32.mrf.mxu0
        %v447 = vadd.f32 0.0, %v446
        %v448 = vpop.f32.mrf.mxu0
        %449 = vmatprep.mubr.f32.mxu0 0.0
        %450 = vmatmul.mubr.f32.gmra.mxu0 %v378
        %v451 = vpop.f32.mrf.mxu0
        %v452 = vadd.f32 0.0, %v451
        %v453 = vpop.f32.mrf.mxu0
        %454 = vdwg.mxu0
        %v455 = vld [vmem:[%s353] sm:$0xff]
        %v456 = vld [vmem:[%s353 + $0x8] sm:$0xff]
        %v457 = vld [vmem:[%s353 + $0x10] sm:$0xff]
        %v458 = vld [vmem:[%s353 + $0x18] sm:$0xff]
        %v459 = vld [vmem:[%s353 + $0x20] sm:$0xff]
        %v460 = vld [vmem:[%s353 + $0x28] sm:$0xff]
        %v461 = vld [vmem:[%s353 + $0x30] sm:$0xff]
        %v462 = vld [vmem:[%s353 + $0x38] sm:$0xff]
        %v463 = vld [vmem:[%s353 + $0x40] sm:$0xff]
        %v464 = vld [vmem:[%s353 + $0x48] sm:$0xff]
        %v465 = vld [vmem:[%s353 + $0x50] sm:$0xff]
        %v466 = vld [vmem:[%s353 + $0x58] sm:$0xff]
        %v467 = vld [vmem:[%s353 + $0x60] sm:$0xff]
        %v468 = vld [vmem:[%s353 + $0x68] sm:$0xff]
        %v469 = vld [vmem:[%s353 + $0x70] sm:$0xff]
        %v470 = vld [vmem:[%s353 + $0x78] sm:$0xff]
        %v471 = vld [vmem:[%s353 + $0x80] sm:$0xff]
        %v472 = vld [vmem:[%s353 + $0x88] sm:$0xff]
        %v473 = vld [vmem:[%s353 + $0x90] sm:$0xff]
        %v474 = vld [vmem:[%s353 + $0x98] sm:$0xff]
        %v475 = vld [vmem:[%s353 + $0xa0] sm:$0xff]
        %v476 = vld [vmem:[%s353 + $0xa8] sm:$0xff]
        %v477 = vld [vmem:[%s353 + $0xb0] sm:$0xff]
        %v478 = vld [vmem:[%s353 + $0xb8] sm:$0xff]
        %v479 = vld [vmem:[%s353 + $0xc0] sm:$0xff]
        %v480 = vld [vmem:[%s353 + $0xc8] sm:$0xff]
        %v481 = vld [vmem:[%s353 + $0xd0] sm:$0xff]
        %v482 = vld [vmem:[%s353 + $0xd8] sm:$0xff]
        %v483 = vld [vmem:[%s353 + $0xe0] sm:$0xff]
        %v484 = vld [vmem:[%s353 + $0xe8] sm:$0xff]
        %v485 = vld [vmem:[%s353 + $0xf0] sm:$0xff]
        %v486 = vld [vmem:[%s353 + $0xf8] sm:$0xff]
        %vm487 = vcmask 130048
        %v489 = vsel %vm487, %v455, 0
        %v492 = vsel %vm487, %v456, 0
        %v495 = vsel %vm487, %v457, 0
        %v498 = vsel %vm487, %v458, 0
        %v501 = vsel %vm487, %v459, 0
        %v504 = vsel %vm487, %v460, 0
        %v507 = vsel %vm487, %v461, 0
        %v510 = vsel %vm487, %v462, 0
        %v513 = vsel %vm487, %v463, 0
        %v516 = vsel %vm487, %v464, 0
        %v519 = vsel %vm487, %v465, 0
        %v522 = vsel %vm487, %v466, 0
        %v525 = vsel %vm487, %v467, 0
        %v528 = vsel %vm487, %v468, 0
        %v531 = vsel %vm487, %v469, 0
        %v534 = vsel %vm487, %v470, 0
        %v537 = vsel %vm487, %v471, 0
        %v540 = vsel %vm487, %v472, 0
        %v543 = vsel %vm487, %v473, 0
        %v546 = vsel %vm487, %v474, 0
        %v549 = vsel %vm487, %v475, 0
        %v552 = vsel %vm487, %v476, 0
        %v555 = vsel %vm487, %v477, 0
        %v558 = vsel %vm487, %v478, 0
        %v561 = vsel %vm487, %v479, 0
        %v564 = vsel %vm487, %v480, 0
        %v567 = vsel %vm487, %v481, 0
        %v570 = vsel %vm487, %v482, 0
        %v573 = vsel %vm487, %v483, 0
        %v576 = vsel %vm487, %v484, 0
        %v579 = vsel %vm487, %v485, 0
        %v582 = vsel %vm487, %v486, 0
        %584 = vmatprep.subr.mxu0 0.0
        %585 = vmatpush1.msra.mxu0 0.0
        %586 = vmatprep.subr.mxu0 0.0
        %587 = vmatpush1.msra.mxu0 0.0
        %588 = vmatprep.subr.mxu0 0.0
        %589 = vmatpush1.msra.mxu0 0.0
        %590 = vmatprep.subr.mxu0 0.0
        %591 = vmatpush1.msra.mxu0 0.0
        %592 = vmatprep.subr.mxu0 0.0
        %593 = vmatpush1.msra.mxu0 0.0
        %594 = vmatprep.subr.mxu0 0.0
        %595 = vmatpush1.msra.mxu0 0.0
        %596 = vmatprep.subr.mxu0 0.0
        %597 = vmatpush1.msra.mxu0 0.0
        %598 = vmatprep.subr.mxu0 0.0
        %599 = vmatpush1.msra.mxu0 0.0
        %600 = vmatprep.subr.mxu0 0.0
        %601 = vmatpush1.msra.mxu0 0.0
        %602 = vmatprep.subr.mxu0 0.0
        %603 = vmatpush1.msra.mxu0 0.0
        %604 = vmatprep.subr.mxu0 0.0
        %605 = vmatpush1.msra.mxu0 0.0
        %606 = vmatprep.subr.mxu0 0.0
        %607 = vmatpush1.msra.mxu0 0.0
        %608 = vmatprep.subr.mxu0 0.0
        %609 = vmatpush1.msra.mxu0 0.0
        %610 = vmatprep.subr.mxu0 0.0
        %611 = vmatpush1.msra.mxu0 0.0
        %612 = vmatprep.subr.mxu0 0.0
        %613 = vmatpush1.msra.mxu0 %v369
        %614 = vmatprep.subr.mxu0 0.0
        %615 = vmatpush1.msra.mxu0 %v368
        %616 = vmatprep.subr.mxu0 0.0
        %617 = vmatpush2.msra.mxu0 0.0
        %618 = vmatprep.subr.mxu0 0.0
        %619 = vmatpush2.msra.mxu0 0.0
        %620 = vmatprep.subr.mxu0 0.0
        %621 = vmatpush2.msra.mxu0 0.0
        %622 = vmatprep.subr.mxu0 0.0
        %623 = vmatpush2.msra.mxu0 0.0
        %624 = vmatprep.subr.mxu0 0.0
        %625 = vmatpush2.msra.mxu0 0.0
        %626 = vmatprep.subr.mxu0 0.0
        %627 = vmatpush2.msra.mxu0 0.0
        %628 = vmatprep.subr.mxu0 0.0
        %629 = vmatpush2.msra.mxu0 0.0
        %630 = vmatprep.subr.mxu0 0.0
        %631 = vmatpush2.msra.mxu0 0.0
        %632 = vmatprep.subr.mxu0 0.0
        %633 = vmatpush2.msra.mxu0 0.0
        %634 = vmatprep.subr.mxu0 0.0
        %635 = vmatpush2.msra.mxu0 0.0
        %636 = vmatprep.subr.mxu0 0.0
        %637 = vmatpush2.msra.mxu0 0.0
        %638 = vmatprep.subr.mxu0 0.0
        %639 = vmatpush2.msra.mxu0 0.0
        %640 = vmatprep.subr.mxu0 0.0
        %641 = vmatpush2.msra.mxu0 0.0
        %642 = vmatprep.subr.mxu0 0.0
        %643 = vmatpush2.msra.mxu0 0.0
        %644 = vmatprep.subr.mxu0 0.0
        %645 = vmatpush2.msra.mxu0 0.0
        %646 = vmatprep.subr.mxu0 0.0
        %647 = vmatpush2.msra.mxu0 0.0
        %648 = vmatprep.mubr.f32.mxu0 0.0
        %649 = vmatmul.mubr.f32.gmra.mxu0 %v489
        %v650 = vpop.f32.mrf.mxu0
        %v651 = vadd.f32 0.0, %v650
        %v652 = vpop.f32.mrf.mxu0
        %653 = vmatprep.mubr.f32.mxu0 0.0
        %654 = vmatmul.mubr.f32.gmra.mxu0 %v492
        %v655 = vpop.f32.mrf.mxu0
        %v656 = vadd.f32 0.0, %v655
        %v657 = vpop.f32.mrf.mxu0
        %658 = vmatprep.mubr.f32.mxu0 0.0
        %659 = vmatmul.mubr.f32.gmra.mxu0 %v495
        %v660 = vpop.f32.mrf.mxu0
        %v661 = vadd.f32 0.0, %v660
        %v662 = vpop.f32.mrf.mxu0
        %663 = vmatprep.mubr.f32.mxu0 0.0
        %664 = vmatmul.mubr.f32.gmra.mxu0 %v498
        %v665 = vpop.f32.mrf.mxu0
        %v666 = vadd.f32 0.0, %v665
        %v667 = vpop.f32.mrf.mxu0
        %668 = vmatprep.mubr.f32.mxu0 0.0
        %669 = vmatmul.mubr.f32.gmra.mxu0 %v501
        %v670 = vpop.f32.mrf.mxu0
        %v671 = vadd.f32 0.0, %v670
        %v672 = vpop.f32.mrf.mxu0
        %673 = vmatprep.mubr.f32.mxu0 0.0
        %674 = vmatmul.mubr.f32.gmra.mxu0 %v504
        %v675 = vpop.f32.mrf.mxu0
        %v676 = vadd.f32 0.0, %v675
        %v677 = vpop.f32.mrf.mxu0
        %678 = vmatprep.mubr.f32.mxu0 0.0
        %679 = vmatmul.mubr.f32.gmra.mxu0 %v507
        %v680 = vpop.f32.mrf.mxu0
        %v681 = vadd.f32 0.0, %v680
        %v682 = vpop.f32.mrf.mxu0
        %683 = vmatprep.mubr.f32.mxu0 0.0
        %684 = vmatmul.mubr.f32.gmra.mxu0 %v510
        %v685 = vpop.f32.mrf.mxu0
        %v686 = vadd.f32 0.0, %v685
        %v687 = vpop.f32.mrf.mxu0
        %688 = vmatprep.mubr.f32.mxu0 0.0
        %689 = vmatmul.mubr.f32.gmra.mxu0 %v513
        %v690 = vpop.f32.mrf.mxu0
        %v691 = vadd.f32 0.0, %v690
        %v692 = vpop.f32.mrf.mxu0
        %693 = vmatprep.mubr.f32.mxu0 0.0
        %694 = vmatmul.mubr.f32.gmra.mxu0 %v516
        %v695 = vpop.f32.mrf.mxu0
        %v696 = vadd.f32 0.0, %v695
        %v697 = vpop.f32.mrf.mxu0
        %698 = vmatprep.mubr.f32.mxu0 0.0
        %699 = vmatmul.mubr.f32.gmra.mxu0 %v519
        %v700 = vpop.f32.mrf.mxu0
        %v701 = vadd.f32 0.0, %v700
        %v702 = vpop.f32.mrf.mxu0
        %703 = vmatprep.mubr.f32.mxu0 0.0
        %704 = vmatmul.mubr.f32.gmra.mxu0 %v522
        %v705 = vpop.f32.mrf.mxu0
        %v706 = vadd.f32 0.0, %v705
        %v707 = vpop.f32.mrf.mxu0
        %708 = vmatprep.mubr.f32.mxu0 0.0
        %709 = vmatmul.mubr.f32.gmra.mxu0 %v525
        %v710 = vpop.f32.mrf.mxu0
        %v711 = vadd.f32 0.0, %v710
        %v712 = vpop.f32.mrf.mxu0
        %713 = vmatprep.mubr.f32.mxu0 0.0
        %714 = vmatmul.mubr.f32.gmra.mxu0 %v528
        %v715 = vpop.f32.mrf.mxu0
        %v716 = vadd.f32 0.0, %v715
        %v717 = vpop.f32.mrf.mxu0
        %718 = vmatprep.mubr.f32.mxu0 0.0
        %719 = vmatmul.mubr.f32.gmra.mxu0 %v531
        %v720 = vpop.f32.mrf.mxu0
        %v721 = vadd.f32 0.0, %v720
        %v722 = vpop.f32.mrf.mxu0
        %723 = vmatprep.mubr.f32.mxu0 0.0
        %724 = vmatmul.mubr.f32.gmra.mxu0 %v534
        %v725 = vpop.f32.mrf.mxu0
        %v726 = vadd.f32 0.0, %v725
        %v727 = vpop.f32.mrf.mxu0
        %728 = vmatprep.mubr.f32.mxu0 0.0
        %729 = vmatmul.mubr.f32.gmra.mxu0 %v537
        %v730 = vpop.f32.mrf.mxu0
        %v731 = vadd.f32 0.0, %v730
        %v732 = vpop.f32.mrf.mxu0
        %733 = vmatprep.mubr.f32.mxu0 0.0
        %734 = vmatmul.mubr.f32.gmra.mxu0 %v540
        %v735 = vpop.f32.mrf.mxu0
        %v736 = vadd.f32 0.0, %v735
        %v737 = vpop.f32.mrf.mxu0
        %738 = vmatprep.mubr.f32.mxu0 0.0
        %739 = vmatmul.mubr.f32.gmra.mxu0 %v543
        %v740 = vpop.f32.mrf.mxu0
        %v741 = vadd.f32 0.0, %v740
        %v742 = vpop.f32.mrf.mxu0
        %743 = vmatprep.mubr.f32.mxu0 0.0
        %744 = vmatmul.mubr.f32.gmra.mxu0 %v546
        %v745 = vpop.f32.mrf.mxu0
        %v746 = vadd.f32 0.0, %v745
        %v747 = vpop.f32.mrf.mxu0
        %748 = vmatprep.mubr.f32.mxu0 0.0
        %749 = vmatmul.mubr.f32.gmra.mxu0 %v549
        %v750 = vpop.f32.mrf.mxu0
        %v751 = vadd.f32 0.0, %v750
        %v752 = vpop.f32.mrf.mxu0
        %753 = vmatprep.mubr.f32.mxu0 0.0
        %754 = vmatmul.mubr.f32.gmra.mxu0 %v552
        %v755 = vpop.f32.mrf.mxu0
        %v756 = vadd.f32 0.0, %v755
        %v757 = vpop.f32.mrf.mxu0
        %758 = vmatprep.mubr.f32.mxu0 0.0
        %759 = vmatmul.mubr.f32.gmra.mxu0 %v555
        %v760 = vpop.f32.mrf.mxu0
        %v761 = vadd.f32 0.0, %v760
        %v762 = vpop.f32.mrf.mxu0
        %763 = vmatprep.mubr.f32.mxu0 0.0
        %764 = vmatmul.mubr.f32.gmra.mxu0 %v558
        %v765 = vpop.f32.mrf.mxu0
        %v766 = vadd.f32 0.0, %v765
        %v767 = vpop.f32.mrf.mxu0
        %768 = vmatprep.mubr.f32.mxu0 0.0
        %769 = vmatmul.mubr.f32.gmra.mxu0 %v561
        %v770 = vpop.f32.mrf.mxu0
        %v771 = vadd.f32 0.0, %v770
        %v772 = vpop.f32.mrf.mxu0
        %773 = vmatprep.mubr.f32.mxu0 0.0
        %774 = vmatmul.mubr.f32.gmra.mxu0 %v564
        %v775 = vpop.f32.mrf.mxu0
        %v776 = vadd.f32 0.0, %v775
        %v777 = vpop.f32.mrf.mxu0
        %778 = vmatprep.mubr.f32.mxu0 0.0
        %779 = vmatmul.mubr.f32.gmra.mxu0 %v567
        %v780 = vpop.f32.mrf.mxu0
        %v781 = vadd.f32 0.0, %v780
        %v782 = vpop.f32.mrf.mxu0
        %783 = vmatprep.mubr.f32.mxu0 0.0
        %784 = vmatmul.mubr.f32.gmra.mxu0 %v570
        %v785 = vpop.f32.mrf.mxu0
        %v786 = vadd.f32 0.0, %v785
        %v787 = vpop.f32.mrf.mxu0
        %788 = vmatprep.mubr.f32.mxu0 0.0
        %789 = vmatmul.mubr.f32.gmra.mxu0 %v573
        %v790 = vpop.f32.mrf.mxu0
        %v791 = vadd.f32 0.0, %v790
        %v792 = vpop.f32.mrf.mxu0
        %793 = vmatprep.mubr.f32.mxu0 0.0
        %794 = vmatmul.mubr.f32.gmra.mxu0 %v576
        %v795 = vpop.f32.mrf.mxu0
        %v796 = vadd.f32 0.0, %v795
        %v797 = vpop.f32.mrf.mxu0
        %798 = vmatprep.mubr.f32.mxu0 0.0
        %799 = vmatmul.mubr.f32.gmra.mxu0 %v579
        %v800 = vpop.f32.mrf.mxu0
        %v801 = vadd.f32 0.0, %v800
        %v802 = vpop.f32.mrf.mxu0
        %803 = vmatprep.mubr.f32.mxu0 0.0
        %804 = vmatmul.mubr.f32.gmra.mxu0 %v582
        %v805 = vpop.f32.mrf.mxu0
        %v806 = vadd.f32 0.0, %v805
        %v807 = vpop.f32.mrf.mxu0
        %808 = vdwg.mxu0
        %v811 = vcombine.high %v447, %v447
        %v813 = vunpack.c.l.s4 1966171168
        %v814 = vunpack.c.0.s8 %v813
        %v815 = vlaneseq
        %v816 = vshrl.u32 %v815, 7
        %v817 = vsub.s32 %v814, %v816
        %v818 = vrot.slane %v447, %v817
        %v820 = vunpack.c.l.s4 1966171168
        %v821 = vunpack.c.0.s8 %v820
        %v822 = vlaneseq
        %v823 = vshrl.u32 %v822, 7
        %v824 = vsub.s32 %v821, %v823
        %v825 = vrot.slane %v811, %v824
        %v826 = vcombine.high %v818, %v818
        %v827 = vcombine.high %v825, %v825
        %v829 = vunpack.c.l.s4 1966171168
        %v830 = vunpack.c.0.s8 %v829
        %v831 = vlaneseq
        %v832 = vshrl.u32 %v831, 7
        %v833 = vsub.s32 %v830, %v832
        %v834 = vrot.slane %v818, %v833
        %v836 = vunpack.c.l.s4 1966171168
        %v837 = vunpack.c.0.s8 %v836
        %v838 = vlaneseq
        %v839 = vshrl.u32 %v838, 7
        %v840 = vsub.s32 %v837, %v839
        %v841 = vrot.slane %v825, %v840
        %v843 = vunpack.c.l.s4 1966171168
        %v844 = vunpack.c.0.s8 %v843
        %v845 = vlaneseq
        %v846 = vshrl.u32 %v845, 7
        %v847 = vsub.s32 %v844, %v846
        %v848 = vrot.slane %v826, %v847
        %v850 = vunpack.c.l.s4 1966171168
        %v851 = vunpack.c.0.s8 %v850
        %v852 = vlaneseq
        %v853 = vshrl.u32 %v852, 7
        %v854 = vsub.s32 %v851, %v853
        %v855 = vrot.slane %v827, %v854
        %v856 = vcombine.high %v834, %v834
        %v857 = vcombine.high %v841, %v841
        %v858 = vcombine.high %v848, %v848
        %v859 = vcombine.high %v855, %v855
        %v860 = vcombine.high %v452, %v452
        %v862 = vunpack.c.l.s4 1966171168
        %v863 = vunpack.c.0.s8 %v862
        %v864 = vlaneseq
        %v865 = vshrl.u32 %v864, 7
        %v866 = vsub.s32 %v863, %v865
        %v867 = vrot.slane %v452, %v866
        %v869 = vunpack.c.l.s4 1966171168
        %v870 = vunpack.c.0.s8 %v869
        %v871 = vlaneseq
        %v872 = vshrl.u32 %v871, 7
        %v873 = vsub.s32 %v870, %v872
        %v874 = vrot.slane %v860, %v873
        %v875 = vcombine.high %v867, %v867
        %v876 = vcombine.high %v874, %v874
        %v878 = vunpack.c.l.s4 1966171168
        %v879 = vunpack.c.0.s8 %v878
        %v880 = vlaneseq
        %v881 = vshrl.u32 %v880, 7
        %v882 = vsub.s32 %v879, %v881
        %v883 = vrot.slane %v867, %v882
        %v885 = vunpack.c.l.s4 1966171168
        %v886 = vunpack.c.0.s8 %v885
        %v887 = vlaneseq
        %v888 = vshrl.u32 %v887, 7
        %v889 = vsub.s32 %v886, %v888
        %v890 = vrot.slane %v874, %v889
        %v892 = vunpack.c.l.s4 1966171168
        %v893 = vunpack.c.0.s8 %v892
        %v894 = vlaneseq
        %v895 = vshrl.u32 %v894, 7
        %v896 = vsub.s32 %v893, %v895
        %v897 = vrot.slane %v875, %v896
        %v899 = vunpack.c.l.s4 1966171168
        %v900 = vunpack.c.0.s8 %v899
        %v901 = vlaneseq
        %v902 = vshrl.u32 %v901, 7
        %v903 = vsub.s32 %v900, %v902
        %v904 = vrot.slane %v876, %v903
        %v905 = vcombine.high %v883, %v883
        %v906 = vcombine.high %v890, %v890
        %v907 = vcombine.high %v897, %v897
        %v908 = vcombine.high %v904, %v904
        %v909 = vlaneseq
        %v910 = vshrl.u32 %v909, 7
        %v911 = vsub.s32 0, %v910
        %v912 = vrot.slane %v834, %v911
        %v913 = vlaneseq
        %v914 = vshrl.u32 %v913, 7
        %v915 = vsub.s32 0, %v914
        %v916 = vrot.slane %v848, %v915
        %v917 = vlaneseq
        %v918 = vshrl.u32 %v917, 7
        %v919 = vsub.s32 0, %v918
        %v920 = vrot.slane %v856, %v919
        %v921 = vlaneseq
        %v922 = vshrl.u32 %v921, 7
        %v923 = vsub.s32 0, %v922
        %v924 = vrot.slane %v858, %v923
        %v925 = vlaneseq
        %v926 = vshrl.u32 %v925, 7
        %v927 = vsub.s32 0, %v926
        %v928 = vrot.slane %v841, %v927
        %v929 = vlaneseq
        %v930 = vshrl.u32 %v929, 7
        %v931 = vsub.s32 0, %v930
        %v932 = vrot.slane %v855, %v931
        %v933 = vlaneseq
        %v934 = vshrl.u32 %v933, 7
        %v935 = vsub.s32 0, %v934
        %v936 = vrot.slane %v857, %v935
        %v937 = vlaneseq
        %v938 = vshrl.u32 %v937, 7
        %v939 = vsub.s32 0, %v938
        %v940 = vrot.slane %v859, %v939
        %v941 = vlaneseq
        %v942 = vshrl.u32 %v941, 7
        %v943 = vsub.s32 0, %v942
        %v944 = vrot.slane %v883, %v943
        %v945 = vlaneseq
        %v946 = vshrl.u32 %v945, 7
        %v947 = vsub.s32 0, %v946
        %v948 = vrot.slane %v897, %v947
        %v949 = vlaneseq
        %v950 = vshrl.u32 %v949, 7
        %v951 = vsub.s32 0, %v950
        %v952 = vrot.slane %v905, %v951
        %v953 = vlaneseq
        %v954 = vshrl.u32 %v953, 7
        %v955 = vsub.s32 0, %v954
        %v956 = vrot.slane %v907, %v955
        %v957 = vlaneseq
        %v958 = vshrl.u32 %v957, 7
        %v959 = vsub.s32 0, %v958
        %v960 = vrot.slane %v890, %v959
        %v961 = vlaneseq
        %v962 = vshrl.u32 %v961, 7
        %v963 = vsub.s32 0, %v962
        %v964 = vrot.slane %v904, %v963
        %v965 = vlaneseq
        %v966 = vshrl.u32 %v965, 7
        %v967 = vsub.s32 0, %v966
        %v968 = vrot.slane %v906, %v967
        %v969 = vlaneseq
        %v970 = vshrl.u32 %v969, 7
        %v971 = vsub.s32 0, %v970
        %v972 = vrot.slane %v908, %v971
        %v989 = vadd.f32 %v912, %v651
        %v990 = vadd.f32 %v912, %v656
        %v991 = vadd.f32 %v912, %v661
        %v992 = vadd.f32 %v912, %v666
        %v993 = vadd.f32 %v912, %v671
        %v994 = vadd.f32 %v912, %v676
        %v995 = vadd.f32 %v912, %v681
        %v996 = vadd.f32 %v912, %v686
        %v997 = vadd.f32 %v912, %v691
        %v998 = vadd.f32 %v912, %v696
        %v999 = vadd.f32 %v912, %v701
        %v1000 = vadd.f32 %v912, %v706
        %v1001 = vadd.f32 %v912, %v711
        %v1002 = vadd.f32 %v912, %v716
        %v1003 = vadd.f32 %v912, %v721
        %v1004 = vadd.f32 %v912, %v726
        %v1005 = vadd.f32 %v916, %v651
        %v1006 = vadd.f32 %v916, %v656
        %v1007 = vadd.f32 %v916, %v661
        %v1008 = vadd.f32 %v916, %v666
        %v1009 = vadd.f32 %v916, %v671
        %v1010 = vadd.f32 %v916, %v676
        %v1011 = vadd.f32 %v916, %v681
        %v1012 = vadd.f32 %v916, %v686
        %v1013 = vadd.f32 %v916, %v691
        %v1014 = vadd.f32 %v916, %v696
        %v1015 = vadd.f32 %v916, %v701
        %v1016 = vadd.f32 %v916, %v706
        %v1017 = vadd.f32 %v916, %v711
        %v1018 = vadd.f32 %v916, %v716
        %v1019 = vadd.f32 %v916, %v721
        %v1020 = vadd.f32 %v916, %v726
        %v1021 = vadd.f32 %v920, %v651
        %v1022 = vadd.f32 %v920, %v656
        %v1023 = vadd.f32 %v920, %v661
        %v1024 = vadd.f32 %v920, %v666
        %v1025 = vadd.f32 %v920, %v671
        %v1026 = vadd.f32 %v920, %v676
        %v1027 = vadd.f32 %v920, %v681
        %v1028 = vadd.f32 %v920, %v686
        %v1029 = vadd.f32 %v920, %v691
        %v1030 = vadd.f32 %v920, %v696
        %v1031 = vadd.f32 %v920, %v701
        %v1032 = vadd.f32 %v920, %v706
        %v1033 = vadd.f32 %v920, %v711
        %v1034 = vadd.f32 %v920, %v716
        %v1035 = vadd.f32 %v920, %v721
        %v1036 = vadd.f32 %v920, %v726
        %v1037 = vadd.f32 %v924, %v651
        %v1038 = vadd.f32 %v924, %v656
        %v1039 = vadd.f32 %v924, %v661
        %v1040 = vadd.f32 %v924, %v666
        %v1041 = vadd.f32 %v924, %v671
        %v1042 = vadd.f32 %v924, %v676
        %v1043 = vadd.f32 %v924, %v681
        %v1044 = vadd.f32 %v924, %v686
        %v1045 = vadd.f32 %v924, %v691
        %v1046 = vadd.f32 %v924, %v696
        %v1047 = vadd.f32 %v924, %v701
        %v1048 = vadd.f32 %v924, %v706
        %v1049 = vadd.f32 %v924, %v711
        %v1050 = vadd.f32 %v924, %v716
        %v1051 = vadd.f32 %v924, %v721
        %v1052 = vadd.f32 %v924, %v726
        %v1053 = vadd.f32 %v928, %v651
        %v1054 = vadd.f32 %v928, %v656
        %v1055 = vadd.f32 %v928, %v661
        %v1056 = vadd.f32 %v928, %v666
        %v1057 = vadd.f32 %v928, %v671
        %v1058 = vadd.f32 %v928, %v676
        %v1059 = vadd.f32 %v928, %v681
        %v1060 = vadd.f32 %v928, %v686
        %v1061 = vadd.f32 %v928, %v691
        %v1062 = vadd.f32 %v928, %v696
        %v1063 = vadd.f32 %v928, %v701
        %v1064 = vadd.f32 %v928, %v706
        %v1065 = vadd.f32 %v928, %v711
        %v1066 = vadd.f32 %v928, %v716
        %v1067 = vadd.f32 %v928, %v721
        %v1068 = vadd.f32 %v928, %v726
        %v1069 = vadd.f32 %v932, %v651
        %v1070 = vadd.f32 %v932, %v656
        %v1071 = vadd.f32 %v932, %v661
        %v1072 = vadd.f32 %v932, %v666
        %v1073 = vadd.f32 %v932, %v671
        %v1074 = vadd.f32 %v932, %v676
        %v1075 = vadd.f32 %v932, %v681
        %v1076 = vadd.f32 %v932, %v686
        %v1077 = vadd.f32 %v932, %v691
        %v1078 = vadd.f32 %v932, %v696
        %v1079 = vadd.f32 %v932, %v701
        %v1080 = vadd.f32 %v932, %v706
        %v1081 = vadd.f32 %v932, %v711
        %v1082 = vadd.f32 %v932, %v716
        %v1083 = vadd.f32 %v932, %v721
        %v1084 = vadd.f32 %v932, %v726
        %v1085 = vadd.f32 %v936, %v651
        %v1086 = vadd.f32 %v936, %v656
        %v1087 = vadd.f32 %v936, %v661
        %v1088 = vadd.f32 %v936, %v666
        %v1089 = vadd.f32 %v936, %v671
        %v1090 = vadd.f32 %v936, %v676
        %v1091 = vadd.f32 %v936, %v681
        %v1092 = vadd.f32 %v936, %v686
        %v1093 = vadd.f32 %v936, %v691
        %v1094 = vadd.f32 %v936, %v696
        %v1095 = vadd.f32 %v936, %v701
        %v1096 = vadd.f32 %v936, %v706
        %v1097 = vadd.f32 %v936, %v711
        %v1098 = vadd.f32 %v936, %v716
        %v1099 = vadd.f32 %v936, %v721
        %v1100 = vadd.f32 %v936, %v726
        %v1101 = vadd.f32 %v940, %v651
        %v1102 = vadd.f32 %v940, %v656
        %v1103 = vadd.f32 %v940, %v661
        %v1104 = vadd.f32 %v940, %v666
        %v1105 = vadd.f32 %v940, %v671
        %v1106 = vadd.f32 %v940, %v676
        %v1107 = vadd.f32 %v940, %v681
        %v1108 = vadd.f32 %v940, %v686
        %v1109 = vadd.f32 %v940, %v691
        %v1110 = vadd.f32 %v940, %v696
        %v1111 = vadd.f32 %v940, %v701
        %v1112 = vadd.f32 %v940, %v706
        %v1113 = vadd.f32 %v940, %v711
        %v1114 = vadd.f32 %v940, %v716
        %v1115 = vadd.f32 %v940, %v721
        %v1116 = vadd.f32 %v940, %v726
        %v1117 = vadd.f32 %v944, %v731
        %v1118 = vadd.f32 %v944, %v736
        %v1119 = vadd.f32 %v944, %v741
        %v1120 = vadd.f32 %v944, %v746
        %v1121 = vadd.f32 %v944, %v751
        %v1122 = vadd.f32 %v944, %v756
        %v1123 = vadd.f32 %v944, %v761
        %v1124 = vadd.f32 %v944, %v766
        %v1125 = vadd.f32 %v944, %v771
        %v1126 = vadd.f32 %v944, %v776
        %v1127 = vadd.f32 %v944, %v781
        %v1128 = vadd.f32 %v944, %v786
        %v1129 = vadd.f32 %v944, %v791
        %v1130 = vadd.f32 %v944, %v796
        %v1131 = vadd.f32 %v944, %v801
        %v1132 = vadd.f32 %v944, %v806
        %v1133 = vadd.f32 %v948, %v731
        %v1134 = vadd.f32 %v948, %v736
        %v1135 = vadd.f32 %v948, %v741
        %v1136 = vadd.f32 %v948, %v746
        %v1137 = vadd.f32 %v948, %v751
        %v1138 = vadd.f32 %v948, %v756
        %v1139 = vadd.f32 %v948, %v761
        %v1140 = vadd.f32 %v948, %v766
        %v1141 = vadd.f32 %v948, %v771
        %v1142 = vadd.f32 %v948, %v776
        %v1143 = vadd.f32 %v948, %v781
        %v1144 = vadd.f32 %v948, %v786
        %v1145 = vadd.f32 %v948, %v791
        %v1146 = vadd.f32 %v948, %v796
        %v1147 = vadd.f32 %v948, %v801
        %v1148 = vadd.f32 %v948, %v806
        %v1149 = vadd.f32 %v952, %v731
        %v1150 = vadd.f32 %v952, %v736
        %v1151 = vadd.f32 %v952, %v741
        %v1152 = vadd.f32 %v952, %v746
        %v1153 = vadd.f32 %v952, %v751
        %v1154 = vadd.f32 %v952, %v756
        %v1155 = vadd.f32 %v952, %v761
        %v1156 = vadd.f32 %v952, %v766
        %v1157 = vadd.f32 %v952, %v771
        %v1158 = vadd.f32 %v952, %v776
        %v1159 = vadd.f32 %v952, %v781
        %v1160 = vadd.f32 %v952, %v786
        %v1161 = vadd.f32 %v952, %v791
        %v1162 = vadd.f32 %v952, %v796
        %v1163 = vadd.f32 %v952, %v801
        %v1164 = vadd.f32 %v952, %v806
        %v1165 = vadd.f32 %v956, %v731
        %v1166 = vadd.f32 %v956, %v736
        %v1167 = vadd.f32 %v956, %v741
        %v1168 = vadd.f32 %v956, %v746
        %v1169 = vadd.f32 %v956, %v751
        %v1170 = vadd.f32 %v956, %v756
        %v1171 = vadd.f32 %v956, %v761
        %v1172 = vadd.f32 %v956, %v766
        %v1173 = vadd.f32 %v956, %v771
        %v1174 = vadd.f32 %v956, %v776
        %v1175 = vadd.f32 %v956, %v781
        %v1176 = vadd.f32 %v956, %v786
        %v1177 = vadd.f32 %v956, %v791
        %v1178 = vadd.f32 %v956, %v796
        %v1179 = vadd.f32 %v956, %v801
        %v1180 = vadd.f32 %v956, %v806
        %v1181 = vadd.f32 %v960, %v731
        %v1182 = vadd.f32 %v960, %v736
        %v1183 = vadd.f32 %v960, %v741
        %v1184 = vadd.f32 %v960, %v746
        %v1185 = vadd.f32 %v960, %v751
        %v1186 = vadd.f32 %v960, %v756
        %v1187 = vadd.f32 %v960, %v761
        %v1188 = vadd.f32 %v960, %v766
        %v1189 = vadd.f32 %v960, %v771
        %v1190 = vadd.f32 %v960, %v776
        %v1191 = vadd.f32 %v960, %v781
        %v1192 = vadd.f32 %v960, %v786
        %v1193 = vadd.f32 %v960, %v791
        %v1194 = vadd.f32 %v960, %v796
        %v1195 = vadd.f32 %v960, %v801
        %v1196 = vadd.f32 %v960, %v806
        %v1197 = vadd.f32 %v964, %v731
        %v1198 = vadd.f32 %v964, %v736
        %v1199 = vadd.f32 %v964, %v741
        %v1200 = vadd.f32 %v964, %v746
        %v1201 = vadd.f32 %v964, %v751
        %v1202 = vadd.f32 %v964, %v756
        %v1203 = vadd.f32 %v964, %v761
        %v1204 = vadd.f32 %v964, %v766
        %v1205 = vadd.f32 %v964, %v771
        %v1206 = vadd.f32 %v964, %v776
        %v1207 = vadd.f32 %v964, %v781
        %v1208 = vadd.f32 %v964, %v786
        %v1209 = vadd.f32 %v964, %v791
        %v1210 = vadd.f32 %v964, %v796
        %v1211 = vadd.f32 %v964, %v801
        %v1212 = vadd.f32 %v964, %v806
        %v1213 = vadd.f32 %v968, %v731
        %v1214 = vadd.f32 %v968, %v736
        %v1215 = vadd.f32 %v968, %v741
        %v1216 = vadd.f32 %v968, %v746
        %v1217 = vadd.f32 %v968, %v751
        %v1218 = vadd.f32 %v968, %v756
        %v1219 = vadd.f32 %v968, %v761
        %v1220 = vadd.f32 %v968, %v766
        %v1221 = vadd.f32 %v968, %v771
        %v1222 = vadd.f32 %v968, %v776
        %v1223 = vadd.f32 %v968, %v781
        %v1224 = vadd.f32 %v968, %v786
        %v1225 = vadd.f32 %v968, %v791
        %v1226 = vadd.f32 %v968, %v796
        %v1227 = vadd.f32 %v968, %v801
        %v1228 = vadd.f32 %v968, %v806
        %v1229 = vadd.f32 %v972, %v731
        %v1230 = vadd.f32 %v972, %v736
        %v1231 = vadd.f32 %v972, %v741
        %v1232 = vadd.f32 %v972, %v746
        %v1233 = vadd.f32 %v972, %v751
        %v1234 = vadd.f32 %v972, %v756
        %v1235 = vadd.f32 %v972, %v761
        %v1236 = vadd.f32 %v972, %v766
        %v1237 = vadd.f32 %v972, %v771
        %v1238 = vadd.f32 %v972, %v776
        %v1239 = vadd.f32 %v972, %v781
        %v1240 = vadd.f32 %v972, %v786
        %v1241 = vadd.f32 %v972, %v791
        %v1242 = vadd.f32 %v972, %v796
        %v1243 = vadd.f32 %v972, %v801
        %v1244 = vadd.f32 %v972, %v806
        %v1245 = vtanh.pop %v989
        %v1246 = vtanh.pop %v990
        %v1247 = vtanh.pop %v991
        %v1248 = vtanh.pop %v992
        %v1249 = vtanh.pop %v993
        %v1250 = vtanh.pop %v994
        %v1251 = vtanh.pop %v995
        %v1252 = vtanh.pop %v996
        %v1253 = vtanh.pop %v997
        %v1254 = vtanh.pop %v998
        %v1255 = vtanh.pop %v999
        %v1256 = vtanh.pop %v1000
        %v1257 = vtanh.pop %v1001
        %v1258 = vtanh.pop %v1002
        %v1259 = vtanh.pop %v1003
        %v1260 = vtanh.pop %v1004
        %v1261 = vtanh.pop %v1005
        %v1262 = vtanh.pop %v1006
        %v1263 = vtanh.pop %v1007
        %v1264 = vtanh.pop %v1008
        %v1265 = vtanh.pop %v1009
        %v1266 = vtanh.pop %v1010
        %v1267 = vtanh.pop %v1011
        %v1268 = vtanh.pop %v1012
        %v1269 = vtanh.pop %v1013
        %v1270 = vtanh.pop %v1014
        %v1271 = vtanh.pop %v1015
        %v1272 = vtanh.pop %v1016
        %v1273 = vtanh.pop %v1017
        %v1274 = vtanh.pop %v1018
        %v1275 = vtanh.pop %v1019
        %v1276 = vtanh.pop %v1020
        %v1277 = vtanh.pop %v1021
        %v1278 = vtanh.pop %v1022
        %v1279 = vtanh.pop %v1023
        %v1280 = vtanh.pop %v1024
        %v1281 = vtanh.pop %v1025
        %v1282 = vtanh.pop %v1026
        %v1283 = vtanh.pop %v1027
        %v1284 = vtanh.pop %v1028
        %v1285 = vtanh.pop %v1029
        %v1286 = vtanh.pop %v1030
        %v1287 = vtanh.pop %v1031
        %v1288 = vtanh.pop %v1032
        %v1289 = vtanh.pop %v1033
        %v1290 = vtanh.pop %v1034
        %v1291 = vtanh.pop %v1035
        %v1292 = vtanh.pop %v1036
        %v1293 = vtanh.pop %v1037
        %v1294 = vtanh.pop %v1038
        %v1295 = vtanh.pop %v1039
        %v1296 = vtanh.pop %v1040
        %v1297 = vtanh.pop %v1041
        %v1298 = vtanh.pop %v1042
        %v1299 = vtanh.pop %v1043
        %v1300 = vtanh.pop %v1044
        %v1301 = vtanh.pop %v1045
        %v1302 = vtanh.pop %v1046
        %v1303 = vtanh.pop %v1047
        %v1304 = vtanh.pop %v1048
        %v1305 = vtanh.pop %v1049
        %v1306 = vtanh.pop %v1050
        %v1307 = vtanh.pop %v1051
        %v1308 = vtanh.pop %v1052
        %v1309 = vtanh.pop %v1053
        %v1310 = vtanh.pop %v1054
        %v1311 = vtanh.pop %v1055
        %v1312 = vtanh.pop %v1056
        %v1313 = vtanh.pop %v1057
        %v1314 = vtanh.pop %v1058
        %v1315 = vtanh.pop %v1059
        %v1316 = vtanh.pop %v1060
        %v1317 = vtanh.pop %v1061
        %v1318 = vtanh.pop %v1062
        %v1319 = vtanh.pop %v1063
        %v1320 = vtanh.pop %v1064
        %v1321 = vtanh.pop %v1065
        %v1322 = vtanh.pop %v1066
        %v1323 = vtanh.pop %v1067
        %v1324 = vtanh.pop %v1068
        %v1325 = vtanh.pop %v1069
        %v1326 = vtanh.pop %v1070
        %v1327 = vtanh.pop %v1071
        %v1328 = vtanh.pop %v1072
        %v1329 = vtanh.pop %v1073
        %v1330 = vtanh.pop %v1074
        %v1331 = vtanh.pop %v1075
        %v1332 = vtanh.pop %v1076
        %v1333 = vtanh.pop %v1077
        %v1334 = vtanh.pop %v1078
        %v1335 = vtanh.pop %v1079
        %v1336 = vtanh.pop %v1080
        %v1337 = vtanh.pop %v1081
        %v1338 = vtanh.pop %v1082
        %v1339 = vtanh.pop %v1083
        %v1340 = vtanh.pop %v1084
        %v1341 = vtanh.pop %v1085
        %v1342 = vtanh.pop %v1086
        %v1343 = vtanh.pop %v1087
        %v1344 = vtanh.pop %v1088
        %v1345 = vtanh.pop %v1089
        %v1346 = vtanh.pop %v1090
        %v1347 = vtanh.pop %v1091
        %v1348 = vtanh.pop %v1092
        %v1349 = vtanh.pop %v1093
        %v1350 = vtanh.pop %v1094
        %v1351 = vtanh.pop %v1095
        %v1352 = vtanh.pop %v1096
        %v1353 = vtanh.pop %v1097
        %v1354 = vtanh.pop %v1098
        %v1355 = vtanh.pop %v1099
        %v1356 = vtanh.pop %v1100
        %v1357 = vtanh.pop %v1101
        %v1358 = vtanh.pop %v1102
        %v1359 = vtanh.pop %v1103
        %v1360 = vtanh.pop %v1104
        %v1361 = vtanh.pop %v1105
        %v1362 = vtanh.pop %v1106
        %v1363 = vtanh.pop %v1107
        %v1364 = vtanh.pop %v1108
        %v1365 = vtanh.pop %v1109
        %v1366 = vtanh.pop %v1110
        %v1367 = vtanh.pop %v1111
        %v1368 = vtanh.pop %v1112
        %v1369 = vtanh.pop %v1113
        %v1370 = vtanh.pop %v1114
        %v1371 = vtanh.pop %v1115
        %v1372 = vtanh.pop %v1116
        %v1373 = vtanh.pop %v1117
        %v1374 = vtanh.pop %v1118
        %v1375 = vtanh.pop %v1119
        %v1376 = vtanh.pop %v1120
        %v1377 = vtanh.pop %v1121
        %v1378 = vtanh.pop %v1122
        %v1379 = vtanh.pop %v1123
        %v1380 = vtanh.pop %v1124
        %v1381 = vtanh.pop %v1125
        %v1382 = vtanh.pop %v1126
        %v1383 = vtanh.pop %v1127
        %v1384 = vtanh.pop %v1128
        %v1385 = vtanh.pop %v1129
        %v1386 = vtanh.pop %v1130
        %v1387 = vtanh.pop %v1131
        %v1388 = vtanh.pop %v1132
        %v1389 = vtanh.pop %v1133
        %v1390 = vtanh.pop %v1134
        %v1391 = vtanh.pop %v1135
        %v1392 = vtanh.pop %v1136
        %v1393 = vtanh.pop %v1137
        %v1394 = vtanh.pop %v1138
        %v1395 = vtanh.pop %v1139
        %v1396 = vtanh.pop %v1140
        %v1397 = vtanh.pop %v1141
        %v1398 = vtanh.pop %v1142
        %v1399 = vtanh.pop %v1143
        %v1400 = vtanh.pop %v1144
        %v1401 = vtanh.pop %v1145
        %v1402 = vtanh.pop %v1146
        %v1403 = vtanh.pop %v1147
        %v1404 = vtanh.pop %v1148
        %v1405 = vtanh.pop %v1149
        %v1406 = vtanh.pop %v1150
        %v1407 = vtanh.pop %v1151
        %v1408 = vtanh.pop %v1152
        %v1409 = vtanh.pop %v1153
        %v1410 = vtanh.pop %v1154
        %v1411 = vtanh.pop %v1155
        %v1412 = vtanh.pop %v1156
        %v1413 = vtanh.pop %v1157
        %v1414 = vtanh.pop %v1158
        %v1415 = vtanh.pop %v1159
        %v1416 = vtanh.pop %v1160
        %v1417 = vtanh.pop %v1161
        %v1418 = vtanh.pop %v1162
        %v1419 = vtanh.pop %v1163
        %v1420 = vtanh.pop %v1164
        %v1421 = vtanh.pop %v1165
        %v1422 = vtanh.pop %v1166
        %v1423 = vtanh.pop %v1167
        %v1424 = vtanh.pop %v1168
        %v1425 = vtanh.pop %v1169
        %v1426 = vtanh.pop %v1170
        %v1427 = vtanh.pop %v1171
        %v1428 = vtanh.pop %v1172
        %v1429 = vtanh.pop %v1173
        %v1430 = vtanh.pop %v1174
        %v1431 = vtanh.pop %v1175
        %v1432 = vtanh.pop %v1176
        %v1433 = vtanh.pop %v1177
        %v1434 = vtanh.pop %v1178
        %v1435 = vtanh.pop %v1179
        %v1436 = vtanh.pop %v1180
        %v1437 = vtanh.pop %v1181
        %v1438 = vtanh.pop %v1182
        %v1439 = vtanh.pop %v1183
        %v1440 = vtanh.pop %v1184
        %v1441 = vtanh.pop %v1185
        %v1442 = vtanh.pop %v1186
        %v1443 = vtanh.pop %v1187
        %v1444 = vtanh.pop %v1188
        %v1445 = vtanh.pop %v1189
        %v1446 = vtanh.pop %v1190
        %v1447 = vtanh.pop %v1191
        %v1448 = vtanh.pop %v1192
        %v1449 = vtanh.pop %v1193
        %v1450 = vtanh.pop %v1194
        %v1451 = vtanh.pop %v1195
        %v1452 = vtanh.pop %v1196
        %v1453 = vtanh.pop %v1197
        %v1454 = vtanh.pop %v1198
        %v1455 = vtanh.pop %v1199
        %v1456 = vtanh.pop %v1200
        %v1457 = vtanh.pop %v1201
        %v1458 = vtanh.pop %v1202
        %v1459 = vtanh.pop %v1203
        %v1460 = vtanh.pop %v1204
        %v1461 = vtanh.pop %v1205
        %v1462 = vtanh.pop %v1206
        %v1463 = vtanh.pop %v1207
        %v1464 = vtanh.pop %v1208
        %v1465 = vtanh.pop %v1209
        %v1466 = vtanh.pop %v1210
        %v1467 = vtanh.pop %v1211
        %v1468 = vtanh.pop %v1212
        %v1469 = vtanh.pop %v1213
        %v1470 = vtanh.pop %v1214
        %v1471 = vtanh.pop %v1215
        %v1472 = vtanh.pop %v1216
        %v1473 = vtanh.pop %v1217
        %v1474 = vtanh.pop %v1218
        %v1475 = vtanh.pop %v1219
        %v1476 = vtanh.pop %v1220
        %v1477 = vtanh.pop %v1221
        %v1478 = vtanh.pop %v1222
        %v1479 = vtanh.pop %v1223
        %v1480 = vtanh.pop %v1224
        %v1481 = vtanh.pop %v1225
        %v1482 = vtanh.pop %v1226
        %v1483 = vtanh.pop %v1227
        %v1484 = vtanh.pop %v1228
        %v1485 = vtanh.pop %v1229
        %v1486 = vtanh.pop %v1230
        %v1487 = vtanh.pop %v1231
        %v1488 = vtanh.pop %v1232
        %v1489 = vtanh.pop %v1233
        %v1490 = vtanh.pop %v1234
        %v1491 = vtanh.pop %v1235
        %v1492 = vtanh.pop %v1236
        %v1493 = vtanh.pop %v1237
        %v1494 = vtanh.pop %v1238
        %v1495 = vtanh.pop %v1239
        %v1496 = vtanh.pop %v1240
        %v1497 = vtanh.pop %v1241
        %v1498 = vtanh.pop %v1242
        %v1499 = vtanh.pop %v1243
        %v1500 = vtanh.pop %v1244
        %v1502 = vlaneseq
        %v1503 = vshrl.u32 %v1502, 7
        %v1504 = vsub.s32 0, %v1503
        %v1505 = vrot.slane %v370, %v1504
        %v1507 = vmul.f32 %v1245, %v1505
        %v1508 = vmul.f32 %v1246, %v1505
        %v1509 = vmul.f32 %v1247, %v1505
        %v1510 = vmul.f32 %v1248, %v1505
        %v1511 = vmul.f32 %v1249, %v1505
        %v1512 = vmul.f32 %v1250, %v1505
        %v1513 = vmul.f32 %v1251, %v1505
        %v1514 = vmul.f32 %v1252, %v1505
        %v1515 = vmul.f32 %v1253, %v1505
        %v1516 = vmul.f32 %v1254, %v1505
        %v1517 = vmul.f32 %v1255, %v1505
        %v1518 = vmul.f32 %v1256, %v1505
        %v1519 = vmul.f32 %v1257, %v1505
        %v1520 = vmul.f32 %v1258, %v1505
        %v1521 = vmul.f32 %v1259, %v1505
        %v1522 = vmul.f32 %v1260, %v1505
        %v1523 = vmul.f32 %v1261, %v1505
        %v1524 = vmul.f32 %v1262, %v1505
        %v1525 = vmul.f32 %v1263, %v1505
        %v1526 = vmul.f32 %v1264, %v1505
        %v1527 = vmul.f32 %v1265, %v1505
        %v1528 = vmul.f32 %v1266, %v1505
        %v1529 = vmul.f32 %v1267, %v1505
        %v1530 = vmul.f32 %v1268, %v1505
        %v1531 = vmul.f32 %v1269, %v1505
        %v1532 = vmul.f32 %v1270, %v1505
        %v1533 = vmul.f32 %v1271, %v1505
        %v1534 = vmul.f32 %v1272, %v1505
        %v1535 = vmul.f32 %v1273, %v1505
        %v1536 = vmul.f32 %v1274, %v1505
        %v1537 = vmul.f32 %v1275, %v1505
        %v1538 = vmul.f32 %v1276, %v1505
        %v1539 = vmul.f32 %v1277, %v1505
        %v1540 = vmul.f32 %v1278, %v1505
        %v1541 = vmul.f32 %v1279, %v1505
        %v1542 = vmul.f32 %v1280, %v1505
        %v1543 = vmul.f32 %v1281, %v1505
        %v1544 = vmul.f32 %v1282, %v1505
        %v1545 = vmul.f32 %v1283, %v1505
        %v1546 = vmul.f32 %v1284, %v1505
        %v1547 = vmul.f32 %v1285, %v1505
        %v1548 = vmul.f32 %v1286, %v1505
        %v1549 = vmul.f32 %v1287, %v1505
        %v1550 = vmul.f32 %v1288, %v1505
        %v1551 = vmul.f32 %v1289, %v1505
        %v1552 = vmul.f32 %v1290, %v1505
        %v1553 = vmul.f32 %v1291, %v1505
        %v1554 = vmul.f32 %v1292, %v1505
        %v1555 = vmul.f32 %v1293, %v1505
        %v1556 = vmul.f32 %v1294, %v1505
        %v1557 = vmul.f32 %v1295, %v1505
        %v1558 = vmul.f32 %v1296, %v1505
        %v1559 = vmul.f32 %v1297, %v1505
        %v1560 = vmul.f32 %v1298, %v1505
        %v1561 = vmul.f32 %v1299, %v1505
        %v1562 = vmul.f32 %v1300, %v1505
        %v1563 = vmul.f32 %v1301, %v1505
        %v1564 = vmul.f32 %v1302, %v1505
        %v1565 = vmul.f32 %v1303, %v1505
        %v1566 = vmul.f32 %v1304, %v1505
        %v1567 = vmul.f32 %v1305, %v1505
        %v1568 = vmul.f32 %v1306, %v1505
        %v1569 = vmul.f32 %v1307, %v1505
        %v1570 = vmul.f32 %v1308, %v1505
        %v1571 = vmul.f32 %v1309, %v1505
        %v1572 = vmul.f32 %v1310, %v1505
        %v1573 = vmul.f32 %v1311, %v1505
        %v1574 = vmul.f32 %v1312, %v1505
        %v1575 = vmul.f32 %v1313, %v1505
        %v1576 = vmul.f32 %v1314, %v1505
        %v1577 = vmul.f32 %v1315, %v1505
        %v1578 = vmul.f32 %v1316, %v1505
        %v1579 = vmul.f32 %v1317, %v1505
        %v1580 = vmul.f32 %v1318, %v1505
        %v1581 = vmul.f32 %v1319, %v1505
        %v1582 = vmul.f32 %v1320, %v1505
        %v1583 = vmul.f32 %v1321, %v1505
        %v1584 = vmul.f32 %v1322, %v1505
        %v1585 = vmul.f32 %v1323, %v1505
        %v1586 = vmul.f32 %v1324, %v1505
        %v1587 = vmul.f32 %v1325, %v1505
        %v1588 = vmul.f32 %v1326, %v1505
        %v1589 = vmul.f32 %v1327, %v1505
        %v1590 = vmul.f32 %v1328, %v1505
        %v1591 = vmul.f32 %v1329, %v1505
        %v1592 = vmul.f32 %v1330, %v1505
        %v1593 = vmul.f32 %v1331, %v1505
        %v1594 = vmul.f32 %v1332, %v1505
        %v1595 = vmul.f32 %v1333, %v1505
        %v1596 = vmul.f32 %v1334, %v1505
        %v1597 = vmul.f32 %v1335, %v1505
        %v1598 = vmul.f32 %v1336, %v1505
        %v1599 = vmul.f32 %v1337, %v1505
        %v1600 = vmul.f32 %v1338, %v1505
        %v1601 = vmul.f32 %v1339, %v1505
        %v1602 = vmul.f32 %v1340, %v1505
        %v1603 = vmul.f32 %v1341, %v1505
        %v1604 = vmul.f32 %v1342, %v1505
        %v1605 = vmul.f32 %v1343, %v1505
        %v1606 = vmul.f32 %v1344, %v1505
        %v1607 = vmul.f32 %v1345, %v1505
        %v1608 = vmul.f32 %v1346, %v1505
        %v1609 = vmul.f32 %v1347, %v1505
        %v1610 = vmul.f32 %v1348, %v1505
        %v1611 = vmul.f32 %v1349, %v1505
        %v1612 = vmul.f32 %v1350, %v1505
        %v1613 = vmul.f32 %v1351, %v1505
        %v1614 = vmul.f32 %v1352, %v1505
        %v1615 = vmul.f32 %v1353, %v1505
        %v1616 = vmul.f32 %v1354, %v1505
        %v1617 = vmul.f32 %v1355, %v1505
        %v1618 = vmul.f32 %v1356, %v1505
        %v1619 = vmul.f32 %v1357, %v1505
        %v1620 = vmul.f32 %v1358, %v1505
        %v1621 = vmul.f32 %v1359, %v1505
        %v1622 = vmul.f32 %v1360, %v1505
        %v1623 = vmul.f32 %v1361, %v1505
        %v1624 = vmul.f32 %v1362, %v1505
        %v1625 = vmul.f32 %v1363, %v1505
        %v1626 = vmul.f32 %v1364, %v1505
        %v1627 = vmul.f32 %v1365, %v1505
        %v1628 = vmul.f32 %v1366, %v1505
        %v1629 = vmul.f32 %v1367, %v1505
        %v1630 = vmul.f32 %v1368, %v1505
        %v1631 = vmul.f32 %v1369, %v1505
        %v1632 = vmul.f32 %v1370, %v1505
        %v1633 = vmul.f32 %v1371, %v1505
        %v1634 = vmul.f32 %v1372, %v1505
        %v1635 = vmul.f32 %v1373, %v1505
        %v1636 = vmul.f32 %v1374, %v1505
        %v1637 = vmul.f32 %v1375, %v1505
        %v1638 = vmul.f32 %v1376, %v1505
        %v1639 = vmul.f32 %v1377, %v1505
        %v1640 = vmul.f32 %v1378, %v1505
        %v1641 = vmul.f32 %v1379, %v1505
        %v1642 = vmul.f32 %v1380, %v1505
        %v1643 = vmul.f32 %v1381, %v1505
        %v1644 = vmul.f32 %v1382, %v1505
        %v1645 = vmul.f32 %v1383, %v1505
        %v1646 = vmul.f32 %v1384, %v1505
        %v1647 = vmul.f32 %v1385, %v1505
        %v1648 = vmul.f32 %v1386, %v1505
        %v1649 = vmul.f32 %v1387, %v1505
        %v1650 = vmul.f32 %v1388, %v1505
        %v1651 = vmul.f32 %v1389, %v1505
        %v1652 = vmul.f32 %v1390, %v1505
        %v1653 = vmul.f32 %v1391, %v1505
        %v1654 = vmul.f32 %v1392, %v1505
        %v1655 = vmul.f32 %v1393, %v1505
        %v1656 = vmul.f32 %v1394, %v1505
        %v1657 = vmul.f32 %v1395, %v1505
        %v1658 = vmul.f32 %v1396, %v1505
        %v1659 = vmul.f32 %v1397, %v1505
        %v1660 = vmul.f32 %v1398, %v1505
        %v1661 = vmul.f32 %v1399, %v1505
        %v1662 = vmul.f32 %v1400, %v1505
        %v1663 = vmul.f32 %v1401, %v1505
        %v1664 = vmul.f32 %v1402, %v1505
        %v1665 = vmul.f32 %v1403, %v1505
        %v1666 = vmul.f32 %v1404, %v1505
        %v1667 = vmul.f32 %v1405, %v1505
        %v1668 = vmul.f32 %v1406, %v1505
        %v1669 = vmul.f32 %v1407, %v1505
        %v1670 = vmul.f32 %v1408, %v1505
        %v1671 = vmul.f32 %v1409, %v1505
        %v1672 = vmul.f32 %v1410, %v1505
        %v1673 = vmul.f32 %v1411, %v1505
        %v1674 = vmul.f32 %v1412, %v1505
        %v1675 = vmul.f32 %v1413, %v1505
        %v1676 = vmul.f32 %v1414, %v1505
        %v1677 = vmul.f32 %v1415, %v1505
        %v1678 = vmul.f32 %v1416, %v1505
        %v1679 = vmul.f32 %v1417, %v1505
        %v1680 = vmul.f32 %v1418, %v1505
        %v1681 = vmul.f32 %v1419, %v1505
        %v1682 = vmul.f32 %v1420, %v1505
        %v1683 = vmul.f32 %v1421, %v1505
        %v1684 = vmul.f32 %v1422, %v1505
        %v1685 = vmul.f32 %v1423, %v1505
        %v1686 = vmul.f32 %v1424, %v1505
        %v1687 = vmul.f32 %v1425, %v1505
        %v1688 = vmul.f32 %v1426, %v1505
        %v1689 = vmul.f32 %v1427, %v1505
        %v1690 = vmul.f32 %v1428, %v1505
        %v1691 = vmul.f32 %v1429, %v1505
        %v1692 = vmul.f32 %v1430, %v1505
        %v1693 = vmul.f32 %v1431, %v1505
        %v1694 = vmul.f32 %v1432, %v1505
        %v1695 = vmul.f32 %v1433, %v1505
        %v1696 = vmul.f32 %v1434, %v1505
        %v1697 = vmul.f32 %v1435, %v1505
        %v1698 = vmul.f32 %v1436, %v1505
        %v1699 = vmul.f32 %v1437, %v1505
        %v1700 = vmul.f32 %v1438, %v1505
        %v1701 = vmul.f32 %v1439, %v1505
        %v1702 = vmul.f32 %v1440, %v1505
        %v1703 = vmul.f32 %v1441, %v1505
        %v1704 = vmul.f32 %v1442, %v1505
        %v1705 = vmul.f32 %v1443, %v1505
        %v1706 = vmul.f32 %v1444, %v1505
        %v1707 = vmul.f32 %v1445, %v1505
        %v1708 = vmul.f32 %v1446, %v1505
        %v1709 = vmul.f32 %v1447, %v1505
        %v1710 = vmul.f32 %v1448, %v1505
        %v1711 = vmul.f32 %v1449, %v1505
        %v1712 = vmul.f32 %v1450, %v1505
        %v1713 = vmul.f32 %v1451, %v1505
        %v1714 = vmul.f32 %v1452, %v1505
        %v1715 = vmul.f32 %v1453, %v1505
        %v1716 = vmul.f32 %v1454, %v1505
        %v1717 = vmul.f32 %v1455, %v1505
        %v1718 = vmul.f32 %v1456, %v1505
        %v1719 = vmul.f32 %v1457, %v1505
        %v1720 = vmul.f32 %v1458, %v1505
        %v1721 = vmul.f32 %v1459, %v1505
        %v1722 = vmul.f32 %v1460, %v1505
        %v1723 = vmul.f32 %v1461, %v1505
        %v1724 = vmul.f32 %v1462, %v1505
        %v1725 = vmul.f32 %v1463, %v1505
        %v1726 = vmul.f32 %v1464, %v1505
        %v1727 = vmul.f32 %v1465, %v1505
        %v1728 = vmul.f32 %v1466, %v1505
        %v1729 = vmul.f32 %v1467, %v1505
        %v1730 = vmul.f32 %v1468, %v1505
        %v1731 = vmul.f32 %v1469, %v1505
        %v1732 = vmul.f32 %v1470, %v1505
        %v1733 = vmul.f32 %v1471, %v1505
        %v1734 = vmul.f32 %v1472, %v1505
        %v1735 = vmul.f32 %v1473, %v1505
        %v1736 = vmul.f32 %v1474, %v1505
        %v1737 = vmul.f32 %v1475, %v1505
        %v1738 = vmul.f32 %v1476, %v1505
        %v1739 = vmul.f32 %v1477, %v1505
        %v1740 = vmul.f32 %v1478, %v1505
        %v1741 = vmul.f32 %v1479, %v1505
        %v1742 = vmul.f32 %v1480, %v1505
        %v1743 = vmul.f32 %v1481, %v1505
        %v1744 = vmul.f32 %v1482, %v1505
        %v1745 = vmul.f32 %v1483, %v1505
        %v1746 = vmul.f32 %v1484, %v1505
        %v1747 = vmul.f32 %v1485, %v1505
        %v1748 = vmul.f32 %v1486, %v1505
        %v1749 = vmul.f32 %v1487, %v1505
        %v1750 = vmul.f32 %v1488, %v1505
        %v1751 = vmul.f32 %v1489, %v1505
        %v1752 = vmul.f32 %v1490, %v1505
        %v1753 = vmul.f32 %v1491, %v1505
        %v1754 = vmul.f32 %v1492, %v1505
        %v1755 = vmul.f32 %v1493, %v1505
        %v1756 = vmul.f32 %v1494, %v1505
        %v1757 = vmul.f32 %v1495, %v1505
        %v1758 = vmul.f32 %v1496, %v1505
        %v1759 = vmul.f32 %v1497, %v1505
        %v1760 = vmul.f32 %v1498, %v1505
        %v1761 = vmul.f32 %v1499, %v1505
        %v1762 = vmul.f32 %v1500, %v1505
        %v1763 = vsel %vm373, %v1507, 0.0
        %1764 = vadd.xlane.f32.xlu0 %v1763
        %v1765 = vpop.xlane.xlu0 %1764
        %v1766 = vsel %vm373, %v1508, 0.0
        %1767 = vadd.xlane.f32.xlu0 %v1766
        %v1768 = vpop.xlane.xlu0 %1767
        %v1769 = vsel %vm373, %v1509, 0.0
        %1770 = vadd.xlane.f32.xlu0 %v1769
        %v1771 = vpop.xlane.xlu0 %1770
        %v1772 = vsel %vm373, %v1510, 0.0
        %1773 = vadd.xlane.f32.xlu0 %v1772
        %v1774 = vpop.xlane.xlu0 %1773
        %v1775 = vsel %vm373, %v1511, 0.0
        %1776 = vadd.xlane.f32.xlu0 %v1775
        %v1777 = vpop.xlane.xlu0 %1776
        %v1778 = vsel %vm373, %v1512, 0.0
        %1779 = vadd.xlane.f32.xlu0 %v1778
        %v1780 = vpop.xlane.xlu0 %1779
        %v1781 = vsel %vm373, %v1513, 0.0
        %1782 = vadd.xlane.f32.xlu0 %v1781
        %v1783 = vpop.xlane.xlu0 %1782
        %v1784 = vsel %vm373, %v1514, 0.0
        %1785 = vadd.xlane.f32.xlu0 %v1784
        %v1786 = vpop.xlane.xlu0 %1785
        %v1787 = vsel %vm373, %v1515, 0.0
        %1788 = vadd.xlane.f32.xlu0 %v1787
        %v1789 = vpop.xlane.xlu0 %1788
        %v1790 = vsel %vm373, %v1516, 0.0
        %1791 = vadd.xlane.f32.xlu0 %v1790
        %v1792 = vpop.xlane.xlu0 %1791
        %v1793 = vsel %vm373, %v1517, 0.0
        %1794 = vadd.xlane.f32.xlu0 %v1793
        %v1795 = vpop.xlane.xlu0 %1794
        %v1796 = vsel %vm373, %v1518, 0.0
        %1797 = vadd.xlane.f32.xlu0 %v1796
        %v1798 = vpop.xlane.xlu0 %1797
        %v1799 = vsel %vm373, %v1519, 0.0
        %1800 = vadd.xlane.f32.xlu0 %v1799
        %v1801 = vpop.xlane.xlu0 %1800
        %v1802 = vsel %vm373, %v1520, 0.0
        %1803 = vadd.xlane.f32.xlu0 %v1802
        %v1804 = vpop.xlane.xlu0 %1803
        %v1805 = vsel %vm373, %v1521, 0.0
        %1806 = vadd.xlane.f32.xlu0 %v1805
        %v1807 = vpop.xlane.xlu0 %1806
        %v1808 = vsel %vm373, %v1522, 0.0
        %1809 = vadd.xlane.f32.xlu0 %v1808
        %v1810 = vpop.xlane.xlu0 %1809
        %v1811 = vsel %vm373, %v1523, 0.0
        %1812 = vadd.xlane.f32.xlu0 %v1811
        %v1813 = vpop.xlane.xlu0 %1812
        %v1814 = vsel %vm373, %v1524, 0.0
        %1815 = vadd.xlane.f32.xlu0 %v1814
        %v1816 = vpop.xlane.xlu0 %1815
        %v1817 = vsel %vm373, %v1525, 0.0
        %1818 = vadd.xlane.f32.xlu0 %v1817
        %v1819 = vpop.xlane.xlu0 %1818
        %v1820 = vsel %vm373, %v1526, 0.0
        %1821 = vadd.xlane.f32.xlu0 %v1820
        %v1822 = vpop.xlane.xlu0 %1821
        %v1823 = vsel %vm373, %v1527, 0.0
        %1824 = vadd.xlane.f32.xlu0 %v1823
        %v1825 = vpop.xlane.xlu0 %1824
        %v1826 = vsel %vm373, %v1528, 0.0
        %1827 = vadd.xlane.f32.xlu0 %v1826
        %v1828 = vpop.xlane.xlu0 %1827
        %v1829 = vsel %vm373, %v1529, 0.0
        %1830 = vadd.xlane.f32.xlu0 %v1829
        %v1831 = vpop.xlane.xlu0 %1830
        %v1832 = vsel %vm373, %v1530, 0.0
        %1833 = vadd.xlane.f32.xlu0 %v1832
        %v1834 = vpop.xlane.xlu0 %1833
        %v1835 = vsel %vm373, %v1531, 0.0
        %1836 = vadd.xlane.f32.xlu0 %v1835
        %v1837 = vpop.xlane.xlu0 %1836
        %v1838 = vsel %vm373, %v1532, 0.0
        %1839 = vadd.xlane.f32.xlu0 %v1838
        %v1840 = vpop.xlane.xlu0 %1839
        %v1841 = vsel %vm373, %v1533, 0.0
        %1842 = vadd.xlane.f32.xlu0 %v1841
        %v1843 = vpop.xlane.xlu0 %1842
        %v1844 = vsel %vm373, %v1534, 0.0
        %1845 = vadd.xlane.f32.xlu0 %v1844
        %v1846 = vpop.xlane.xlu0 %1845
        %v1847 = vsel %vm373, %v1535, 0.0
        %1848 = vadd.xlane.f32.xlu0 %v1847
        %v1849 = vpop.xlane.xlu0 %1848
        %v1850 = vsel %vm373, %v1536, 0.0
        %1851 = vadd.xlane.f32.xlu0 %v1850
        %v1852 = vpop.xlane.xlu0 %1851
        %v1853 = vsel %vm373, %v1537, 0.0
        %1854 = vadd.xlane.f32.xlu0 %v1853
        %v1855 = vpop.xlane.xlu0 %1854
        %v1856 = vsel %vm373, %v1538, 0.0
        %1857 = vadd.xlane.f32.xlu0 %v1856
        %v1858 = vpop.xlane.xlu0 %1857
        %v1859 = vsel %vm373, %v1539, 0.0
        %1860 = vadd.xlane.f32.xlu0 %v1859
        %v1861 = vpop.xlane.xlu0 %1860
        %v1862 = vsel %vm373, %v1540, 0.0
        %1863 = vadd.xlane.f32.xlu0 %v1862
        %v1864 = vpop.xlane.xlu0 %1863
        %v1865 = vsel %vm373, %v1541, 0.0
        %1866 = vadd.xlane.f32.xlu0 %v1865
        %v1867 = vpop.xlane.xlu0 %1866
        %v1868 = vsel %vm373, %v1542, 0.0
        %1869 = vadd.xlane.f32.xlu0 %v1868
        %v1870 = vpop.xlane.xlu0 %1869
        %v1871 = vsel %vm373, %v1543, 0.0
        %1872 = vadd.xlane.f32.xlu0 %v1871
        %v1873 = vpop.xlane.xlu0 %1872
        %v1874 = vsel %vm373, %v1544, 0.0
        %1875 = vadd.xlane.f32.xlu0 %v1874
        %v1876 = vpop.xlane.xlu0 %1875
        %v1877 = vsel %vm373, %v1545, 0.0
        %1878 = vadd.xlane.f32.xlu0 %v1877
        %v1879 = vpop.xlane.xlu0 %1878
        %v1880 = vsel %vm373, %v1546, 0.0
        %1881 = vadd.xlane.f32.xlu0 %v1880
        %v1882 = vpop.xlane.xlu0 %1881
        %v1883 = vsel %vm373, %v1547, 0.0
        %1884 = vadd.xlane.f32.xlu0 %v1883
        %v1885 = vpop.xlane.xlu0 %1884
        %v1886 = vsel %vm373, %v1548, 0.0
        %1887 = vadd.xlane.f32.xlu0 %v1886
        %v1888 = vpop.xlane.xlu0 %1887
        %v1889 = vsel %vm373, %v1549, 0.0
        %1890 = vadd.xlane.f32.xlu0 %v1889
        %v1891 = vpop.xlane.xlu0 %1890
        %v1892 = vsel %vm373, %v1550, 0.0
        %1893 = vadd.xlane.f32.xlu0 %v1892
        %v1894 = vpop.xlane.xlu0 %1893
        %v1895 = vsel %vm373, %v1551, 0.0
        %1896 = vadd.xlane.f32.xlu0 %v1895
        %v1897 = vpop.xlane.xlu0 %1896
        %v1898 = vsel %vm373, %v1552, 0.0
        %1899 = vadd.xlane.f32.xlu0 %v1898
        %v1900 = vpop.xlane.xlu0 %1899
        %v1901 = vsel %vm373, %v1553, 0.0
        %1902 = vadd.xlane.f32.xlu0 %v1901
        %v1903 = vpop.xlane.xlu0 %1902
        %v1904 = vsel %vm373, %v1554, 0.0
        %1905 = vadd.xlane.f32.xlu0 %v1904
        %v1906 = vpop.xlane.xlu0 %1905
        %v1907 = vsel %vm373, %v1555, 0.0
        %1908 = vadd.xlane.f32.xlu0 %v1907
        %v1909 = vpop.xlane.xlu0 %1908
        %v1910 = vsel %vm373, %v1556, 0.0
        %1911 = vadd.xlane.f32.xlu0 %v1910
        %v1912 = vpop.xlane.xlu0 %1911
        %v1913 = vsel %vm373, %v1557, 0.0
        %1914 = vadd.xlane.f32.xlu0 %v1913
        %v1915 = vpop.xlane.xlu0 %1914
        %v1916 = vsel %vm373, %v1558, 0.0
        %1917 = vadd.xlane.f32.xlu0 %v1916
        %v1918 = vpop.xlane.xlu0 %1917
        %v1919 = vsel %vm373, %v1559, 0.0
        %1920 = vadd.xlane.f32.xlu0 %v1919
        %v1921 = vpop.xlane.xlu0 %1920
        %v1922 = vsel %vm373, %v1560, 0.0
        %1923 = vadd.xlane.f32.xlu0 %v1922
        %v1924 = vpop.xlane.xlu0 %1923
        %v1925 = vsel %vm373, %v1561, 0.0
        %1926 = vadd.xlane.f32.xlu0 %v1925
        %v1927 = vpop.xlane.xlu0 %1926
        %v1928 = vsel %vm373, %v1562, 0.0
        %1929 = vadd.xlane.f32.xlu0 %v1928
        %v1930 = vpop.xlane.xlu0 %1929
        %v1931 = vsel %vm373, %v1563, 0.0
        %1932 = vadd.xlane.f32.xlu0 %v1931
        %v1933 = vpop.xlane.xlu0 %1932
        %v1934 = vsel %vm373, %v1564, 0.0
        %1935 = vadd.xlane.f32.xlu0 %v1934
        %v1936 = vpop.xlane.xlu0 %1935
        %v1937 = vsel %vm373, %v1565, 0.0
        %1938 = vadd.xlane.f32.xlu0 %v1937
        %v1939 = vpop.xlane.xlu0 %1938
        %v1940 = vsel %vm373, %v1566, 0.0
        %1941 = vadd.xlane.f32.xlu0 %v1940
        %v1942 = vpop.xlane.xlu0 %1941
        %v1943 = vsel %vm373, %v1567, 0.0
        %1944 = vadd.xlane.f32.xlu0 %v1943
        %v1945 = vpop.xlane.xlu0 %1944
        %v1946 = vsel %vm373, %v1568, 0.0
        %1947 = vadd.xlane.f32.xlu0 %v1946
        %v1948 = vpop.xlane.xlu0 %1947
        %v1949 = vsel %vm373, %v1569, 0.0
        %1950 = vadd.xlane.f32.xlu0 %v1949
        %v1951 = vpop.xlane.xlu0 %1950
        %v1952 = vsel %vm373, %v1570, 0.0
        %1953 = vadd.xlane.f32.xlu0 %v1952
        %v1954 = vpop.xlane.xlu0 %1953
        %v1955 = vsel %vm373, %v1571, 0.0
        %1956 = vadd.xlane.f32.xlu0 %v1955
        %v1957 = vpop.xlane.xlu0 %1956
        %v1958 = vsel %vm373, %v1572, 0.0
        %1959 = vadd.xlane.f32.xlu0 %v1958
        %v1960 = vpop.xlane.xlu0 %1959
        %v1961 = vsel %vm373, %v1573, 0.0
        %1962 = vadd.xlane.f32.xlu0 %v1961
        %v1963 = vpop.xlane.xlu0 %1962
        %v1964 = vsel %vm373, %v1574, 0.0
        %1965 = vadd.xlane.f32.xlu0 %v1964
        %v1966 = vpop.xlane.xlu0 %1965
        %v1967 = vsel %vm373, %v1575, 0.0
        %1968 = vadd.xlane.f32.xlu0 %v1967
        %v1969 = vpop.xlane.xlu0 %1968
        %v1970 = vsel %vm373, %v1576, 0.0
        %1971 = vadd.xlane.f32.xlu0 %v1970
        %v1972 = vpop.xlane.xlu0 %1971
        %v1973 = vsel %vm373, %v1577, 0.0
        %1974 = vadd.xlane.f32.xlu0 %v1973
        %v1975 = vpop.xlane.xlu0 %1974
        %v1976 = vsel %vm373, %v1578, 0.0
        %1977 = vadd.xlane.f32.xlu0 %v1976
        %v1978 = vpop.xlane.xlu0 %1977
        %v1979 = vsel %vm373, %v1579, 0.0
        %1980 = vadd.xlane.f32.xlu0 %v1979
        %v1981 = vpop.xlane.xlu0 %1980
        %v1982 = vsel %vm373, %v1580, 0.0
        %1983 = vadd.xlane.f32.xlu0 %v1982
        %v1984 = vpop.xlane.xlu0 %1983
        %v1985 = vsel %vm373, %v1581, 0.0
        %1986 = vadd.xlane.f32.xlu0 %v1985
        %v1987 = vpop.xlane.xlu0 %1986
        %v1988 = vsel %vm373, %v1582, 0.0
        %1989 = vadd.xlane.f32.xlu0 %v1988
        %v1990 = vpop.xlane.xlu0 %1989
        %v1991 = vsel %vm373, %v1583, 0.0
        %1992 = vadd.xlane.f32.xlu0 %v1991
        %v1993 = vpop.xlane.xlu0 %1992
        %v1994 = vsel %vm373, %v1584, 0.0
        %1995 = vadd.xlane.f32.xlu0 %v1994
        %v1996 = vpop.xlane.xlu0 %1995
        %v1997 = vsel %vm373, %v1585, 0.0
        %1998 = vadd.xlane.f32.xlu0 %v1997
        %v1999 = vpop.xlane.xlu0 %1998
        %v2000 = vsel %vm373, %v1586, 0.0
        %2001 = vadd.xlane.f32.xlu0 %v2000
        %v2002 = vpop.xlane.xlu0 %2001
        %v2003 = vsel %vm373, %v1587, 0.0
        %2004 = vadd.xlane.f32.xlu0 %v2003
        %v2005 = vpop.xlane.xlu0 %2004
        %v2006 = vsel %vm373, %v1588, 0.0
        %2007 = vadd.xlane.f32.xlu0 %v2006
        %v2008 = vpop.xlane.xlu0 %2007
        %v2009 = vsel %vm373, %v1589, 0.0
        %2010 = vadd.xlane.f32.xlu0 %v2009
        %v2011 = vpop.xlane.xlu0 %2010
        %v2012 = vsel %vm373, %v1590, 0.0
        %2013 = vadd.xlane.f32.xlu0 %v2012
        %v2014 = vpop.xlane.xlu0 %2013
        %v2015 = vsel %vm373, %v1591, 0.0
        %2016 = vadd.xlane.f32.xlu0 %v2015
        %v2017 = vpop.xlane.xlu0 %2016
        %v2018 = vsel %vm373, %v1592, 0.0
        %2019 = vadd.xlane.f32.xlu0 %v2018
        %v2020 = vpop.xlane.xlu0 %2019
        %v2021 = vsel %vm373, %v1593, 0.0
        %2022 = vadd.xlane.f32.xlu0 %v2021
        %v2023 = vpop.xlane.xlu0 %2022
        %v2024 = vsel %vm373, %v1594, 0.0
        %2025 = vadd.xlane.f32.xlu0 %v2024
        %v2026 = vpop.xlane.xlu0 %2025
        %v2027 = vsel %vm373, %v1595, 0.0
        %2028 = vadd.xlane.f32.xlu0 %v2027
        %v2029 = vpop.xlane.xlu0 %2028
        %v2030 = vsel %vm373, %v1596, 0.0
        %2031 = vadd.xlane.f32.xlu0 %v2030
        %v2032 = vpop.xlane.xlu0 %2031
        %v2033 = vsel %vm373, %v1597, 0.0
        %2034 = vadd.xlane.f32.xlu0 %v2033
        %v2035 = vpop.xlane.xlu0 %2034
        %v2036 = vsel %vm373, %v1598, 0.0
        %2037 = vadd.xlane.f32.xlu0 %v2036
        %v2038 = vpop.xlane.xlu0 %2037
        %v2039 = vsel %vm373, %v1599, 0.0
        %2040 = vadd.xlane.f32.xlu0 %v2039
        %v2041 = vpop.xlane.xlu0 %2040
        %v2042 = vsel %vm373, %v1600, 0.0
        %2043 = vadd.xlane.f32.xlu0 %v2042
        %v2044 = vpop.xlane.xlu0 %2043
        %v2045 = vsel %vm373, %v1601, 0.0
        %2046 = vadd.xlane.f32.xlu0 %v2045
        %v2047 = vpop.xlane.xlu0 %2046
        %v2048 = vsel %vm373, %v1602, 0.0
        %2049 = vadd.xlane.f32.xlu0 %v2048
        %v2050 = vpop.xlane.xlu0 %2049
        %v2051 = vsel %vm373, %v1603, 0.0
        %2052 = vadd.xlane.f32.xlu0 %v2051
        %v2053 = vpop.xlane.xlu0 %2052
        %v2054 = vsel %vm373, %v1604, 0.0
        %2055 = vadd.xlane.f32.xlu0 %v2054
        %v2056 = vpop.xlane.xlu0 %2055
        %v2057 = vsel %vm373, %v1605, 0.0
        %2058 = vadd.xlane.f32.xlu0 %v2057
        %v2059 = vpop.xlane.xlu0 %2058
        %v2060 = vsel %vm373, %v1606, 0.0
        %2061 = vadd.xlane.f32.xlu0 %v2060
        %v2062 = vpop.xlane.xlu0 %2061
        %v2063 = vsel %vm373, %v1607, 0.0
        %2064 = vadd.xlane.f32.xlu0 %v2063
        %v2065 = vpop.xlane.xlu0 %2064
        %v2066 = vsel %vm373, %v1608, 0.0
        %2067 = vadd.xlane.f32.xlu0 %v2066
        %v2068 = vpop.xlane.xlu0 %2067
        %v2069 = vsel %vm373, %v1609, 0.0
        %2070 = vadd.xlane.f32.xlu0 %v2069
        %v2071 = vpop.xlane.xlu0 %2070
        %v2072 = vsel %vm373, %v1610, 0.0
        %2073 = vadd.xlane.f32.xlu0 %v2072
        %v2074 = vpop.xlane.xlu0 %2073
        %v2075 = vsel %vm373, %v1611, 0.0
        %2076 = vadd.xlane.f32.xlu0 %v2075
        %v2077 = vpop.xlane.xlu0 %2076
        %v2078 = vsel %vm373, %v1612, 0.0
        %2079 = vadd.xlane.f32.xlu0 %v2078
        %v2080 = vpop.xlane.xlu0 %2079
        %v2081 = vsel %vm373, %v1613, 0.0
        %2082 = vadd.xlane.f32.xlu0 %v2081
        %v2083 = vpop.xlane.xlu0 %2082
        %v2084 = vsel %vm373, %v1614, 0.0
        %2085 = vadd.xlane.f32.xlu0 %v2084
        %v2086 = vpop.xlane.xlu0 %2085
        %v2087 = vsel %vm373, %v1615, 0.0
        %2088 = vadd.xlane.f32.xlu0 %v2087
        %v2089 = vpop.xlane.xlu0 %2088
        %v2090 = vsel %vm373, %v1616, 0.0
        %2091 = vadd.xlane.f32.xlu0 %v2090
        %v2092 = vpop.xlane.xlu0 %2091
        %v2093 = vsel %vm373, %v1617, 0.0
        %2094 = vadd.xlane.f32.xlu0 %v2093
        %v2095 = vpop.xlane.xlu0 %2094
        %v2096 = vsel %vm373, %v1618, 0.0
        %2097 = vadd.xlane.f32.xlu0 %v2096
        %v2098 = vpop.xlane.xlu0 %2097
        %v2099 = vsel %vm373, %v1619, 0.0
        %2100 = vadd.xlane.f32.xlu0 %v2099
        %v2101 = vpop.xlane.xlu0 %2100
        %v2102 = vsel %vm373, %v1620, 0.0
        %2103 = vadd.xlane.f32.xlu0 %v2102
        %v2104 = vpop.xlane.xlu0 %2103
        %v2105 = vsel %vm373, %v1621, 0.0
        %2106 = vadd.xlane.f32.xlu0 %v2105
        %v2107 = vpop.xlane.xlu0 %2106
        %v2108 = vsel %vm373, %v1622, 0.0
        %2109 = vadd.xlane.f32.xlu0 %v2108
        %v2110 = vpop.xlane.xlu0 %2109
        %v2111 = vsel %vm373, %v1623, 0.0
        %2112 = vadd.xlane.f32.xlu0 %v2111
        %v2113 = vpop.xlane.xlu0 %2112
        %v2114 = vsel %vm373, %v1624, 0.0
        %2115 = vadd.xlane.f32.xlu0 %v2114
        %v2116 = vpop.xlane.xlu0 %2115
        %v2117 = vsel %vm373, %v1625, 0.0
        %2118 = vadd.xlane.f32.xlu0 %v2117
        %v2119 = vpop.xlane.xlu0 %2118
        %v2120 = vsel %vm373, %v1626, 0.0
        %2121 = vadd.xlane.f32.xlu0 %v2120
        %v2122 = vpop.xlane.xlu0 %2121
        %v2123 = vsel %vm373, %v1627, 0.0
        %2124 = vadd.xlane.f32.xlu0 %v2123
        %v2125 = vpop.xlane.xlu0 %2124
        %v2126 = vsel %vm373, %v1628, 0.0
        %2127 = vadd.xlane.f32.xlu0 %v2126
        %v2128 = vpop.xlane.xlu0 %2127
        %v2129 = vsel %vm373, %v1629, 0.0
        %2130 = vadd.xlane.f32.xlu0 %v2129
        %v2131 = vpop.xlane.xlu0 %2130
        %v2132 = vsel %vm373, %v1630, 0.0
        %2133 = vadd.xlane.f32.xlu0 %v2132
        %v2134 = vpop.xlane.xlu0 %2133
        %v2135 = vsel %vm373, %v1631, 0.0
        %2136 = vadd.xlane.f32.xlu0 %v2135
        %v2137 = vpop.xlane.xlu0 %2136
        %v2138 = vsel %vm373, %v1632, 0.0
        %2139 = vadd.xlane.f32.xlu0 %v2138
        %v2140 = vpop.xlane.xlu0 %2139
        %v2141 = vsel %vm373, %v1633, 0.0
        %2142 = vadd.xlane.f32.xlu0 %v2141
        %v2143 = vpop.xlane.xlu0 %2142
        %v2144 = vsel %vm373, %v1634, 0.0
        %2145 = vadd.xlane.f32.xlu0 %v2144
        %v2146 = vpop.xlane.xlu0 %2145
        %v2147 = vsel %vm373, %v1635, 0.0
        %2148 = vadd.xlane.f32.xlu0 %v2147
        %v2149 = vpop.xlane.xlu0 %2148
        %v2150 = vsel %vm373, %v1636, 0.0
        %2151 = vadd.xlane.f32.xlu0 %v2150
        %v2152 = vpop.xlane.xlu0 %2151
        %v2153 = vsel %vm373, %v1637, 0.0
        %2154 = vadd.xlane.f32.xlu0 %v2153
        %v2155 = vpop.xlane.xlu0 %2154
        %v2156 = vsel %vm373, %v1638, 0.0
        %2157 = vadd.xlane.f32.xlu0 %v2156
        %v2158 = vpop.xlane.xlu0 %2157
        %v2159 = vsel %vm373, %v1639, 0.0
        %2160 = vadd.xlane.f32.xlu0 %v2159
        %v2161 = vpop.xlane.xlu0 %2160
        %v2162 = vsel %vm373, %v1640, 0.0
        %2163 = vadd.xlane.f32.xlu0 %v2162
        %v2164 = vpop.xlane.xlu0 %2163
        %v2165 = vsel %vm373, %v1641, 0.0
        %2166 = vadd.xlane.f32.xlu0 %v2165
        %v2167 = vpop.xlane.xlu0 %2166
        %v2168 = vsel %vm373, %v1642, 0.0
        %2169 = vadd.xlane.f32.xlu0 %v2168
        %v2170 = vpop.xlane.xlu0 %2169
        %v2171 = vsel %vm373, %v1643, 0.0
        %2172 = vadd.xlane.f32.xlu0 %v2171
        %v2173 = vpop.xlane.xlu0 %2172
        %v2174 = vsel %vm373, %v1644, 0.0
        %2175 = vadd.xlane.f32.xlu0 %v2174
        %v2176 = vpop.xlane.xlu0 %2175
        %v2177 = vsel %vm373, %v1645, 0.0
        %2178 = vadd.xlane.f32.xlu0 %v2177
        %v2179 = vpop.xlane.xlu0 %2178
        %v2180 = vsel %vm373, %v1646, 0.0
        %2181 = vadd.xlane.f32.xlu0 %v2180
        %v2182 = vpop.xlane.xlu0 %2181
        %v2183 = vsel %vm373, %v1647, 0.0
        %2184 = vadd.xlane.f32.xlu0 %v2183
        %v2185 = vpop.xlane.xlu0 %2184
        %v2186 = vsel %vm373, %v1648, 0.0
        %2187 = vadd.xlane.f32.xlu0 %v2186
        %v2188 = vpop.xlane.xlu0 %2187
        %v2189 = vsel %vm373, %v1649, 0.0
        %2190 = vadd.xlane.f32.xlu0 %v2189
        %v2191 = vpop.xlane.xlu0 %2190
        %v2192 = vsel %vm373, %v1650, 0.0
        %2193 = vadd.xlane.f32.xlu0 %v2192
        %v2194 = vpop.xlane.xlu0 %2193
        %v2195 = vsel %vm373, %v1651, 0.0
        %2196 = vadd.xlane.f32.xlu0 %v2195
        %v2197 = vpop.xlane.xlu0 %2196
        %v2198 = vsel %vm373, %v1652, 0.0
        %2199 = vadd.xlane.f32.xlu0 %v2198
        %v2200 = vpop.xlane.xlu0 %2199
        %v2201 = vsel %vm373, %v1653, 0.0
        %2202 = vadd.xlane.f32.xlu0 %v2201
        %v2203 = vpop.xlane.xlu0 %2202
        %v2204 = vsel %vm373, %v1654, 0.0
        %2205 = vadd.xlane.f32.xlu0 %v2204
        %v2206 = vpop.xlane.xlu0 %2205
        %v2207 = vsel %vm373, %v1655, 0.0
        %2208 = vadd.xlane.f32.xlu0 %v2207
        %v2209 = vpop.xlane.xlu0 %2208
        %v2210 = vsel %vm373, %v1656, 0.0
        %2211 = vadd.xlane.f32.xlu0 %v2210
        %v2212 = vpop.xlane.xlu0 %2211
        %v2213 = vsel %vm373, %v1657, 0.0
        %2214 = vadd.xlane.f32.xlu0 %v2213
        %v2215 = vpop.xlane.xlu0 %2214
        %v2216 = vsel %vm373, %v1658, 0.0
        %2217 = vadd.xlane.f32.xlu0 %v2216
        %v2218 = vpop.xlane.xlu0 %2217
        %v2219 = vsel %vm373, %v1659, 0.0
        %2220 = vadd.xlane.f32.xlu0 %v2219
        %v2221 = vpop.xlane.xlu0 %2220
        %v2222 = vsel %vm373, %v1660, 0.0
        %2223 = vadd.xlane.f32.xlu0 %v2222
        %v2224 = vpop.xlane.xlu0 %2223
        %v2225 = vsel %vm373, %v1661, 0.0
        %2226 = vadd.xlane.f32.xlu0 %v2225
        %v2227 = vpop.xlane.xlu0 %2226
        %v2228 = vsel %vm373, %v1662, 0.0
        %2229 = vadd.xlane.f32.xlu0 %v2228
        %v2230 = vpop.xlane.xlu0 %2229
        %v2231 = vsel %vm373, %v1663, 0.0
        %2232 = vadd.xlane.f32.xlu0 %v2231
        %v2233 = vpop.xlane.xlu0 %2232
        %v2234 = vsel %vm373, %v1664, 0.0
        %2235 = vadd.xlane.f32.xlu0 %v2234
        %v2236 = vpop.xlane.xlu0 %2235
        %v2237 = vsel %vm373, %v1665, 0.0
        %2238 = vadd.xlane.f32.xlu0 %v2237
        %v2239 = vpop.xlane.xlu0 %2238
        %v2240 = vsel %vm373, %v1666, 0.0
        %2241 = vadd.xlane.f32.xlu0 %v2240
        %v2242 = vpop.xlane.xlu0 %2241
        %v2243 = vsel %vm373, %v1667, 0.0
        %2244 = vadd.xlane.f32.xlu0 %v2243
        %v2245 = vpop.xlane.xlu0 %2244
        %v2246 = vsel %vm373, %v1668, 0.0
        %2247 = vadd.xlane.f32.xlu0 %v2246
        %v2248 = vpop.xlane.xlu0 %2247
        %v2249 = vsel %vm373, %v1669, 0.0
        %2250 = vadd.xlane.f32.xlu0 %v2249
        %v2251 = vpop.xlane.xlu0 %2250
        %v2252 = vsel %vm373, %v1670, 0.0
        %2253 = vadd.xlane.f32.xlu0 %v2252
        %v2254 = vpop.xlane.xlu0 %2253
        %v2255 = vsel %vm373, %v1671, 0.0
        %2256 = vadd.xlane.f32.xlu0 %v2255
        %v2257 = vpop.xlane.xlu0 %2256
        %v2258 = vsel %vm373, %v1672, 0.0
        %2259 = vadd.xlane.f32.xlu0 %v2258
        %v2260 = vpop.xlane.xlu0 %2259
        %v2261 = vsel %vm373, %v1673, 0.0
        %2262 = vadd.xlane.f32.xlu0 %v2261
        %v2263 = vpop.xlane.xlu0 %2262
        %v2264 = vsel %vm373, %v1674, 0.0
        %2265 = vadd.xlane.f32.xlu0 %v2264
        %v2266 = vpop.xlane.xlu0 %2265
        %v2267 = vsel %vm373, %v1675, 0.0
        %2268 = vadd.xlane.f32.xlu0 %v2267
        %v2269 = vpop.xlane.xlu0 %2268
        %v2270 = vsel %vm373, %v1676, 0.0
        %2271 = vadd.xlane.f32.xlu0 %v2270
        %v2272 = vpop.xlane.xlu0 %2271
        %v2273 = vsel %vm373, %v1677, 0.0
        %2274 = vadd.xlane.f32.xlu0 %v2273
        %v2275 = vpop.xlane.xlu0 %2274
        %v2276 = vsel %vm373, %v1678, 0.0
        %2277 = vadd.xlane.f32.xlu0 %v2276
        %v2278 = vpop.xlane.xlu0 %2277
        %v2279 = vsel %vm373, %v1679, 0.0
        %2280 = vadd.xlane.f32.xlu0 %v2279
        %v2281 = vpop.xlane.xlu0 %2280
        %v2282 = vsel %vm373, %v1680, 0.0
        %2283 = vadd.xlane.f32.xlu0 %v2282
        %v2284 = vpop.xlane.xlu0 %2283
        %v2285 = vsel %vm373, %v1681, 0.0
        %2286 = vadd.xlane.f32.xlu0 %v2285
        %v2287 = vpop.xlane.xlu0 %2286
        %v2288 = vsel %vm373, %v1682, 0.0
        %2289 = vadd.xlane.f32.xlu0 %v2288
        %v2290 = vpop.xlane.xlu0 %2289
        %v2291 = vsel %vm373, %v1683, 0.0
        %2292 = vadd.xlane.f32.xlu0 %v2291
        %v2293 = vpop.xlane.xlu0 %2292
        %v2294 = vsel %vm373, %v1684, 0.0
        %2295 = vadd.xlane.f32.xlu0 %v2294
        %v2296 = vpop.xlane.xlu0 %2295
        %v2297 = vsel %vm373, %v1685, 0.0
        %2298 = vadd.xlane.f32.xlu0 %v2297
        %v2299 = vpop.xlane.xlu0 %2298
        %v2300 = vsel %vm373, %v1686, 0.0
        %2301 = vadd.xlane.f32.xlu0 %v2300
        %v2302 = vpop.xlane.xlu0 %2301
        %v2303 = vsel %vm373, %v1687, 0.0
        %2304 = vadd.xlane.f32.xlu0 %v2303
        %v2305 = vpop.xlane.xlu0 %2304
        %v2306 = vsel %vm373, %v1688, 0.0
        %2307 = vadd.xlane.f32.xlu0 %v2306
        %v2308 = vpop.xlane.xlu0 %2307
        %v2309 = vsel %vm373, %v1689, 0.0
        %2310 = vadd.xlane.f32.xlu0 %v2309
        %v2311 = vpop.xlane.xlu0 %2310
        %v2312 = vsel %vm373, %v1690, 0.0
        %2313 = vadd.xlane.f32.xlu0 %v2312
        %v2314 = vpop.xlane.xlu0 %2313
        %v2315 = vsel %vm373, %v1691, 0.0
        %2316 = vadd.xlane.f32.xlu0 %v2315
        %v2317 = vpop.xlane.xlu0 %2316
        %v2318 = vsel %vm373, %v1692, 0.0
        %2319 = vadd.xlane.f32.xlu0 %v2318
        %v2320 = vpop.xlane.xlu0 %2319
        %v2321 = vsel %vm373, %v1693, 0.0
        %2322 = vadd.xlane.f32.xlu0 %v2321
        %v2323 = vpop.xlane.xlu0 %2322
        %v2324 = vsel %vm373, %v1694, 0.0
        %2325 = vadd.xlane.f32.xlu0 %v2324
        %v2326 = vpop.xlane.xlu0 %2325
        %v2327 = vsel %vm373, %v1695, 0.0
        %2328 = vadd.xlane.f32.xlu0 %v2327
        %v2329 = vpop.xlane.xlu0 %2328
        %v2330 = vsel %vm373, %v1696, 0.0
        %2331 = vadd.xlane.f32.xlu0 %v2330
        %v2332 = vpop.xlane.xlu0 %2331
        %v2333 = vsel %vm373, %v1697, 0.0
        %2334 = vadd.xlane.f32.xlu0 %v2333
        %v2335 = vpop.xlane.xlu0 %2334
        %v2336 = vsel %vm373, %v1698, 0.0
        %2337 = vadd.xlane.f32.xlu0 %v2336
        %v2338 = vpop.xlane.xlu0 %2337
        %v2339 = vsel %vm373, %v1699, 0.0
        %2340 = vadd.xlane.f32.xlu0 %v2339
        %v2341 = vpop.xlane.xlu0 %2340
        %v2342 = vsel %vm373, %v1700, 0.0
        %2343 = vadd.xlane.f32.xlu0 %v2342
        %v2344 = vpop.xlane.xlu0 %2343
        %v2345 = vsel %vm373, %v1701, 0.0
        %2346 = vadd.xlane.f32.xlu0 %v2345
        %v2347 = vpop.xlane.xlu0 %2346
        %v2348 = vsel %vm373, %v1702, 0.0
        %2349 = vadd.xlane.f32.xlu0 %v2348
        %v2350 = vpop.xlane.xlu0 %2349
        %v2351 = vsel %vm373, %v1703, 0.0
        %2352 = vadd.xlane.f32.xlu0 %v2351
        %v2353 = vpop.xlane.xlu0 %2352
        %v2354 = vsel %vm373, %v1704, 0.0
        %2355 = vadd.xlane.f32.xlu0 %v2354
        %v2356 = vpop.xlane.xlu0 %2355
        %v2357 = vsel %vm373, %v1705, 0.0
        %2358 = vadd.xlane.f32.xlu0 %v2357
        %v2359 = vpop.xlane.xlu0 %2358
        %v2360 = vsel %vm373, %v1706, 0.0
        %2361 = vadd.xlane.f32.xlu0 %v2360
        %v2362 = vpop.xlane.xlu0 %2361
        %v2363 = vsel %vm373, %v1707, 0.0
        %2364 = vadd.xlane.f32.xlu0 %v2363
        %v2365 = vpop.xlane.xlu0 %2364
        %v2366 = vsel %vm373, %v1708, 0.0
        %2367 = vadd.xlane.f32.xlu0 %v2366
        %v2368 = vpop.xlane.xlu0 %2367
        %v2369 = vsel %vm373, %v1709, 0.0
        %2370 = vadd.xlane.f32.xlu0 %v2369
        %v2371 = vpop.xlane.xlu0 %2370
        %v2372 = vsel %vm373, %v1710, 0.0
        %2373 = vadd.xlane.f32.xlu0 %v2372
        %v2374 = vpop.xlane.xlu0 %2373
        %v2375 = vsel %vm373, %v1711, 0.0
        %2376 = vadd.xlane.f32.xlu0 %v2375
        %v2377 = vpop.xlane.xlu0 %2376
        %v2378 = vsel %vm373, %v1712, 0.0
        %2379 = vadd.xlane.f32.xlu0 %v2378
        %v2380 = vpop.xlane.xlu0 %2379
        %v2381 = vsel %vm373, %v1713, 0.0
        %2382 = vadd.xlane.f32.xlu0 %v2381
        %v2383 = vpop.xlane.xlu0 %2382
        %v2384 = vsel %vm373, %v1714, 0.0
        %2385 = vadd.xlane.f32.xlu0 %v2384
        %v2386 = vpop.xlane.xlu0 %2385
        %v2387 = vsel %vm373, %v1715, 0.0
        %2388 = vadd.xlane.f32.xlu0 %v2387
        %v2389 = vpop.xlane.xlu0 %2388
        %v2390 = vsel %vm373, %v1716, 0.0
        %2391 = vadd.xlane.f32.xlu0 %v2390
        %v2392 = vpop.xlane.xlu0 %2391
        %v2393 = vsel %vm373, %v1717, 0.0
        %2394 = vadd.xlane.f32.xlu0 %v2393
        %v2395 = vpop.xlane.xlu0 %2394
        %v2396 = vsel %vm373, %v1718, 0.0
        %2397 = vadd.xlane.f32.xlu0 %v2396
        %v2398 = vpop.xlane.xlu0 %2397
        %v2399 = vsel %vm373, %v1719, 0.0
        %2400 = vadd.xlane.f32.xlu0 %v2399
        %v2401 = vpop.xlane.xlu0 %2400
        %v2402 = vsel %vm373, %v1720, 0.0
        %2403 = vadd.xlane.f32.xlu0 %v2402
        %v2404 = vpop.xlane.xlu0 %2403
        %v2405 = vsel %vm373, %v1721, 0.0
        %2406 = vadd.xlane.f32.xlu0 %v2405
        %v2407 = vpop.xlane.xlu0 %2406
        %v2408 = vsel %vm373, %v1722, 0.0
        %2409 = vadd.xlane.f32.xlu0 %v2408
        %v2410 = vpop.xlane.xlu0 %2409
        %v2411 = vsel %vm373, %v1723, 0.0
        %2412 = vadd.xlane.f32.xlu0 %v2411
        %v2413 = vpop.xlane.xlu0 %2412
        %v2414 = vsel %vm373, %v1724, 0.0
        %2415 = vadd.xlane.f32.xlu0 %v2414
        %v2416 = vpop.xlane.xlu0 %2415
        %v2417 = vsel %vm373, %v1725, 0.0
        %2418 = vadd.xlane.f32.xlu0 %v2417
        %v2419 = vpop.xlane.xlu0 %2418
        %v2420 = vsel %vm373, %v1726, 0.0
        %2421 = vadd.xlane.f32.xlu0 %v2420
        %v2422 = vpop.xlane.xlu0 %2421
        %v2423 = vsel %vm373, %v1727, 0.0
        %2424 = vadd.xlane.f32.xlu0 %v2423
        %v2425 = vpop.xlane.xlu0 %2424
        %v2426 = vsel %vm373, %v1728, 0.0
        %2427 = vadd.xlane.f32.xlu0 %v2426
        %v2428 = vpop.xlane.xlu0 %2427
        %v2429 = vsel %vm373, %v1729, 0.0
        %2430 = vadd.xlane.f32.xlu0 %v2429
        %v2431 = vpop.xlane.xlu0 %2430
        %v2432 = vsel %vm373, %v1730, 0.0
        %2433 = vadd.xlane.f32.xlu0 %v2432
        %v2434 = vpop.xlane.xlu0 %2433
        %v2435 = vsel %vm373, %v1731, 0.0
        %2436 = vadd.xlane.f32.xlu0 %v2435
        %v2437 = vpop.xlane.xlu0 %2436
        %v2438 = vsel %vm373, %v1732, 0.0
        %2439 = vadd.xlane.f32.xlu0 %v2438
        %v2440 = vpop.xlane.xlu0 %2439
        %v2441 = vsel %vm373, %v1733, 0.0
        %2442 = vadd.xlane.f32.xlu0 %v2441
        %v2443 = vpop.xlane.xlu0 %2442
        %v2444 = vsel %vm373, %v1734, 0.0
        %2445 = vadd.xlane.f32.xlu0 %v2444
        %v2446 = vpop.xlane.xlu0 %2445
        %v2447 = vsel %vm373, %v1735, 0.0
        %2448 = vadd.xlane.f32.xlu0 %v2447
        %v2449 = vpop.xlane.xlu0 %2448
        %v2450 = vsel %vm373, %v1736, 0.0
        %2451 = vadd.xlane.f32.xlu0 %v2450
        %v2452 = vpop.xlane.xlu0 %2451
        %v2453 = vsel %vm373, %v1737, 0.0
        %2454 = vadd.xlane.f32.xlu0 %v2453
        %v2455 = vpop.xlane.xlu0 %2454
        %v2456 = vsel %vm373, %v1738, 0.0
        %2457 = vadd.xlane.f32.xlu0 %v2456
        %v2458 = vpop.xlane.xlu0 %2457
        %v2459 = vsel %vm373, %v1739, 0.0
        %2460 = vadd.xlane.f32.xlu0 %v2459
        %v2461 = vpop.xlane.xlu0 %2460
        %v2462 = vsel %vm373, %v1740, 0.0
        %2463 = vadd.xlane.f32.xlu0 %v2462
        %v2464 = vpop.xlane.xlu0 %2463
        %v2465 = vsel %vm373, %v1741, 0.0
        %2466 = vadd.xlane.f32.xlu0 %v2465
        %v2467 = vpop.xlane.xlu0 %2466
        %v2468 = vsel %vm373, %v1742, 0.0
        %2469 = vadd.xlane.f32.xlu0 %v2468
        %v2470 = vpop.xlane.xlu0 %2469
        %v2471 = vsel %vm373, %v1743, 0.0
        %2472 = vadd.xlane.f32.xlu0 %v2471
        %v2473 = vpop.xlane.xlu0 %2472
        %v2474 = vsel %vm373, %v1744, 0.0
        %2475 = vadd.xlane.f32.xlu0 %v2474
        %v2476 = vpop.xlane.xlu0 %2475
        %v2477 = vsel %vm373, %v1745, 0.0
        %2478 = vadd.xlane.f32.xlu0 %v2477
        %v2479 = vpop.xlane.xlu0 %2478
        %v2480 = vsel %vm373, %v1746, 0.0
        %2481 = vadd.xlane.f32.xlu0 %v2480
        %v2482 = vpop.xlane.xlu0 %2481
        %v2483 = vsel %vm373, %v1747, 0.0
        %2484 = vadd.xlane.f32.xlu0 %v2483
        %v2485 = vpop.xlane.xlu0 %2484
        %v2486 = vsel %vm373, %v1748, 0.0
        %2487 = vadd.xlane.f32.xlu0 %v2486
        %v2488 = vpop.xlane.xlu0 %2487
        %v2489 = vsel %vm373, %v1749, 0.0
        %2490 = vadd.xlane.f32.xlu0 %v2489
        %v2491 = vpop.xlane.xlu0 %2490
        %v2492 = vsel %vm373, %v1750, 0.0
        %2493 = vadd.xlane.f32.xlu0 %v2492
        %v2494 = vpop.xlane.xlu0 %2493
        %v2495 = vsel %vm373, %v1751, 0.0
        %2496 = vadd.xlane.f32.xlu0 %v2495
        %v2497 = vpop.xlane.xlu0 %2496
        %v2498 = vsel %vm373, %v1752, 0.0
        %2499 = vadd.xlane.f32.xlu0 %v2498
        %v2500 = vpop.xlane.xlu0 %2499
        %v2501 = vsel %vm373, %v1753, 0.0
        %2502 = vadd.xlane.f32.xlu0 %v2501
        %v2503 = vpop.xlane.xlu0 %2502
        %v2504 = vsel %vm373, %v1754, 0.0
        %2505 = vadd.xlane.f32.xlu0 %v2504
        %v2506 = vpop.xlane.xlu0 %2505
        %v2507 = vsel %vm373, %v1755, 0.0
        %2508 = vadd.xlane.f32.xlu0 %v2507
        %v2509 = vpop.xlane.xlu0 %2508
        %v2510 = vsel %vm373, %v1756, 0.0
        %2511 = vadd.xlane.f32.xlu0 %v2510
        %v2512 = vpop.xlane.xlu0 %2511
        %v2513 = vsel %vm373, %v1757, 0.0
        %2514 = vadd.xlane.f32.xlu0 %v2513
        %v2515 = vpop.xlane.xlu0 %2514
        %v2516 = vsel %vm373, %v1758, 0.0
        %2517 = vadd.xlane.f32.xlu0 %v2516
        %v2518 = vpop.xlane.xlu0 %2517
        %v2519 = vsel %vm373, %v1759, 0.0
        %2520 = vadd.xlane.f32.xlu0 %v2519
        %v2521 = vpop.xlane.xlu0 %2520
        %v2522 = vsel %vm373, %v1760, 0.0
        %2523 = vadd.xlane.f32.xlu0 %v2522
        %v2524 = vpop.xlane.xlu0 %2523
        %v2525 = vsel %vm373, %v1761, 0.0
        %2526 = vadd.xlane.f32.xlu0 %v2525
        %v2527 = vpop.xlane.xlu0 %2526
        %v2528 = vsel %vm373, %v1762, 0.0
        %2529 = vadd.xlane.f32.xlu0 %v2528
        %v2530 = vpop.xlane.xlu0 %2529
        %v2787 = vlaneseq
        %v2788 = vand.u32 %v2787, 127
        %v2789 = vlaneseq
        %v2790 = vshrl.u32 %v2789, 7
        %v2791 = vsub.s32 %v2788, %v2790
        %v2792 = vrot.slane %v1765, %v2791
        %v2793 = vadd.s32 %v2788, 4294967288
        %v2794 = vlaneseq
        %v2795 = vshrl.u32 %v2794, 7
        %v2796 = vsub.s32 %v2793, %v2795
        %v2797 = vrot.slane %v1768, %v2796
        %vm2798 = vcmask 130112
        %v2799 = vsel %vm2798, %v2797, %v2792
        %v2800 = vadd.s32 %v2788, 4294967280
        %v2801 = vlaneseq
        %v2802 = vshrl.u32 %v2801, 7
        %v2803 = vsub.s32 %v2800, %v2802
        %v2804 = vrot.slane %v1771, %v2803
        %vm2805 = vcmask 195712
        %v2806 = vsel %vm2805, %v2804, %v2799
        %v2807 = vadd.s32 %v2788, 4294967272
        %v2808 = vlaneseq
        %v2809 = vshrl.u32 %v2808, 7
        %v2810 = vsub.s32 %v2807, %v2809
        %v2811 = vrot.slane %v1774, %v2810
        %vm2812 = vcmask 261312
        %v2813 = vsel %vm2812, %v2811, %v2806
        %v2814 = vadd.s32 %v2788, 4294967264
        %v2815 = vlaneseq
        %v2816 = vshrl.u32 %v2815, 7
        %v2817 = vsub.s32 %v2814, %v2816
        %v2818 = vrot.slane %v1777, %v2817
        %vm2819 = vcmask 326912
        %v2820 = vsel %vm2819, %v2818, %v2813
        %v2821 = vadd.s32 %v2788, 4294967256
        %v2822 = vlaneseq
        %v2823 = vshrl.u32 %v2822, 7
        %v2824 = vsub.s32 %v2821, %v2823
        %v2825 = vrot.slane %v1780, %v2824
        %vm2826 = vcmask 392512
        %v2827 = vsel %vm2826, %v2825, %v2820
        %v2828 = vadd.s32 %v2788, 4294967248
        %v2829 = vlaneseq
        %v2830 = vshrl.u32 %v2829, 7
        %v2831 = vsub.s32 %v2828, %v2830
        %v2832 = vrot.slane %v1783, %v2831
        %vm2833 = vcmask 458112
        %v2834 = vsel %vm2833, %v2832, %v2827
        %v2835 = vadd.s32 %v2788, 4294967240
        %v2836 = vlaneseq
        %v2837 = vshrl.u32 %v2836, 7
        %v2838 = vsub.s32 %v2835, %v2837
        %v2839 = vrot.slane %v1786, %v2838
        %vm2840 = vcmask 523712
        %v2841 = vsel %vm2840, %v2839, %v2834
        %v2842 = vadd.s32 %v2788, 4294967232
        %v2843 = vlaneseq
        %v2844 = vshrl.u32 %v2843, 7
        %v2845 = vsub.s32 %v2842, %v2844
        %v2846 = vrot.slane %v1789, %v2845
        %vm2847 = vcmask 589312
        %v2848 = vsel %vm2847, %v2846, %v2841
        %v2849 = vadd.s32 %v2788, 4294967224
        %v2850 = vlaneseq
        %v2851 = vshrl.u32 %v2850, 7
        %v2852 = vsub.s32 %v2849, %v2851
        %v2853 = vrot.slane %v1792, %v2852
        %vm2854 = vcmask 654912
        %v2855 = vsel %vm2854, %v2853, %v2848
        %v2856 = vadd.s32 %v2788, 4294967216
        %v2857 = vlaneseq
        %v2858 = vshrl.u32 %v2857, 7
        %v2859 = vsub.s32 %v2856, %v2858
        %v2860 = vrot.slane %v1795, %v2859
        %vm2861 = vcmask 720512
        %v2862 = vsel %vm2861, %v2860, %v2855
        %v2863 = vadd.s32 %v2788, 4294967208
        %v2864 = vlaneseq
        %v2865 = vshrl.u32 %v2864, 7
        %v2866 = vsub.s32 %v2863, %v2865
        %v2867 = vrot.slane %v1798, %v2866
        %vm2868 = vcmask 786112
        %v2869 = vsel %vm2868, %v2867, %v2862
        %v2870 = vadd.s32 %v2788, 4294967200
        %v2871 = vlaneseq
        %v2872 = vshrl.u32 %v2871, 7
        %v2873 = vsub.s32 %v2870, %v2872
        %v2874 = vrot.slane %v1801, %v2873
        %vm2875 = vcmask 851712
        %v2876 = vsel %vm2875, %v2874, %v2869
        %v2877 = vadd.s32 %v2788, 4294967192
        %v2878 = vlaneseq
        %v2879 = vshrl.u32 %v2878, 7
        %v2880 = vsub.s32 %v2877, %v2879
        %v2881 = vrot.slane %v1804, %v2880
        %vm2882 = vcmask 917312
        %v2883 = vsel %vm2882, %v2881, %v2876
        %v2884 = vadd.s32 %v2788, 4294967184
        %v2885 = vlaneseq
        %v2886 = vshrl.u32 %v2885, 7
        %v2887 = vsub.s32 %v2884, %v2886
        %v2888 = vrot.slane %v1807, %v2887
        %vm2889 = vcmask 982912
        %v2890 = vsel %vm2889, %v2888, %v2883
        %v2891 = vadd.s32 %v2788, 4294967176
        %v2892 = vlaneseq
        %v2893 = vshrl.u32 %v2892, 7
        %v2894 = vsub.s32 %v2891, %v2893
        %v2895 = vrot.slane %v1810, %v2894
        %vm2896 = vcmask 1048512
        %v2897 = vsel %vm2896, %v2895, %v2890
        %v2898 = vlaneseq
        %v2899 = vshrl.u32 %v2898, 7
        %v2900 = vsub.s32 %v2788, %v2899
        %v2901 = vrot.slane %v1813, %v2900
        %v2902 = vlaneseq
        %v2903 = vshrl.u32 %v2902, 7
        %v2904 = vsub.s32 %v2793, %v2903
        %v2905 = vrot.slane %v1816, %v2904
        %v2906 = vsel %vm2798, %v2905, %v2901
        %v2907 = vlaneseq
        %v2908 = vshrl.u32 %v2907, 7
        %v2909 = vsub.s32 %v2800, %v2908
        %v2910 = vrot.slane %v1819, %v2909
        %v2911 = vsel %vm2805, %v2910, %v2906
        %v2912 = vlaneseq
        %v2913 = vshrl.u32 %v2912, 7
        %v2914 = vsub.s32 %v2807, %v2913
        %v2915 = vrot.slane %v1822, %v2914
        %v2916 = vsel %vm2812, %v2915, %v2911
        %v2917 = vlaneseq
        %v2918 = vshrl.u32 %v2917, 7
        %v2919 = vsub.s32 %v2814, %v2918
        %v2920 = vrot.slane %v1825, %v2919
        %v2921 = vsel %vm2819, %v2920, %v2916
        %v2922 = vlaneseq
        %v2923 = vshrl.u32 %v2922, 7
        %v2924 = vsub.s32 %v2821, %v2923
        %v2925 = vrot.slane %v1828, %v2924
        %v2926 = vsel %vm2826, %v2925, %v2921
        %v2927 = vlaneseq
        %v2928 = vshrl.u32 %v2927, 7
        %v2929 = vsub.s32 %v2828, %v2928
        %v2930 = vrot.slane %v1831, %v2929
        %v2931 = vsel %vm2833, %v2930, %v2926
        %v2932 = vlaneseq
        %v2933 = vshrl.u32 %v2932, 7
        %v2934 = vsub.s32 %v2835, %v2933
        %v2935 = vrot.slane %v1834, %v2934
        %v2936 = vsel %vm2840, %v2935, %v2931
        %v2937 = vlaneseq
        %v2938 = vshrl.u32 %v2937, 7
        %v2939 = vsub.s32 %v2842, %v2938
        %v2940 = vrot.slane %v1837, %v2939
        %v2941 = vsel %vm2847, %v2940, %v2936
        %v2942 = vlaneseq
        %v2943 = vshrl.u32 %v2942, 7
        %v2944 = vsub.s32 %v2849, %v2943
        %v2945 = vrot.slane %v1840, %v2944
        %v2946 = vsel %vm2854, %v2945, %v2941
        %v2947 = vlaneseq
        %v2948 = vshrl.u32 %v2947, 7
        %v2949 = vsub.s32 %v2856, %v2948
        %v2950 = vrot.slane %v1843, %v2949
        %v2951 = vsel %vm2861, %v2950, %v2946
        %v2952 = vlaneseq
        %v2953 = vshrl.u32 %v2952, 7
        %v2954 = vsub.s32 %v2863, %v2953
        %v2955 = vrot.slane %v1846, %v2954
        %v2956 = vsel %vm2868, %v2955, %v2951
        %v2957 = vlaneseq
        %v2958 = vshrl.u32 %v2957, 7
        %v2959 = vsub.s32 %v2870, %v2958
        %v2960 = vrot.slane %v1849, %v2959
        %v2961 = vsel %vm2875, %v2960, %v2956
        %v2962 = vlaneseq
        %v2963 = vshrl.u32 %v2962, 7
        %v2964 = vsub.s32 %v2877, %v2963
        %v2965 = vrot.slane %v1852, %v2964
        %v2966 = vsel %vm2882, %v2965, %v2961
        %v2967 = vlaneseq
        %v2968 = vshrl.u32 %v2967, 7
        %v2969 = vsub.s32 %v2884, %v2968
        %v2970 = vrot.slane %v1855, %v2969
        %v2971 = vsel %vm2889, %v2970, %v2966
        %v2972 = vlaneseq
        %v2973 = vshrl.u32 %v2972, 7
        %v2974 = vsub.s32 %v2891, %v2973
        %v2975 = vrot.slane %v1858, %v2974
        %v2976 = vsel %vm2896, %v2975, %v2971
        %v2977 = vlaneseq
        %v2978 = vshrl.u32 %v2977, 7
        %v2979 = vsub.s32 %v2788, %v2978
        %v2980 = vrot.slane %v1861, %v2979
        %v2981 = vlaneseq
        %v2982 = vshrl.u32 %v2981, 7
        %v2983 = vsub.s32 %v2793, %v2982
        %v2984 = vrot.slane %v1864, %v2983
        %v2985 = vsel %vm2798, %v2984, %v2980
        %v2986 = vlaneseq
        %v2987 = vshrl.u32 %v2986, 7
        %v2988 = vsub.s32 %v2800, %v2987
        %v2989 = vrot.slane %v1867, %v2988
        %v2990 = vsel %vm2805, %v2989, %v2985
        %v2991 = vlaneseq
        %v2992 = vshrl.u32 %v2991, 7
        %v2993 = vsub.s32 %v2807, %v2992
        %v2994 = vrot.slane %v1870, %v2993
        %v2995 = vsel %vm2812, %v2994, %v2990
        %v2996 = vlaneseq
        %v2997 = vshrl.u32 %v2996, 7
        %v2998 = vsub.s32 %v2814, %v2997
        %v2999 = vrot.slane %v1873, %v2998
        %v3000 = vsel %vm2819, %v2999, %v2995
        %v3001 = vlaneseq
        %v3002 = vshrl.u32 %v3001, 7
        %v3003 = vsub.s32 %v2821, %v3002
        %v3004 = vrot.slane %v1876, %v3003
        %v3005 = vsel %vm2826, %v3004, %v3000
        %v3006 = vlaneseq
        %v3007 = vshrl.u32 %v3006, 7
        %v3008 = vsub.s32 %v2828, %v3007
        %v3009 = vrot.slane %v1879, %v3008
        %v3010 = vsel %vm2833, %v3009, %v3005
        %v3011 = vlaneseq
        %v3012 = vshrl.u32 %v3011, 7
        %v3013 = vsub.s32 %v2835, %v3012
        %v3014 = vrot.slane %v1882, %v3013
        %v3015 = vsel %vm2840, %v3014, %v3010
        %v3016 = vlaneseq
        %v3017 = vshrl.u32 %v3016, 7
        %v3018 = vsub.s32 %v2842, %v3017
        %v3019 = vrot.slane %v1885, %v3018
        %v3020 = vsel %vm2847, %v3019, %v3015
        %v3021 = vlaneseq
        %v3022 = vshrl.u32 %v3021, 7
        %v3023 = vsub.s32 %v2849, %v3022
        %v3024 = vrot.slane %v1888, %v3023
        %v3025 = vsel %vm2854, %v3024, %v3020
        %v3026 = vlaneseq
        %v3027 = vshrl.u32 %v3026, 7
        %v3028 = vsub.s32 %v2856, %v3027
        %v3029 = vrot.slane %v1891, %v3028
        %v3030 = vsel %vm2861, %v3029, %v3025
        %v3031 = vlaneseq
        %v3032 = vshrl.u32 %v3031, 7
        %v3033 = vsub.s32 %v2863, %v3032
        %v3034 = vrot.slane %v1894, %v3033
        %v3035 = vsel %vm2868, %v3034, %v3030
        %v3036 = vlaneseq
        %v3037 = vshrl.u32 %v3036, 7
        %v3038 = vsub.s32 %v2870, %v3037
        %v3039 = vrot.slane %v1897, %v3038
        %v3040 = vsel %vm2875, %v3039, %v3035
        %v3041 = vlaneseq
        %v3042 = vshrl.u32 %v3041, 7
        %v3043 = vsub.s32 %v2877, %v3042
        %v3044 = vrot.slane %v1900, %v3043
        %v3045 = vsel %vm2882, %v3044, %v3040
        %v3046 = vlaneseq
        %v3047 = vshrl.u32 %v3046, 7
        %v3048 = vsub.s32 %v2884, %v3047
        %v3049 = vrot.slane %v1903, %v3048
        %v3050 = vsel %vm2889, %v3049, %v3045
        %v3051 = vlaneseq
        %v3052 = vshrl.u32 %v3051, 7
        %v3053 = vsub.s32 %v2891, %v3052
        %v3054 = vrot.slane %v1906, %v3053
        %v3055 = vsel %vm2896, %v3054, %v3050
        %v3056 = vlaneseq
        %v3057 = vshrl.u32 %v3056, 7
        %v3058 = vsub.s32 %v2788, %v3057
        %v3059 = vrot.slane %v1909, %v3058
        %v3060 = vlaneseq
        %v3061 = vshrl.u32 %v3060, 7
        %v3062 = vsub.s32 %v2793, %v3061
        %v3063 = vrot.slane %v1912, %v3062
        %v3064 = vsel %vm2798, %v3063, %v3059
        %v3065 = vlaneseq
        %v3066 = vshrl.u32 %v3065, 7
        %v3067 = vsub.s32 %v2800, %v3066
        %v3068 = vrot.slane %v1915, %v3067
        %v3069 = vsel %vm2805, %v3068, %v3064
        %v3070 = vlaneseq
        %v3071 = vshrl.u32 %v3070, 7
        %v3072 = vsub.s32 %v2807, %v3071
        %v3073 = vrot.slane %v1918, %v3072
        %v3074 = vsel %vm2812, %v3073, %v3069
        %v3075 = vlaneseq
        %v3076 = vshrl.u32 %v3075, 7
        %v3077 = vsub.s32 %v2814, %v3076
        %v3078 = vrot.slane %v1921, %v3077
        %v3079 = vsel %vm2819, %v3078, %v3074
        %v3080 = vlaneseq
        %v3081 = vshrl.u32 %v3080, 7
        %v3082 = vsub.s32 %v2821, %v3081
        %v3083 = vrot.slane %v1924, %v3082
        %v3084 = vsel %vm2826, %v3083, %v3079
        %v3085 = vlaneseq
        %v3086 = vshrl.u32 %v3085, 7
        %v3087 = vsub.s32 %v2828, %v3086
        %v3088 = vrot.slane %v1927, %v3087
        %v3089 = vsel %vm2833, %v3088, %v3084
        %v3090 = vlaneseq
        %v3091 = vshrl.u32 %v3090, 7
        %v3092 = vsub.s32 %v2835, %v3091
        %v3093 = vrot.slane %v1930, %v3092
        %v3094 = vsel %vm2840, %v3093, %v3089
        %v3095 = vlaneseq
        %v3096 = vshrl.u32 %v3095, 7
        %v3097 = vsub.s32 %v2842, %v3096
        %v3098 = vrot.slane %v1933, %v3097
        %v3099 = vsel %vm2847, %v3098, %v3094
        %v3100 = vlaneseq
        %v3101 = vshrl.u32 %v3100, 7
        %v3102 = vsub.s32 %v2849, %v3101
        %v3103 = vrot.slane %v1936, %v3102
        %v3104 = vsel %vm2854, %v3103, %v3099
        %v3105 = vlaneseq
        %v3106 = vshrl.u32 %v3105, 7
        %v3107 = vsub.s32 %v2856, %v3106
        %v3108 = vrot.slane %v1939, %v3107
        %v3109 = vsel %vm2861, %v3108, %v3104
        %v3110 = vlaneseq
        %v3111 = vshrl.u32 %v3110, 7
        %v3112 = vsub.s32 %v2863, %v3111
        %v3113 = vrot.slane %v1942, %v3112
        %v3114 = vsel %vm2868, %v3113, %v3109
        %v3115 = vlaneseq
        %v3116 = vshrl.u32 %v3115, 7
        %v3117 = vsub.s32 %v2870, %v3116
        %v3118 = vrot.slane %v1945, %v3117
        %v3119 = vsel %vm2875, %v3118, %v3114
        %v3120 = vlaneseq
        %v3121 = vshrl.u32 %v3120, 7
        %v3122 = vsub.s32 %v2877, %v3121
        %v3123 = vrot.slane %v1948, %v3122
        %v3124 = vsel %vm2882, %v3123, %v3119
        %v3125 = vlaneseq
        %v3126 = vshrl.u32 %v3125, 7
        %v3127 = vsub.s32 %v2884, %v3126
        %v3128 = vrot.slane %v1951, %v3127
        %v3129 = vsel %vm2889, %v3128, %v3124
        %v3130 = vlaneseq
        %v3131 = vshrl.u32 %v3130, 7
        %v3132 = vsub.s32 %v2891, %v3131
        %v3133 = vrot.slane %v1954, %v3132
        %v3134 = vsel %vm2896, %v3133, %v3129
        %v3135 = vlaneseq
        %v3136 = vshrl.u32 %v3135, 7
        %v3137 = vsub.s32 %v2788, %v3136
        %v3138 = vrot.slane %v1957, %v3137
        %v3139 = vlaneseq
        %v3140 = vshrl.u32 %v3139, 7
        %v3141 = vsub.s32 %v2793, %v3140
        %v3142 = vrot.slane %v1960, %v3141
        %v3143 = vsel %vm2798, %v3142, %v3138
        %v3144 = vlaneseq
        %v3145 = vshrl.u32 %v3144, 7
        %v3146 = vsub.s32 %v2800, %v3145
        %v3147 = vrot.slane %v1963, %v3146
        %v3148 = vsel %vm2805, %v3147, %v3143
        %v3149 = vlaneseq
        %v3150 = vshrl.u32 %v3149, 7
        %v3151 = vsub.s32 %v2807, %v3150
        %v3152 = vrot.slane %v1966, %v3151
        %v3153 = vsel %vm2812, %v3152, %v3148
        %v3154 = vlaneseq
        %v3155 = vshrl.u32 %v3154, 7
        %v3156 = vsub.s32 %v2814, %v3155
        %v3157 = vrot.slane %v1969, %v3156
        %v3158 = vsel %vm2819, %v3157, %v3153
        %v3159 = vlaneseq
        %v3160 = vshrl.u32 %v3159, 7
        %v3161 = vsub.s32 %v2821, %v3160
        %v3162 = vrot.slane %v1972, %v3161
        %v3163 = vsel %vm2826, %v3162, %v3158
        %v3164 = vlaneseq
        %v3165 = vshrl.u32 %v3164, 7
        %v3166 = vsub.s32 %v2828, %v3165
        %v3167 = vrot.slane %v1975, %v3166
        %v3168 = vsel %vm2833, %v3167, %v3163
        %v3169 = vlaneseq
        %v3170 = vshrl.u32 %v3169, 7
        %v3171 = vsub.s32 %v2835, %v3170
        %v3172 = vrot.slane %v1978, %v3171
        %v3173 = vsel %vm2840, %v3172, %v3168
        %v3174 = vlaneseq
        %v3175 = vshrl.u32 %v3174, 7
        %v3176 = vsub.s32 %v2842, %v3175
        %v3177 = vrot.slane %v1981, %v3176
        %v3178 = vsel %vm2847, %v3177, %v3173
        %v3179 = vlaneseq
        %v3180 = vshrl.u32 %v3179, 7
        %v3181 = vsub.s32 %v2849, %v3180
        %v3182 = vrot.slane %v1984, %v3181
        %v3183 = vsel %vm2854, %v3182, %v3178
        %v3184 = vlaneseq
        %v3185 = vshrl.u32 %v3184, 7
        %v3186 = vsub.s32 %v2856, %v3185
        %v3187 = vrot.slane %v1987, %v3186
        %v3188 = vsel %vm2861, %v3187, %v3183
        %v3189 = vlaneseq
        %v3190 = vshrl.u32 %v3189, 7
        %v3191 = vsub.s32 %v2863, %v3190
        %v3192 = vrot.slane %v1990, %v3191
        %v3193 = vsel %vm2868, %v3192, %v3188
        %v3194 = vlaneseq
        %v3195 = vshrl.u32 %v3194, 7
        %v3196 = vsub.s32 %v2870, %v3195
        %v3197 = vrot.slane %v1993, %v3196
        %v3198 = vsel %vm2875, %v3197, %v3193
        %v3199 = vlaneseq
        %v3200 = vshrl.u32 %v3199, 7
        %v3201 = vsub.s32 %v2877, %v3200
        %v3202 = vrot.slane %v1996, %v3201
        %v3203 = vsel %vm2882, %v3202, %v3198
        %v3204 = vlaneseq
        %v3205 = vshrl.u32 %v3204, 7
        %v3206 = vsub.s32 %v2884, %v3205
        %v3207 = vrot.slane %v1999, %v3206
        %v3208 = vsel %vm2889, %v3207, %v3203
        %v3209 = vlaneseq
        %v3210 = vshrl.u32 %v3209, 7
        %v3211 = vsub.s32 %v2891, %v3210
        %v3212 = vrot.slane %v2002, %v3211
        %v3213 = vsel %vm2896, %v3212, %v3208
        %v3214 = vlaneseq
        %v3215 = vshrl.u32 %v3214, 7
        %v3216 = vsub.s32 %v2788, %v3215
        %v3217 = vrot.slane %v2005, %v3216
        %v3218 = vlaneseq
        %v3219 = vshrl.u32 %v3218, 7
        %v3220 = vsub.s32 %v2793, %v3219
        %v3221 = vrot.slane %v2008, %v3220
        %v3222 = vsel %vm2798, %v3221, %v3217
        %v3223 = vlaneseq
        %v3224 = vshrl.u32 %v3223, 7
        %v3225 = vsub.s32 %v2800, %v3224
        %v3226 = vrot.slane %v2011, %v3225
        %v3227 = vsel %vm2805, %v3226, %v3222
        %v3228 = vlaneseq
        %v3229 = vshrl.u32 %v3228, 7
        %v3230 = vsub.s32 %v2807, %v3229
        %v3231 = vrot.slane %v2014, %v3230
        %v3232 = vsel %vm2812, %v3231, %v3227
        %v3233 = vlaneseq
        %v3234 = vshrl.u32 %v3233, 7
        %v3235 = vsub.s32 %v2814, %v3234
        %v3236 = vrot.slane %v2017, %v3235
        %v3237 = vsel %vm2819, %v3236, %v3232
        %v3238 = vlaneseq
        %v3239 = vshrl.u32 %v3238, 7
        %v3240 = vsub.s32 %v2821, %v3239
        %v3241 = vrot.slane %v2020, %v3240
        %v3242 = vsel %vm2826, %v3241, %v3237
        %v3243 = vlaneseq
        %v3244 = vshrl.u32 %v3243, 7
        %v3245 = vsub.s32 %v2828, %v3244
        %v3246 = vrot.slane %v2023, %v3245
        %v3247 = vsel %vm2833, %v3246, %v3242
        %v3248 = vlaneseq
        %v3249 = vshrl.u32 %v3248, 7
        %v3250 = vsub.s32 %v2835, %v3249
        %v3251 = vrot.slane %v2026, %v3250
        %v3252 = vsel %vm2840, %v3251, %v3247
        %v3253 = vlaneseq
        %v3254 = vshrl.u32 %v3253, 7
        %v3255 = vsub.s32 %v2842, %v3254
        %v3256 = vrot.slane %v2029, %v3255
        %v3257 = vsel %vm2847, %v3256, %v3252
        %v3258 = vlaneseq
        %v3259 = vshrl.u32 %v3258, 7
        %v3260 = vsub.s32 %v2849, %v3259
        %v3261 = vrot.slane %v2032, %v3260
        %v3262 = vsel %vm2854, %v3261, %v3257
        %v3263 = vlaneseq
        %v3264 = vshrl.u32 %v3263, 7
        %v3265 = vsub.s32 %v2856, %v3264
        %v3266 = vrot.slane %v2035, %v3265
        %v3267 = vsel %vm2861, %v3266, %v3262
        %v3268 = vlaneseq
        %v3269 = vshrl.u32 %v3268, 7
        %v3270 = vsub.s32 %v2863, %v3269
        %v3271 = vrot.slane %v2038, %v3270
        %v3272 = vsel %vm2868, %v3271, %v3267
        %v3273 = vlaneseq
        %v3274 = vshrl.u32 %v3273, 7
        %v3275 = vsub.s32 %v2870, %v3274
        %v3276 = vrot.slane %v2041, %v3275
        %v3277 = vsel %vm2875, %v3276, %v3272
        %v3278 = vlaneseq
        %v3279 = vshrl.u32 %v3278, 7
        %v3280 = vsub.s32 %v2877, %v3279
        %v3281 = vrot.slane %v2044, %v3280
        %v3282 = vsel %vm2882, %v3281, %v3277
        %v3283 = vlaneseq
        %v3284 = vshrl.u32 %v3283, 7
        %v3285 = vsub.s32 %v2884, %v3284
        %v3286 = vrot.slane %v2047, %v3285
        %v3287 = vsel %vm2889, %v3286, %v3282
        %v3288 = vlaneseq
        %v3289 = vshrl.u32 %v3288, 7
        %v3290 = vsub.s32 %v2891, %v3289
        %v3291 = vrot.slane %v2050, %v3290
        %v3292 = vsel %vm2896, %v3291, %v3287
        %v3293 = vlaneseq
        %v3294 = vshrl.u32 %v3293, 7
        %v3295 = vsub.s32 %v2788, %v3294
        %v3296 = vrot.slane %v2053, %v3295
        %v3297 = vlaneseq
        %v3298 = vshrl.u32 %v3297, 7
        %v3299 = vsub.s32 %v2793, %v3298
        %v3300 = vrot.slane %v2056, %v3299
        %v3301 = vsel %vm2798, %v3300, %v3296
        %v3302 = vlaneseq
        %v3303 = vshrl.u32 %v3302, 7
        %v3304 = vsub.s32 %v2800, %v3303
        %v3305 = vrot.slane %v2059, %v3304
        %v3306 = vsel %vm2805, %v3305, %v3301
        %v3307 = vlaneseq
        %v3308 = vshrl.u32 %v3307, 7
        %v3309 = vsub.s32 %v2807, %v3308
        %v3310 = vrot.slane %v2062, %v3309
        %v3311 = vsel %vm2812, %v3310, %v3306
        %v3312 = vlaneseq
        %v3313 = vshrl.u32 %v3312, 7
        %v3314 = vsub.s32 %v2814, %v3313
        %v3315 = vrot.slane %v2065, %v3314
        %v3316 = vsel %vm2819, %v3315, %v3311
        %v3317 = vlaneseq
        %v3318 = vshrl.u32 %v3317, 7
        %v3319 = vsub.s32 %v2821, %v3318
        %v3320 = vrot.slane %v2068, %v3319
        %v3321 = vsel %vm2826, %v3320, %v3316
        %v3322 = vlaneseq
        %v3323 = vshrl.u32 %v3322, 7
        %v3324 = vsub.s32 %v2828, %v3323
        %v3325 = vrot.slane %v2071, %v3324
        %v3326 = vsel %vm2833, %v3325, %v3321
        %v3327 = vlaneseq
        %v3328 = vshrl.u32 %v3327, 7
        %v3329 = vsub.s32 %v2835, %v3328
        %v3330 = vrot.slane %v2074, %v3329
        %v3331 = vsel %vm2840, %v3330, %v3326
        %v3332 = vlaneseq
        %v3333 = vshrl.u32 %v3332, 7
        %v3334 = vsub.s32 %v2842, %v3333
        %v3335 = vrot.slane %v2077, %v3334
        %v3336 = vsel %vm2847, %v3335, %v3331
        %v3337 = vlaneseq
        %v3338 = vshrl.u32 %v3337, 7
        %v3339 = vsub.s32 %v2849, %v3338
        %v3340 = vrot.slane %v2080, %v3339
        %v3341 = vsel %vm2854, %v3340, %v3336
        %v3342 = vlaneseq
        %v3343 = vshrl.u32 %v3342, 7
        %v3344 = vsub.s32 %v2856, %v3343
        %v3345 = vrot.slane %v2083, %v3344
        %v3346 = vsel %vm2861, %v3345, %v3341
        %v3347 = vlaneseq
        %v3348 = vshrl.u32 %v3347, 7
        %v3349 = vsub.s32 %v2863, %v3348
        %v3350 = vrot.slane %v2086, %v3349
        %v3351 = vsel %vm2868, %v3350, %v3346
        %v3352 = vlaneseq
        %v3353 = vshrl.u32 %v3352, 7
        %v3354 = vsub.s32 %v2870, %v3353
        %v3355 = vrot.slane %v2089, %v3354
        %v3356 = vsel %vm2875, %v3355, %v3351
        %v3357 = vlaneseq
        %v3358 = vshrl.u32 %v3357, 7
        %v3359 = vsub.s32 %v2877, %v3358
        %v3360 = vrot.slane %v2092, %v3359
        %v3361 = vsel %vm2882, %v3360, %v3356
        %v3362 = vlaneseq
        %v3363 = vshrl.u32 %v3362, 7
        %v3364 = vsub.s32 %v2884, %v3363
        %v3365 = vrot.slane %v2095, %v3364
        %v3366 = vsel %vm2889, %v3365, %v3361
        %v3367 = vlaneseq
        %v3368 = vshrl.u32 %v3367, 7
        %v3369 = vsub.s32 %v2891, %v3368
        %v3370 = vrot.slane %v2098, %v3369
        %v3371 = vsel %vm2896, %v3370, %v3366
        %v3372 = vlaneseq
        %v3373 = vshrl.u32 %v3372, 7
        %v3374 = vsub.s32 %v2788, %v3373
        %v3375 = vrot.slane %v2101, %v3374
        %v3376 = vlaneseq
        %v3377 = vshrl.u32 %v3376, 7
        %v3378 = vsub.s32 %v2793, %v3377
        %v3379 = vrot.slane %v2104, %v3378
        %v3380 = vsel %vm2798, %v3379, %v3375
        %v3381 = vlaneseq
        %v3382 = vshrl.u32 %v3381, 7
        %v3383 = vsub.s32 %v2800, %v3382
        %v3384 = vrot.slane %v2107, %v3383
        %v3385 = vsel %vm2805, %v3384, %v3380
        %v3386 = vlaneseq
        %v3387 = vshrl.u32 %v3386, 7
        %v3388 = vsub.s32 %v2807, %v3387
        %v3389 = vrot.slane %v2110, %v3388
        %v3390 = vsel %vm2812, %v3389, %v3385
        %v3391 = vlaneseq
        %v3392 = vshrl.u32 %v3391, 7
        %v3393 = vsub.s32 %v2814, %v3392
        %v3394 = vrot.slane %v2113, %v3393
        %v3395 = vsel %vm2819, %v3394, %v3390
        %v3396 = vlaneseq
        %v3397 = vshrl.u32 %v3396, 7
        %v3398 = vsub.s32 %v2821, %v3397
        %v3399 = vrot.slane %v2116, %v3398
        %v3400 = vsel %vm2826, %v3399, %v3395
        %v3401 = vlaneseq
        %v3402 = vshrl.u32 %v3401, 7
        %v3403 = vsub.s32 %v2828, %v3402
        %v3404 = vrot.slane %v2119, %v3403
        %v3405 = vsel %vm2833, %v3404, %v3400
        %v3406 = vlaneseq
        %v3407 = vshrl.u32 %v3406, 7
        %v3408 = vsub.s32 %v2835, %v3407
        %v3409 = vrot.slane %v2122, %v3408
        %v3410 = vsel %vm2840, %v3409, %v3405
        %v3411 = vlaneseq
        %v3412 = vshrl.u32 %v3411, 7
        %v3413 = vsub.s32 %v2842, %v3412
        %v3414 = vrot.slane %v2125, %v3413
        %v3415 = vsel %vm2847, %v3414, %v3410
        %v3416 = vlaneseq
        %v3417 = vshrl.u32 %v3416, 7
        %v3418 = vsub.s32 %v2849, %v3417
        %v3419 = vrot.slane %v2128, %v3418
        %v3420 = vsel %vm2854, %v3419, %v3415
        %v3421 = vlaneseq
        %v3422 = vshrl.u32 %v3421, 7
        %v3423 = vsub.s32 %v2856, %v3422
        %v3424 = vrot.slane %v2131, %v3423
        %v3425 = vsel %vm2861, %v3424, %v3420
        %v3426 = vlaneseq
        %v3427 = vshrl.u32 %v3426, 7
        %v3428 = vsub.s32 %v2863, %v3427
        %v3429 = vrot.slane %v2134, %v3428
        %v3430 = vsel %vm2868, %v3429, %v3425
        %v3431 = vlaneseq
        %v3432 = vshrl.u32 %v3431, 7
        %v3433 = vsub.s32 %v2870, %v3432
        %v3434 = vrot.slane %v2137, %v3433
        %v3435 = vsel %vm2875, %v3434, %v3430
        %v3436 = vlaneseq
        %v3437 = vshrl.u32 %v3436, 7
        %v3438 = vsub.s32 %v2877, %v3437
        %v3439 = vrot.slane %v2140, %v3438
        %v3440 = vsel %vm2882, %v3439, %v3435
        %v3441 = vlaneseq
        %v3442 = vshrl.u32 %v3441, 7
        %v3443 = vsub.s32 %v2884, %v3442
        %v3444 = vrot.slane %v2143, %v3443
        %v3445 = vsel %vm2889, %v3444, %v3440
        %v3446 = vlaneseq
        %v3447 = vshrl.u32 %v3446, 7
        %v3448 = vsub.s32 %v2891, %v3447
        %v3449 = vrot.slane %v2146, %v3448
        %v3450 = vsel %vm2896, %v3449, %v3445
        %v3451 = vlaneseq
        %v3452 = vshrl.u32 %v3451, 7
        %v3453 = vsub.s32 %v2788, %v3452
        %v3454 = vrot.slane %v2149, %v3453
        %v3455 = vlaneseq
        %v3456 = vshrl.u32 %v3455, 7
        %v3457 = vsub.s32 %v2793, %v3456
        %v3458 = vrot.slane %v2152, %v3457
        %v3459 = vsel %vm2798, %v3458, %v3454
        %v3460 = vlaneseq
        %v3461 = vshrl.u32 %v3460, 7
        %v3462 = vsub.s32 %v2800, %v3461
        %v3463 = vrot.slane %v2155, %v3462
        %v3464 = vsel %vm2805, %v3463, %v3459
        %v3465 = vlaneseq
        %v3466 = vshrl.u32 %v3465, 7
        %v3467 = vsub.s32 %v2807, %v3466
        %v3468 = vrot.slane %v2158, %v3467
        %v3469 = vsel %vm2812, %v3468, %v3464
        %v3470 = vlaneseq
        %v3471 = vshrl.u32 %v3470, 7
        %v3472 = vsub.s32 %v2814, %v3471
        %v3473 = vrot.slane %v2161, %v3472
        %v3474 = vsel %vm2819, %v3473, %v3469
        %v3475 = vlaneseq
        %v3476 = vshrl.u32 %v3475, 7
        %v3477 = vsub.s32 %v2821, %v3476
        %v3478 = vrot.slane %v2164, %v3477
        %v3479 = vsel %vm2826, %v3478, %v3474
        %v3480 = vlaneseq
        %v3481 = vshrl.u32 %v3480, 7
        %v3482 = vsub.s32 %v2828, %v3481
        %v3483 = vrot.slane %v2167, %v3482
        %v3484 = vsel %vm2833, %v3483, %v3479
        %v3485 = vlaneseq
        %v3486 = vshrl.u32 %v3485, 7
        %v3487 = vsub.s32 %v2835, %v3486
        %v3488 = vrot.slane %v2170, %v3487
        %v3489 = vsel %vm2840, %v3488, %v3484
        %v3490 = vlaneseq
        %v3491 = vshrl.u32 %v3490, 7
        %v3492 = vsub.s32 %v2842, %v3491
        %v3493 = vrot.slane %v2173, %v3492
        %v3494 = vsel %vm2847, %v3493, %v3489
        %v3495 = vlaneseq
        %v3496 = vshrl.u32 %v3495, 7
        %v3497 = vsub.s32 %v2849, %v3496
        %v3498 = vrot.slane %v2176, %v3497
        %v3499 = vsel %vm2854, %v3498, %v3494
        %v3500 = vlaneseq
        %v3501 = vshrl.u32 %v3500, 7
        %v3502 = vsub.s32 %v2856, %v3501
        %v3503 = vrot.slane %v2179, %v3502
        %v3504 = vsel %vm2861, %v3503, %v3499
        %v3505 = vlaneseq
        %v3506 = vshrl.u32 %v3505, 7
        %v3507 = vsub.s32 %v2863, %v3506
        %v3508 = vrot.slane %v2182, %v3507
        %v3509 = vsel %vm2868, %v3508, %v3504
        %v3510 = vlaneseq
        %v3511 = vshrl.u32 %v3510, 7
        %v3512 = vsub.s32 %v2870, %v3511
        %v3513 = vrot.slane %v2185, %v3512
        %v3514 = vsel %vm2875, %v3513, %v3509
        %v3515 = vlaneseq
        %v3516 = vshrl.u32 %v3515, 7
        %v3517 = vsub.s32 %v2877, %v3516
        %v3518 = vrot.slane %v2188, %v3517
        %v3519 = vsel %vm2882, %v3518, %v3514
        %v3520 = vlaneseq
        %v3521 = vshrl.u32 %v3520, 7
        %v3522 = vsub.s32 %v2884, %v3521
        %v3523 = vrot.slane %v2191, %v3522
        %v3524 = vsel %vm2889, %v3523, %v3519
        %v3525 = vlaneseq
        %v3526 = vshrl.u32 %v3525, 7
        %v3527 = vsub.s32 %v2891, %v3526
        %v3528 = vrot.slane %v2194, %v3527
        %v3529 = vsel %vm2896, %v3528, %v3524
        %v3530 = vlaneseq
        %v3531 = vshrl.u32 %v3530, 7
        %v3532 = vsub.s32 %v2788, %v3531
        %v3533 = vrot.slane %v2197, %v3532
        %v3534 = vlaneseq
        %v3535 = vshrl.u32 %v3534, 7
        %v3536 = vsub.s32 %v2793, %v3535
        %v3537 = vrot.slane %v2200, %v3536
        %v3538 = vsel %vm2798, %v3537, %v3533
        %v3539 = vlaneseq
        %v3540 = vshrl.u32 %v3539, 7
        %v3541 = vsub.s32 %v2800, %v3540
        %v3542 = vrot.slane %v2203, %v3541
        %v3543 = vsel %vm2805, %v3542, %v3538
        %v3544 = vlaneseq
        %v3545 = vshrl.u32 %v3544, 7
        %v3546 = vsub.s32 %v2807, %v3545
        %v3547 = vrot.slane %v2206, %v3546
        %v3548 = vsel %vm2812, %v3547, %v3543
        %v3549 = vlaneseq
        %v3550 = vshrl.u32 %v3549, 7
        %v3551 = vsub.s32 %v2814, %v3550
        %v3552 = vrot.slane %v2209, %v3551
        %v3553 = vsel %vm2819, %v3552, %v3548
        %v3554 = vlaneseq
        %v3555 = vshrl.u32 %v3554, 7
        %v3556 = vsub.s32 %v2821, %v3555
        %v3557 = vrot.slane %v2212, %v3556
        %v3558 = vsel %vm2826, %v3557, %v3553
        %v3559 = vlaneseq
        %v3560 = vshrl.u32 %v3559, 7
        %v3561 = vsub.s32 %v2828, %v3560
        %v3562 = vrot.slane %v2215, %v3561
        %v3563 = vsel %vm2833, %v3562, %v3558
        %v3564 = vlaneseq
        %v3565 = vshrl.u32 %v3564, 7
        %v3566 = vsub.s32 %v2835, %v3565
        %v3567 = vrot.slane %v2218, %v3566
        %v3568 = vsel %vm2840, %v3567, %v3563
        %v3569 = vlaneseq
        %v3570 = vshrl.u32 %v3569, 7
        %v3571 = vsub.s32 %v2842, %v3570
        %v3572 = vrot.slane %v2221, %v3571
        %v3573 = vsel %vm2847, %v3572, %v3568
        %v3574 = vlaneseq
        %v3575 = vshrl.u32 %v3574, 7
        %v3576 = vsub.s32 %v2849, %v3575
        %v3577 = vrot.slane %v2224, %v3576
        %v3578 = vsel %vm2854, %v3577, %v3573
        %v3579 = vlaneseq
        %v3580 = vshrl.u32 %v3579, 7
        %v3581 = vsub.s32 %v2856, %v3580
        %v3582 = vrot.slane %v2227, %v3581
        %v3583 = vsel %vm2861, %v3582, %v3578
        %v3584 = vlaneseq
        %v3585 = vshrl.u32 %v3584, 7
        %v3586 = vsub.s32 %v2863, %v3585
        %v3587 = vrot.slane %v2230, %v3586
        %v3588 = vsel %vm2868, %v3587, %v3583
        %v3589 = vlaneseq
        %v3590 = vshrl.u32 %v3589, 7
        %v3591 = vsub.s32 %v2870, %v3590
        %v3592 = vrot.slane %v2233, %v3591
        %v3593 = vsel %vm2875, %v3592, %v3588
        %v3594 = vlaneseq
        %v3595 = vshrl.u32 %v3594, 7
        %v3596 = vsub.s32 %v2877, %v3595
        %v3597 = vrot.slane %v2236, %v3596
        %v3598 = vsel %vm2882, %v3597, %v3593
        %v3599 = vlaneseq
        %v3600 = vshrl.u32 %v3599, 7
        %v3601 = vsub.s32 %v2884, %v3600
        %v3602 = vrot.slane %v2239, %v3601
        %v3603 = vsel %vm2889, %v3602, %v3598
        %v3604 = vlaneseq
        %v3605 = vshrl.u32 %v3604, 7
        %v3606 = vsub.s32 %v2891, %v3605
        %v3607 = vrot.slane %v2242, %v3606
        %v3608 = vsel %vm2896, %v3607, %v3603
        %v3609 = vlaneseq
        %v3610 = vshrl.u32 %v3609, 7
        %v3611 = vsub.s32 %v2788, %v3610
        %v3612 = vrot.slane %v2245, %v3611
        %v3613 = vlaneseq
        %v3614 = vshrl.u32 %v3613, 7
        %v3615 = vsub.s32 %v2793, %v3614
        %v3616 = vrot.slane %v2248, %v3615
        %v3617 = vsel %vm2798, %v3616, %v3612
        %v3618 = vlaneseq
        %v3619 = vshrl.u32 %v3618, 7
        %v3620 = vsub.s32 %v2800, %v3619
        %v3621 = vrot.slane %v2251, %v3620
        %v3622 = vsel %vm2805, %v3621, %v3617
        %v3623 = vlaneseq
        %v3624 = vshrl.u32 %v3623, 7
        %v3625 = vsub.s32 %v2807, %v3624
        %v3626 = vrot.slane %v2254, %v3625
        %v3627 = vsel %vm2812, %v3626, %v3622
        %v3628 = vlaneseq
        %v3629 = vshrl.u32 %v3628, 7
        %v3630 = vsub.s32 %v2814, %v3629
        %v3631 = vrot.slane %v2257, %v3630
        %v3632 = vsel %vm2819, %v3631, %v3627
        %v3633 = vlaneseq
        %v3634 = vshrl.u32 %v3633, 7
        %v3635 = vsub.s32 %v2821, %v3634
        %v3636 = vrot.slane %v2260, %v3635
        %v3637 = vsel %vm2826, %v3636, %v3632
        %v3638 = vlaneseq
        %v3639 = vshrl.u32 %v3638, 7
        %v3640 = vsub.s32 %v2828, %v3639
        %v3641 = vrot.slane %v2263, %v3640
        %v3642 = vsel %vm2833, %v3641, %v3637
        %v3643 = vlaneseq
        %v3644 = vshrl.u32 %v3643, 7
        %v3645 = vsub.s32 %v2835, %v3644
        %v3646 = vrot.slane %v2266, %v3645
        %v3647 = vsel %vm2840, %v3646, %v3642
        %v3648 = vlaneseq
        %v3649 = vshrl.u32 %v3648, 7
        %v3650 = vsub.s32 %v2842, %v3649
        %v3651 = vrot.slane %v2269, %v3650
        %v3652 = vsel %vm2847, %v3651, %v3647
        %v3653 = vlaneseq
        %v3654 = vshrl.u32 %v3653, 7
        %v3655 = vsub.s32 %v2849, %v3654
        %v3656 = vrot.slane %v2272, %v3655
        %v3657 = vsel %vm2854, %v3656, %v3652
        %v3658 = vlaneseq
        %v3659 = vshrl.u32 %v3658, 7
        %v3660 = vsub.s32 %v2856, %v3659
        %v3661 = vrot.slane %v2275, %v3660
        %v3662 = vsel %vm2861, %v3661, %v3657
        %v3663 = vlaneseq
        %v3664 = vshrl.u32 %v3663, 7
        %v3665 = vsub.s32 %v2863, %v3664
        %v3666 = vrot.slane %v2278, %v3665
        %v3667 = vsel %vm2868, %v3666, %v3662
        %v3668 = vlaneseq
        %v3669 = vshrl.u32 %v3668, 7
        %v3670 = vsub.s32 %v2870, %v3669
        %v3671 = vrot.slane %v2281, %v3670
        %v3672 = vsel %vm2875, %v3671, %v3667
        %v3673 = vlaneseq
        %v3674 = vshrl.u32 %v3673, 7
        %v3675 = vsub.s32 %v2877, %v3674
        %v3676 = vrot.slane %v2284, %v3675
        %v3677 = vsel %vm2882, %v3676, %v3672
        %v3678 = vlaneseq
        %v3679 = vshrl.u32 %v3678, 7
        %v3680 = vsub.s32 %v2884, %v3679
        %v3681 = vrot.slane %v2287, %v3680
        %v3682 = vsel %vm2889, %v3681, %v3677
        %v3683 = vlaneseq
        %v3684 = vshrl.u32 %v3683, 7
        %v3685 = vsub.s32 %v2891, %v3684
        %v3686 = vrot.slane %v2290, %v3685
        %v3687 = vsel %vm2896, %v3686, %v3682
        %v3688 = vlaneseq
        %v3689 = vshrl.u32 %v3688, 7
        %v3690 = vsub.s32 %v2788, %v3689
        %v3691 = vrot.slane %v2293, %v3690
        %v3692 = vlaneseq
        %v3693 = vshrl.u32 %v3692, 7
        %v3694 = vsub.s32 %v2793, %v3693
        %v3695 = vrot.slane %v2296, %v3694
        %v3696 = vsel %vm2798, %v3695, %v3691
        %v3697 = vlaneseq
        %v3698 = vshrl.u32 %v3697, 7
        %v3699 = vsub.s32 %v2800, %v3698
        %v3700 = vrot.slane %v2299, %v3699
        %v3701 = vsel %vm2805, %v3700, %v3696
        %v3702 = vlaneseq
        %v3703 = vshrl.u32 %v3702, 7
        %v3704 = vsub.s32 %v2807, %v3703
        %v3705 = vrot.slane %v2302, %v3704
        %v3706 = vsel %vm2812, %v3705, %v3701
        %v3707 = vlaneseq
        %v3708 = vshrl.u32 %v3707, 7
        %v3709 = vsub.s32 %v2814, %v3708
        %v3710 = vrot.slane %v2305, %v3709
        %v3711 = vsel %vm2819, %v3710, %v3706
        %v3712 = vlaneseq
        %v3713 = vshrl.u32 %v3712, 7
        %v3714 = vsub.s32 %v2821, %v3713
        %v3715 = vrot.slane %v2308, %v3714
        %v3716 = vsel %vm2826, %v3715, %v3711
        %v3717 = vlaneseq
        %v3718 = vshrl.u32 %v3717, 7
        %v3719 = vsub.s32 %v2828, %v3718
        %v3720 = vrot.slane %v2311, %v3719
        %v3721 = vsel %vm2833, %v3720, %v3716
        %v3722 = vlaneseq
        %v3723 = vshrl.u32 %v3722, 7
        %v3724 = vsub.s32 %v2835, %v3723
        %v3725 = vrot.slane %v2314, %v3724
        %v3726 = vsel %vm2840, %v3725, %v3721
        %v3727 = vlaneseq
        %v3728 = vshrl.u32 %v3727, 7
        %v3729 = vsub.s32 %v2842, %v3728
        %v3730 = vrot.slane %v2317, %v3729
        %v3731 = vsel %vm2847, %v3730, %v3726
        %v3732 = vlaneseq
        %v3733 = vshrl.u32 %v3732, 7
        %v3734 = vsub.s32 %v2849, %v3733
        %v3735 = vrot.slane %v2320, %v3734
        %v3736 = vsel %vm2854, %v3735, %v3731
        %v3737 = vlaneseq
        %v3738 = vshrl.u32 %v3737, 7
        %v3739 = vsub.s32 %v2856, %v3738
        %v3740 = vrot.slane %v2323, %v3739
        %v3741 = vsel %vm2861, %v3740, %v3736
        %v3742 = vlaneseq
        %v3743 = vshrl.u32 %v3742, 7
        %v3744 = vsub.s32 %v2863, %v3743
        %v3745 = vrot.slane %v2326, %v3744
        %v3746 = vsel %vm2868, %v3745, %v3741
        %v3747 = vlaneseq
        %v3748 = vshrl.u32 %v3747, 7
        %v3749 = vsub.s32 %v2870, %v3748
        %v3750 = vrot.slane %v2329, %v3749
        %v3751 = vsel %vm2875, %v3750, %v3746
        %v3752 = vlaneseq
        %v3753 = vshrl.u32 %v3752, 7
        %v3754 = vsub.s32 %v2877, %v3753
        %v3755 = vrot.slane %v2332, %v3754
        %v3756 = vsel %vm2882, %v3755, %v3751
        %v3757 = vlaneseq
        %v3758 = vshrl.u32 %v3757, 7
        %v3759 = vsub.s32 %v2884, %v3758
        %v3760 = vrot.slane %v2335, %v3759
        %v3761 = vsel %vm2889, %v3760, %v3756
        %v3762 = vlaneseq
        %v3763 = vshrl.u32 %v3762, 7
        %v3764 = vsub.s32 %v2891, %v3763
        %v3765 = vrot.slane %v2338, %v3764
        %v3766 = vsel %vm2896, %v3765, %v3761
        %v3767 = vlaneseq
        %v3768 = vshrl.u32 %v3767, 7
        %v3769 = vsub.s32 %v2788, %v3768
        %v3770 = vrot.slane %v2341, %v3769
        %v3771 = vlaneseq
        %v3772 = vshrl.u32 %v3771, 7
        %v3773 = vsub.s32 %v2793, %v3772
        %v3774 = vrot.slane %v2344, %v3773
        %v3775 = vsel %vm2798, %v3774, %v3770
        %v3776 = vlaneseq
        %v3777 = vshrl.u32 %v3776, 7
        %v3778 = vsub.s32 %v2800, %v3777
        %v3779 = vrot.slane %v2347, %v3778
        %v3780 = vsel %vm2805, %v3779, %v3775
        %v3781 = vlaneseq
        %v3782 = vshrl.u32 %v3781, 7
        %v3783 = vsub.s32 %v2807, %v3782
        %v3784 = vrot.slane %v2350, %v3783
        %v3785 = vsel %vm2812, %v3784, %v3780
        %v3786 = vlaneseq
        %v3787 = vshrl.u32 %v3786, 7
        %v3788 = vsub.s32 %v2814, %v3787
        %v3789 = vrot.slane %v2353, %v3788
        %v3790 = vsel %vm2819, %v3789, %v3785
        %v3791 = vlaneseq
        %v3792 = vshrl.u32 %v3791, 7
        %v3793 = vsub.s32 %v2821, %v3792
        %v3794 = vrot.slane %v2356, %v3793
        %v3795 = vsel %vm2826, %v3794, %v3790
        %v3796 = vlaneseq
        %v3797 = vshrl.u32 %v3796, 7
        %v3798 = vsub.s32 %v2828, %v3797
        %v3799 = vrot.slane %v2359, %v3798
        %v3800 = vsel %vm2833, %v3799, %v3795
        %v3801 = vlaneseq
        %v3802 = vshrl.u32 %v3801, 7
        %v3803 = vsub.s32 %v2835, %v3802
        %v3804 = vrot.slane %v2362, %v3803
        %v3805 = vsel %vm2840, %v3804, %v3800
        %v3806 = vlaneseq
        %v3807 = vshrl.u32 %v3806, 7
        %v3808 = vsub.s32 %v2842, %v3807
        %v3809 = vrot.slane %v2365, %v3808
        %v3810 = vsel %vm2847, %v3809, %v3805
        %v3811 = vlaneseq
        %v3812 = vshrl.u32 %v3811, 7
        %v3813 = vsub.s32 %v2849, %v3812
        %v3814 = vrot.slane %v2368, %v3813
        %v3815 = vsel %vm2854, %v3814, %v3810
        %v3816 = vlaneseq
        %v3817 = vshrl.u32 %v3816, 7
        %v3818 = vsub.s32 %v2856, %v3817
        %v3819 = vrot.slane %v2371, %v3818
        %v3820 = vsel %vm2861, %v3819, %v3815
        %v3821 = vlaneseq
        %v3822 = vshrl.u32 %v3821, 7
        %v3823 = vsub.s32 %v2863, %v3822
        %v3824 = vrot.slane %v2374, %v3823
        %v3825 = vsel %vm2868, %v3824, %v3820
        %v3826 = vlaneseq
        %v3827 = vshrl.u32 %v3826, 7
        %v3828 = vsub.s32 %v2870, %v3827
        %v3829 = vrot.slane %v2377, %v3828
        %v3830 = vsel %vm2875, %v3829, %v3825
        %v3831 = vlaneseq
        %v3832 = vshrl.u32 %v3831, 7
        %v3833 = vsub.s32 %v2877, %v3832
        %v3834 = vrot.slane %v2380, %v3833
        %v3835 = vsel %vm2882, %v3834, %v3830
        %v3836 = vlaneseq
        %v3837 = vshrl.u32 %v3836, 7
        %v3838 = vsub.s32 %v2884, %v3837
        %v3839 = vrot.slane %v2383, %v3838
        %v3840 = vsel %vm2889, %v3839, %v3835
        %v3841 = vlaneseq
        %v3842 = vshrl.u32 %v3841, 7
        %v3843 = vsub.s32 %v2891, %v3842
        %v3844 = vrot.slane %v2386, %v3843
        %v3845 = vsel %vm2896, %v3844, %v3840
        %v3846 = vlaneseq
        %v3847 = vshrl.u32 %v3846, 7
        %v3848 = vsub.s32 %v2788, %v3847
        %v3849 = vrot.slane %v2389, %v3848
        %v3850 = vlaneseq
        %v3851 = vshrl.u32 %v3850, 7
        %v3852 = vsub.s32 %v2793, %v3851
        %v3853 = vrot.slane %v2392, %v3852
        %v3854 = vsel %vm2798, %v3853, %v3849
        %v3855 = vlaneseq
        %v3856 = vshrl.u32 %v3855, 7
        %v3857 = vsub.s32 %v2800, %v3856
        %v3858 = vrot.slane %v2395, %v3857
        %v3859 = vsel %vm2805, %v3858, %v3854
        %v3860 = vlaneseq
        %v3861 = vshrl.u32 %v3860, 7
        %v3862 = vsub.s32 %v2807, %v3861
        %v3863 = vrot.slane %v2398, %v3862
        %v3864 = vsel %vm2812, %v3863, %v3859
        %v3865 = vlaneseq
        %v3866 = vshrl.u32 %v3865, 7
        %v3867 = vsub.s32 %v2814, %v3866
        %v3868 = vrot.slane %v2401, %v3867
        %v3869 = vsel %vm2819, %v3868, %v3864
        %v3870 = vlaneseq
        %v3871 = vshrl.u32 %v3870, 7
        %v3872 = vsub.s32 %v2821, %v3871
        %v3873 = vrot.slane %v2404, %v3872
        %v3874 = vsel %vm2826, %v3873, %v3869
        %v3875 = vlaneseq
        %v3876 = vshrl.u32 %v3875, 7
        %v3877 = vsub.s32 %v2828, %v3876
        %v3878 = vrot.slane %v2407, %v3877
        %v3879 = vsel %vm2833, %v3878, %v3874
        %v3880 = vlaneseq
        %v3881 = vshrl.u32 %v3880, 7
        %v3882 = vsub.s32 %v2835, %v3881
        %v3883 = vrot.slane %v2410, %v3882
        %v3884 = vsel %vm2840, %v3883, %v3879
        %v3885 = vlaneseq
        %v3886 = vshrl.u32 %v3885, 7
        %v3887 = vsub.s32 %v2842, %v3886
        %v3888 = vrot.slane %v2413, %v3887
        %v3889 = vsel %vm2847, %v3888, %v3884
        %v3890 = vlaneseq
        %v3891 = vshrl.u32 %v3890, 7
        %v3892 = vsub.s32 %v2849, %v3891
        %v3893 = vrot.slane %v2416, %v3892
        %v3894 = vsel %vm2854, %v3893, %v3889
        %v3895 = vlaneseq
        %v3896 = vshrl.u32 %v3895, 7
        %v3897 = vsub.s32 %v2856, %v3896
        %v3898 = vrot.slane %v2419, %v3897
        %v3899 = vsel %vm2861, %v3898, %v3894
        %v3900 = vlaneseq
        %v3901 = vshrl.u32 %v3900, 7
        %v3902 = vsub.s32 %v2863, %v3901
        %v3903 = vrot.slane %v2422, %v3902
        %v3904 = vsel %vm2868, %v3903, %v3899
        %v3905 = vlaneseq
        %v3906 = vshrl.u32 %v3905, 7
        %v3907 = vsub.s32 %v2870, %v3906
        %v3908 = vrot.slane %v2425, %v3907
        %v3909 = vsel %vm2875, %v3908, %v3904
        %v3910 = vlaneseq
        %v3911 = vshrl.u32 %v3910, 7
        %v3912 = vsub.s32 %v2877, %v3911
        %v3913 = vrot.slane %v2428, %v3912
        %v3914 = vsel %vm2882, %v3913, %v3909
        %v3915 = vlaneseq
        %v3916 = vshrl.u32 %v3915, 7
        %v3917 = vsub.s32 %v2884, %v3916
        %v3918 = vrot.slane %v2431, %v3917
        %v3919 = vsel %vm2889, %v3918, %v3914
        %v3920 = vlaneseq
        %v3921 = vshrl.u32 %v3920, 7
        %v3922 = vsub.s32 %v2891, %v3921
        %v3923 = vrot.slane %v2434, %v3922
        %v3924 = vsel %vm2896, %v3923, %v3919
        %v3925 = vlaneseq
        %v3926 = vshrl.u32 %v3925, 7
        %v3927 = vsub.s32 %v2788, %v3926
        %v3928 = vrot.slane %v2437, %v3927
        %v3929 = vlaneseq
        %v3930 = vshrl.u32 %v3929, 7
        %v3931 = vsub.s32 %v2793, %v3930
        %v3932 = vrot.slane %v2440, %v3931
        %v3933 = vsel %vm2798, %v3932, %v3928
        %v3934 = vlaneseq
        %v3935 = vshrl.u32 %v3934, 7
        %v3936 = vsub.s32 %v2800, %v3935
        %v3937 = vrot.slane %v2443, %v3936
        %v3938 = vsel %vm2805, %v3937, %v3933
        %v3939 = vlaneseq
        %v3940 = vshrl.u32 %v3939, 7
        %v3941 = vsub.s32 %v2807, %v3940
        %v3942 = vrot.slane %v2446, %v3941
        %v3943 = vsel %vm2812, %v3942, %v3938
        %v3944 = vlaneseq
        %v3945 = vshrl.u32 %v3944, 7
        %v3946 = vsub.s32 %v2814, %v3945
        %v3947 = vrot.slane %v2449, %v3946
        %v3948 = vsel %vm2819, %v3947, %v3943
        %v3949 = vlaneseq
        %v3950 = vshrl.u32 %v3949, 7
        %v3951 = vsub.s32 %v2821, %v3950
        %v3952 = vrot.slane %v2452, %v3951
        %v3953 = vsel %vm2826, %v3952, %v3948
        %v3954 = vlaneseq
        %v3955 = vshrl.u32 %v3954, 7
        %v3956 = vsub.s32 %v2828, %v3955
        %v3957 = vrot.slane %v2455, %v3956
        %v3958 = vsel %vm2833, %v3957, %v3953
        %v3959 = vlaneseq
        %v3960 = vshrl.u32 %v3959, 7
        %v3961 = vsub.s32 %v2835, %v3960
        %v3962 = vrot.slane %v2458, %v3961
        %v3963 = vsel %vm2840, %v3962, %v3958
        %v3964 = vlaneseq
        %v3965 = vshrl.u32 %v3964, 7
        %v3966 = vsub.s32 %v2842, %v3965
        %v3967 = vrot.slane %v2461, %v3966
        %v3968 = vsel %vm2847, %v3967, %v3963
        %v3969 = vlaneseq
        %v3970 = vshrl.u32 %v3969, 7
        %v3971 = vsub.s32 %v2849, %v3970
        %v3972 = vrot.slane %v2464, %v3971
        %v3973 = vsel %vm2854, %v3972, %v3968
        %v3974 = vlaneseq
        %v3975 = vshrl.u32 %v3974, 7
        %v3976 = vsub.s32 %v2856, %v3975
        %v3977 = vrot.slane %v2467, %v3976
        %v3978 = vsel %vm2861, %v3977, %v3973
        %v3979 = vlaneseq
        %v3980 = vshrl.u32 %v3979, 7
        %v3981 = vsub.s32 %v2863, %v3980
        %v3982 = vrot.slane %v2470, %v3981
        %v3983 = vsel %vm2868, %v3982, %v3978
        %v3984 = vlaneseq
        %v3985 = vshrl.u32 %v3984, 7
        %v3986 = vsub.s32 %v2870, %v3985
        %v3987 = vrot.slane %v2473, %v3986
        %v3988 = vsel %vm2875, %v3987, %v3983
        %v3989 = vlaneseq
        %v3990 = vshrl.u32 %v3989, 7
        %v3991 = vsub.s32 %v2877, %v3990
        %v3992 = vrot.slane %v2476, %v3991
        %v3993 = vsel %vm2882, %v3992, %v3988
        %v3994 = vlaneseq
        %v3995 = vshrl.u32 %v3994, 7
        %v3996 = vsub.s32 %v2884, %v3995
        %v3997 = vrot.slane %v2479, %v3996
        %v3998 = vsel %vm2889, %v3997, %v3993
        %v3999 = vlaneseq
        %v4000 = vshrl.u32 %v3999, 7
        %v4001 = vsub.s32 %v2891, %v4000
        %v4002 = vrot.slane %v2482, %v4001
        %v4003 = vsel %vm2896, %v4002, %v3998
        %v4004 = vlaneseq
        %v4005 = vshrl.u32 %v4004, 7
        %v4006 = vsub.s32 %v2788, %v4005
        %v4007 = vrot.slane %v2485, %v4006
        %v4008 = vlaneseq
        %v4009 = vshrl.u32 %v4008, 7
        %v4010 = vsub.s32 %v2793, %v4009
        %v4011 = vrot.slane %v2488, %v4010
        %v4012 = vsel %vm2798, %v4011, %v4007
        %v4013 = vlaneseq
        %v4014 = vshrl.u32 %v4013, 7
        %v4015 = vsub.s32 %v2800, %v4014
        %v4016 = vrot.slane %v2491, %v4015
        %v4017 = vsel %vm2805, %v4016, %v4012
        %v4018 = vlaneseq
        %v4019 = vshrl.u32 %v4018, 7
        %v4020 = vsub.s32 %v2807, %v4019
        %v4021 = vrot.slane %v2494, %v4020
        %v4022 = vsel %vm2812, %v4021, %v4017
        %v4023 = vlaneseq
        %v4024 = vshrl.u32 %v4023, 7
        %v4025 = vsub.s32 %v2814, %v4024
        %v4026 = vrot.slane %v2497, %v4025
        %v4027 = vsel %vm2819, %v4026, %v4022
        %v4028 = vlaneseq
        %v4029 = vshrl.u32 %v4028, 7
        %v4030 = vsub.s32 %v2821, %v4029
        %v4031 = vrot.slane %v2500, %v4030
        %v4032 = vsel %vm2826, %v4031, %v4027
        %v4033 = vlaneseq
        %v4034 = vshrl.u32 %v4033, 7
        %v4035 = vsub.s32 %v2828, %v4034
        %v4036 = vrot.slane %v2503, %v4035
        %v4037 = vsel %vm2833, %v4036, %v4032
        %v4038 = vlaneseq
        %v4039 = vshrl.u32 %v4038, 7
        %v4040 = vsub.s32 %v2835, %v4039
        %v4041 = vrot.slane %v2506, %v4040
        %v4042 = vsel %vm2840, %v4041, %v4037
        %v4043 = vlaneseq
        %v4044 = vshrl.u32 %v4043, 7
        %v4045 = vsub.s32 %v2842, %v4044
        %v4046 = vrot.slane %v2509, %v4045
        %v4047 = vsel %vm2847, %v4046, %v4042
        %v4048 = vlaneseq
        %v4049 = vshrl.u32 %v4048, 7
        %v4050 = vsub.s32 %v2849, %v4049
        %v4051 = vrot.slane %v2512, %v4050
        %v4052 = vsel %vm2854, %v4051, %v4047
        %v4053 = vlaneseq
        %v4054 = vshrl.u32 %v4053, 7
        %v4055 = vsub.s32 %v2856, %v4054
        %v4056 = vrot.slane %v2515, %v4055
        %v4057 = vsel %vm2861, %v4056, %v4052
        %v4058 = vlaneseq
        %v4059 = vshrl.u32 %v4058, 7
        %v4060 = vsub.s32 %v2863, %v4059
        %v4061 = vrot.slane %v2518, %v4060
        %v4062 = vsel %vm2868, %v4061, %v4057
        %v4063 = vlaneseq
        %v4064 = vshrl.u32 %v4063, 7
        %v4065 = vsub.s32 %v2870, %v4064
        %v4066 = vrot.slane %v2521, %v4065
        %v4067 = vsel %vm2875, %v4066, %v4062
        %v4068 = vlaneseq
        %v4069 = vshrl.u32 %v4068, 7
        %v4070 = vsub.s32 %v2877, %v4069
        %v4071 = vrot.slane %v2524, %v4070
        %v4072 = vsel %vm2882, %v4071, %v4067
        %v4073 = vlaneseq
        %v4074 = vshrl.u32 %v4073, 7
        %v4075 = vsub.s32 %v2884, %v4074
        %v4076 = vrot.slane %v2527, %v4075
        %v4077 = vsel %vm2889, %v4076, %v4072
        %v4078 = vlaneseq
        %v4079 = vshrl.u32 %v4078, 7
        %v4080 = vsub.s32 %v2891, %v4079
        %v4081 = vrot.slane %v2530, %v4080
        %v4082 = vsel %vm2896, %v4081, %v4077
        %vm4083 = vcmask 1041409
        %v4084 = vsel %vm4083, %v2976, %v2897
        %vm4085 = vcmask 1042434
        %v4086 = vsel %vm4085, %v3055, %v4084
        %vm4087 = vcmask 1043459
        %v4088 = vsel %vm4087, %v3134, %v4086
        %vm4089 = vcmask 1044484
        %v4090 = vsel %vm4089, %v3213, %v4088
        %vm4091 = vcmask 1045509
        %v4092 = vsel %vm4091, %v3292, %v4090
        %vm4093 = vcmask 1046534
        %v4094 = vsel %vm4093, %v3371, %v4092
        %vm4095 = vcmask 1047559
        %v4096 = vsel %vm4095, %v3450, %v4094
        %v4097 = vsel %vm4083, %v3608, %v3529
        %v4098 = vsel %vm4085, %v3687, %v4097
        %v4099 = vsel %vm4087, %v3766, %v4098
        %v4100 = vsel %vm4089, %v3845, %v4099
        %v4101 = vsel %vm4091, %v3924, %v4100
        %v4102 = vsel %vm4093, %v4003, %v4101
        %v4103 = vsel %vm4095, %v4082, %v4102
        %4106 = vst [vmem:[#allocation2] sm:$0xff] %v4096
        %4107 = vst [vmem:[#allocation2 + $0x8] sm:$0xff] %v4103
        %s4108 = smul.u32 %s33, 2
        %s4109 = sld [smem:[#allocation4 + %s4108]]
        %v4110 = vld [vmem:[#allocation2] sm:$0xff]
        %v4111 = vstv %s4109
        %vm4112 = vcmp.lt.s32.totalorder %v2788, %v4111
        %v4113 = vsel %vm4112, 1, 0
        %vm4114 = vcmp.eq.s32.totalorder %v4113, 1
        %v4115 = vsel %vm4114, %v4110, -1000000.0
        %4116 = vmax.xlane.f32.xlu0 %v4115
        %v4117 = vpop.xlane.xlu0 %4116
        %v4118 = vsub.f32 %v4115, %v4117
        %v4119 = vmul.f32 %v4118, 1.442695
        %v4120 = vpow.pop %v4119
        %4121 = vadd.xlane.f32.xlu0 %v4120
        %v4122 = vpop.xlane.xlu0 %4121
        %v4123 = vrcp.pop %v4122
        %v4124 = vmul.f32 %v4120, %v4123
        %v4125 = vld [vmem:[%s360] sm:$0xff]
        %v4126 = vld [vmem:[%s360 + $0x8] sm:$0xff]
        %v4127 = vld [vmem:[%s360 + $0x10] sm:$0xff]
        %v4128 = vld [vmem:[%s360 + $0x18] sm:$0xff]
        %v4129 = vld [vmem:[%s360 + $0x20] sm:$0xff]
        %v4130 = vld [vmem:[%s360 + $0x28] sm:$0xff]
        %v4131 = vld [vmem:[%s360 + $0x30] sm:$0xff]
        %v4132 = vld [vmem:[%s360 + $0x38] sm:$0xff]
        %v4133 = vld [vmem:[%s360 + $0x40] sm:$0xff]
        %v4134 = vld [vmem:[%s360 + $0x48] sm:$0xff]
        %v4135 = vld [vmem:[%s360 + $0x50] sm:$0xff]
        %v4136 = vld [vmem:[%s360 + $0x58] sm:$0xff]
        %v4137 = vld [vmem:[%s360 + $0x60] sm:$0xff]
        %v4138 = vld [vmem:[%s360 + $0x68] sm:$0xff]
        %v4139 = vld [vmem:[%s360 + $0x70] sm:$0xff]
        %v4140 = vld [vmem:[%s360 + $0x78] sm:$0xff]
        %4141 = vmatprep.subr.mxu0 0.0
        %4142 = vmatpush1.msra.mxu0 %v4140
        %4143 = vmatprep.subr.mxu0 0.0
        %4144 = vmatpush1.msra.mxu0 %v4139
        %4145 = vmatprep.subr.mxu0 0.0
        %4146 = vmatpush1.msra.mxu0 %v4138
        %4147 = vmatprep.subr.mxu0 0.0
        %4148 = vmatpush1.msra.mxu0 %v4137
        %4149 = vmatprep.subr.mxu0 0.0
        %4150 = vmatpush1.msra.mxu0 %v4136
        %4151 = vmatprep.subr.mxu0 0.0
        %4152 = vmatpush1.msra.mxu0 %v4135
        %4153 = vmatprep.subr.mxu0 0.0
        %4154 = vmatpush1.msra.mxu0 %v4134
        %4155 = vmatprep.subr.mxu0 0.0
        %4156 = vmatpush1.msra.mxu0 %v4133
        %4157 = vmatprep.subr.mxu0 0.0
        %4158 = vmatpush1.msra.mxu0 %v4132
        %4159 = vmatprep.subr.mxu0 0.0
        %4160 = vmatpush1.msra.mxu0 %v4131
        %4161 = vmatprep.subr.mxu0 0.0
        %4162 = vmatpush1.msra.mxu0 %v4130
        %4163 = vmatprep.subr.mxu0 0.0
        %4164 = vmatpush1.msra.mxu0 %v4129
        %4165 = vmatprep.subr.mxu0 0.0
        %4166 = vmatpush1.msra.mxu0 %v4128
        %4167 = vmatprep.subr.mxu0 0.0
        %4168 = vmatpush1.msra.mxu0 %v4127
        %4169 = vmatprep.subr.mxu0 0.0
        %4170 = vmatpush1.msra.mxu0 %v4126
        %4171 = vmatprep.subr.mxu0 0.0
        %4172 = vmatpush1.msra.mxu0 %v4125
        %4173 = vmatprep.subr.mxu0 0.0
        %4174 = vmatpush2.msra.mxu0 0.0
        %4175 = vmatprep.subr.mxu0 0.0
        %4176 = vmatpush2.msra.mxu0 0.0
        %4177 = vmatprep.subr.mxu0 0.0
        %4178 = vmatpush2.msra.mxu0 0.0
        %4179 = vmatprep.subr.mxu0 0.0
        %4180 = vmatpush2.msra.mxu0 0.0
        %4181 = vmatprep.subr.mxu0 0.0
        %4182 = vmatpush2.msra.mxu0 0.0
        %4183 = vmatprep.subr.mxu0 0.0
        %4184 = vmatpush2.msra.mxu0 0.0
        %4185 = vmatprep.subr.mxu0 0.0
        %4186 = vmatpush2.msra.mxu0 0.0
        %4187 = vmatprep.subr.mxu0 0.0
        %4188 = vmatpush2.msra.mxu0 0.0
        %4189 = vmatprep.subr.mxu0 0.0
        %4190 = vmatpush2.msra.mxu0 0.0
        %4191 = vmatprep.subr.mxu0 0.0
        %4192 = vmatpush2.msra.mxu0 0.0
        %4193 = vmatprep.subr.mxu0 0.0
        %4194 = vmatpush2.msra.mxu0 0.0
        %4195 = vmatprep.subr.mxu0 0.0
        %4196 = vmatpush2.msra.mxu0 0.0
        %4197 = vmatprep.subr.mxu0 0.0
        %4198 = vmatpush2.msra.mxu0 0.0
        %4199 = vmatprep.subr.mxu0 0.0
        %4200 = vmatpush2.msra.mxu0 0.0
        %4201 = vmatprep.subr.mxu0 0.0
        %4202 = vmatpush2.msra.mxu0 0.0
        %4203 = vmatprep.subr.mxu0 0.0
        %4204 = vmatpush2.msra.mxu0 0.0
        %4205 = vmatprep.mubr.f32.mxu0 0.0
        %4206 = vmatmul.mubr.f32.gmra.mxu0 %v4124
        %v4207 = vpop.f32.mrf.mxu0
        %v4208 = vadd.f32 0.0, %v4207
        %v4209 = vpop.f32.mrf.mxu0
        %4210 = vdwg.mxu0
        %4211 = vst [vmem:[%s334] sm:$0xff] %v4208
        %4212 = vst [vmem:[%s341] sm:$0xff] %v4124
        %s4213 = sadd.s32 %s4108, 1
        %s4214 = sld [smem:[#allocation4 + %s4213]]
        %s4215 = scalar_lea.vmem [#allocation2], 8
        %v4216 = vld [vmem:[%s4215] sm:$0xff]
        %v4217 = vstv %s4214
        %vm4218 = vcmp.lt.s32.totalorder %v2788, %v4217
        %v4219 = vsel %vm4218, 1, 0
        %vm4220 = vcmp.eq.s32.totalorder %v4219, 1
        %v4221 = vsel %vm4220, %v4216, -1000000.0
        %4222 = vmax.xlane.f32.xlu0 %v4221
        %v4223 = vpop.xlane.xlu0 %4222
        %v4224 = vsub.f32 %v4221, %v4223
        %v4225 = vmul.f32 %v4224, 1.442695
        %v4226 = vpow.pop %v4225
        %4227 = vadd.xlane.f32.xlu0 %v4226
        %v4228 = vpop.xlane.xlu0 %4227
        %v4229 = vrcp.pop %v4228
        %v4230 = vmul.f32 %v4226, %v4229
        %s4231 = scalar_lea.vmem %s360, 128
        %v4232 = vld [vmem:[%s4231] sm:$0xff]
        %v4233 = vld [vmem:[%s4231 + $0x8] sm:$0xff]
        %v4234 = vld [vmem:[%s4231 + $0x10] sm:$0xff]
        %v4235 = vld [vmem:[%s4231 + $0x18] sm:$0xff]
        %v4236 = vld [vmem:[%s4231 + $0x20] sm:$0xff]
        %v4237 = vld [vmem:[%s4231 + $0x28] sm:$0xff]
        %v4238 = vld [vmem:[%s4231 + $0x30] sm:$0xff]
        %v4239 = vld [vmem:[%s4231 + $0x38] sm:$0xff]
        %v4240 = vld [vmem:[%s4231 + $0x40] sm:$0xff]
        %v4241 = vld [vmem:[%s4231 + $0x48] sm:$0xff]
        %v4242 = vld [vmem:[%s4231 + $0x50] sm:$0xff]
        %v4243 = vld [vmem:[%s4231 + $0x58] sm:$0xff]
        %v4244 = vld [vmem:[%s4231 + $0x60] sm:$0xff]
        %v4245 = vld [vmem:[%s4231 + $0x68] sm:$0xff]
        %v4246 = vld [vmem:[%s4231 + $0x70] sm:$0xff]
        %v4247 = vld [vmem:[%s4231 + $0x78] sm:$0xff]
        %4248 = vmatprep.subr.mxu0 0.0
        %4249 = vmatpush1.msra.mxu0 %v4247
        %4250 = vmatprep.subr.mxu0 0.0
        %4251 = vmatpush1.msra.mxu0 %v4246
        %4252 = vmatprep.subr.mxu0 0.0
        %4253 = vmatpush1.msra.mxu0 %v4245
        %4254 = vmatprep.subr.mxu0 0.0
        %4255 = vmatpush1.msra.mxu0 %v4244
        %4256 = vmatprep.subr.mxu0 0.0
        %4257 = vmatpush1.msra.mxu0 %v4243
        %4258 = vmatprep.subr.mxu0 0.0
        %4259 = vmatpush1.msra.mxu0 %v4242
        %4260 = vmatprep.subr.mxu0 0.0
        %4261 = vmatpush1.msra.mxu0 %v4241
        %4262 = vmatprep.subr.mxu0 0.0
        %4263 = vmatpush1.msra.mxu0 %v4240
        %4264 = vmatprep.subr.mxu0 0.0
        %4265 = vmatpush1.msra.mxu0 %v4239
        %4266 = vmatprep.subr.mxu0 0.0
        %4267 = vmatpush1.msra.mxu0 %v4238
        %4268 = vmatprep.subr.mxu0 0.0
        %4269 = vmatpush1.msra.mxu0 %v4237
        %4270 = vmatprep.subr.mxu0 0.0
        %4271 = vmatpush1.msra.mxu0 %v4236
        %4272 = vmatprep.subr.mxu0 0.0
        %4273 = vmatpush1.msra.mxu0 %v4235
        %4274 = vmatprep.subr.mxu0 0.0
        %4275 = vmatpush1.msra.mxu0 %v4234
        %4276 = vmatprep.subr.mxu0 0.0
        %4277 = vmatpush1.msra.mxu0 %v4233
        %4278 = vmatprep.subr.mxu0 0.0
        %4279 = vmatpush1.msra.mxu0 %v4232
        %4280 = vmatprep.subr.mxu0 0.0
        %4281 = vmatpush2.msra.mxu0 0.0
        %4282 = vmatprep.subr.mxu0 0.0
        %4283 = vmatpush2.msra.mxu0 0.0
        %4284 = vmatprep.subr.mxu0 0.0
        %4285 = vmatpush2.msra.mxu0 0.0
        %4286 = vmatprep.subr.mxu0 0.0
        %4287 = vmatpush2.msra.mxu0 0.0
        %4288 = vmatprep.subr.mxu0 0.0
        %4289 = vmatpush2.msra.mxu0 0.0
        %4290 = vmatprep.subr.mxu0 0.0
        %4291 = vmatpush2.msra.mxu0 0.0
        %4292 = vmatprep.subr.mxu0 0.0
        %4293 = vmatpush2.msra.mxu0 0.0
        %4294 = vmatprep.subr.mxu0 0.0
        %4295 = vmatpush2.msra.mxu0 0.0
        %4296 = vmatprep.subr.mxu0 0.0
        %4297 = vmatpush2.msra.mxu0 0.0
        %4298 = vmatprep.subr.mxu0 0.0
        %4299 = vmatpush2.msra.mxu0 0.0
        %4300 = vmatprep.subr.mxu0 0.0
        %4301 = vmatpush2.msra.mxu0 0.0
        %4302 = vmatprep.subr.mxu0 0.0
        %4303 = vmatpush2.msra.mxu0 0.0
        %4304 = vmatprep.subr.mxu0 0.0
        %4305 = vmatpush2.msra.mxu0 0.0
        %4306 = vmatprep.subr.mxu0 0.0
        %4307 = vmatpush2.msra.mxu0 0.0
        %4308 = vmatprep.subr.mxu0 0.0
        %4309 = vmatpush2.msra.mxu0 0.0
        %4310 = vmatprep.subr.mxu0 0.0
        %4311 = vmatpush2.msra.mxu0 0.0
        %4312 = vmatprep.mubr.f32.mxu0 0.0
        %4313 = vmatmul.mubr.f32.gmra.mxu0 %v4230
        %v4314 = vpop.f32.mrf.mxu0
        %v4315 = vadd.f32 0.0, %v4314
        %v4316 = vpop.f32.mrf.mxu0
        %4317 = vdwg.mxu0
        %s4318 = scalar_lea.vmem %s334, 8 [#allocation8]
        %4319 = vst [vmem:[%s4318] sm:$0xff] %v4315
        %s4320 = scalar_lea.vmem %s341, 8 [#allocation9]
        %4321 = vst [vmem:[%s4320] sm:$0xff] %v4230
        %s4322 = sand.u32 %s182, 1
        %s4323 = scalar_lea.sflag [#allocation7], %s4322
        %s4324 = sand.u32 %s182, 1
        %s4325 = smul.addr %s4324, 16
        %s4326 = scalar_lea.vmem [#allocation8], %s4325
        %s4327 = sand.u32 %s208, 1
        %s4328 = scalar_lea.sflag [#allocation10], %s4327
        %s4329 = sand.u32 %s208, 1
        %s4330 = smul.addr %s4329, 16
        %s4331 = scalar_lea.vmem [#allocation9], %s4330
        // Predicated region
        $region49: #{tpu_custom_call.1} parent=43 // pred_check
          %p4332 = pneg %p192
        $region50: #{tpu_custom_call.1} parent=43 // pred_check_branch
          %4334 = sbr.rel (%p4332) target = $region52
        $region51: #{tpu_custom_call.1} parent=43 // pred_region
          %s4335 = smul.u32 2, %s33
          %s4337 = ssub.s32 256, 256
          %4338 = vsyncadd %s4323, %s4337
          %s4339 = smul.addr %s4335, 128
          %s4340 = scalar_lea.hbm %s7, %s4339
          %s4341 = sshll.u32 %s4326, 4
          %s4342 = int_to_ptr.vmem [resolvable:$true] %s4341
          %4347 = dma.vmem_to_hbm [thread:$0]  %s4342, 256, %s4340, %s4323, 128, 128, 8
        $region52: #{tpu_custom_call.1} parent=43 // pred_fallthru
          _
        // Predicated region
        $region53: #{tpu_custom_call.1} parent=43 // pred_check
          %p4348 = pneg %p218
        $region54: #{tpu_custom_call.1} parent=43 // pred_check_branch
          %4350 = sbr.rel (%p4348) target = $region56
        $region55: #{tpu_custom_call.1} parent=43 // pred_region
          %s4351 = smul.u32 2, %s33
          %s4353 = ssub.s32 256, 256
          %4354 = vsyncadd %s4328, %s4353
          %s4355 = smul.addr %s4351, 128
          %s4356 = scalar_lea.hbm %s8, %s4355
          %s4357 = sshll.u32 %s4331, 4
          %s4358 = int_to_ptr.vmem [resolvable:$true] %s4357
          %4363 = dma.vmem_to_hbm [thread:$0]  %s4358, 256, %s4356, %s4328, 128, 128, 8
        $region56: #{tpu_custom_call.1} parent=43 // pred_fallthru
          _
      $region44: #{tpu_custom_call.1} parent=5 // pred_fallthru
        _
      %p4364 = scmp.le.s32.totalorder 2, %s28
      // Predicated region
      $region57: #{tpu_custom_call.1} parent=5 // pred_check
        %p4365 = pneg %p4364
      $region58: #{tpu_custom_call.1} parent=5 // pred_check_branch
        %4367 = sbr.rel (%p4365) target = $region60
      $region59: #{tpu_custom_call.1} parent=5 // pred_region
        %s4368 = ssub.s32 %s28, 2
        // Predicated region
        $region61: #{tpu_custom_call.1} parent=59 // pred_check
          %p4369 = pneg %p198
        $region62: #{tpu_custom_call.1} parent=59 // pred_check_branch
          %4371 = sbr.rel (%p4369) target = $region64
        $region63: #{tpu_custom_call.1} parent=59 // pred_region
          %s4372 = sand.u32 %s183, 1
          %s4373 = scalar_lea.sflag [#allocation7], %s4372
          %s4374 = sand.u32 %s183, 1
          %s4375 = smul.addr %s4374, 16
          %s4376 = scalar_lea.vmem [#allocation8], %s4375
          %4377 = dma.done %s4373, 256
        $region64: #{tpu_custom_call.1} parent=59 // pred_fallthru
          _
        // Predicated region
        $region65: #{tpu_custom_call.1} parent=59 // pred_check
          %p4378 = pneg %p224
        $region66: #{tpu_custom_call.1} parent=59 // pred_check_branch
          %4380 = sbr.rel (%p4378) target = $region68
        $region67: #{tpu_custom_call.1} parent=59 // pred_region
          %s4381 = sand.u32 %s209, 1
          %s4382 = scalar_lea.sflag [#allocation10], %s4381
          %s4383 = sand.u32 %s209, 1
          %s4384 = smul.addr %s4383, 16
          %s4385 = scalar_lea.vmem [#allocation9], %s4384
          %4386 = dma.done %s4382, 256
        $region68: #{tpu_custom_call.1} parent=59 // pred_fallthru
          _
      $region60: #{tpu_custom_call.1} parent=5 // pred_fallthru
        _
    $region6: #{tpu_custom_call.1} parent=1 // loop_footer
      %s32 = sadd.s32 1, %s28
    $region7: #{tpu_custom_call.1} parent=1 // loop_footer_branch
      %27 = sbr.rel target = $region3
    $region8: #{tpu_custom_call.1} parent=1 // loop_exit
      _
    %4387 = vsyncpa [#allocation6], 1
    %s4388 = scalar_lea.sflag [#allocation6], 1
    %4389 = vsyncpa %s4388, 1
    %4390 = vsyncpa [#allocation7], 1
    %s4391 = scalar_lea.sflag [#allocation7], 1
    %4392 = vsyncpa %s4391, 1
    %4393 = vsyncpa [#allocation10], 1
    %s4394 = scalar_lea.sflag [#allocation10], 1
    %4395 = vsyncpa %s4394, 1

</llo_original>
